<compile_context>
chip_gen: v6e
topology: v6e:2x2x1
jax: 0.10.0
libtpu: 0.0.40
codegen_flags: <defaults>
</compile_context>

<pallas_src>
import functools
import numpy as np
import jax
import jax.numpy as jnp
from jax.experimental import pallas as pl
from jax.experimental.pallas import tpu as pltpu

CIN, COUT = 3, 8
KH, KW = 3, 5
PAD_H, PAD_W = 1, 4
# Equivalent forward-conv padding for a stride-1 transposed conv:
EQ_PAD_H = KH - 1 - PAD_H   # 1
EQ_PAD_W = KW - 1 - PAD_W   # 0
T = KH * KW                 # 15 taps


def _fused_deconv_kernel(x_ref, w_ref, b_ref, o_ref, *, w_row, l_in, l_out, b_tile):
    # x_ref : (CIN, b_tile*l_in)   flattened zero-padded inputs, batch on lanes
    # w_ref : (T, COUT, CIN)       tap-major, spatially flipped fwd-conv weights
    # b_ref : (COUT, 1)
    # o_ref : (b_tile, COUT, l_out)
    #
    # Tap (kh,kw) == static flat shift kh*w_row+kw of the resident input block.
    # 15 accumulating dots (COUT,CIN)@(CIN,w_res); no im2col scratch, no
    # sublane-misaligned stores.
    w_res = (b_tile - 1) * l_in + l_out
    acc = None
    for kh in range(KH):
        for kw in range(KW):
            t = kh * KW + kw
            s = kh * w_row + kw
            rhs = x_ref[:, pl.ds(s, w_res)]
            d = jnp.dot(w_ref[t], rhs, preferred_element_type=jnp.float32)
            acc = d if acc is None else acc + d

    bias = b_ref[...]
    for bb in range(b_tile):
        # Lane-aligned slice (l_in is a multiple of 128); full-slab store.
        v1 = acc[:, bb * l_in: bb * l_in + l_out] + bias
        # v2 = v1 (same module, same input); v4 = v1*v2; v5 = v1 + v4
        o_ref[bb] = v1 + v1 * v1


def model_forward(x_nchw, w_t, b, *, max_b_tile=8):
    N, cin, H, W = x_nchw.shape
    assert cin == CIN
    H_pad = H + 2 * EQ_PAD_H
    W_pad = W + 2 * EQ_PAD_W               # == W since EQ_PAD_W == 0
    H_out = H_pad - KH + 1                 # == H
    W_out = W_pad - KW + 1                 # == W - 4
    L_out = H_out * W_pad                  # includes KW-1 garbage cols per row
    s_max = (KH - 1) * W_pad + (KW - 1)    # largest flat tap shift
    L_in = ((L_out + s_max + 127) // 128) * 128   # per-image flat length, lane aligned

    b_tile = min(N, max_b_tile)
    n_pad = -(-N // b_tile) * b_tile

    # ---- glue (small, fuses in XLA): zero-pad, flatten, fold batch on lanes ----
    x = x_nchw.astype(jnp.float32)
    x = jnp.pad(x, ((0, n_pad - N), (0, 0),
                    (EQ_PAD_H, EQ_PAD_H), (EQ_PAD_W, EQ_PAD_W)))
    x = x.reshape(n_pad, CIN, H_pad * W_pad)
    x = jnp.pad(x, ((0, 0), (0, 0), (0, L_in - H_pad * W_pad)))
    x = jnp.transpose(x, (1, 0, 2)).reshape(CIN, n_pad * L_in)

    # ConvTranspose weight (Cin,Cout,KH,KW) -> flipped forward-conv weights,
    # tap-major (T, Cout, Cin).
    w_conv = jnp.transpose(jnp.flip(w_t, axis=(2, 3)), (1, 0, 2, 3))   # (Cout,Cin,KH,KW)
    w_taps = jnp.transpose(w_conv, (2, 3, 0, 1)).reshape(T, COUT, CIN)
    w_taps = w_taps.astype(jnp.float32)
    b2 = b.reshape(COUT, 1).astype(jnp.float32)

    # ---- Pallas kernel: fused deconv + bias + elementwise epilogue ----
    out = pl.pallas_call(
        functools.partial(_fused_deconv_kernel, w_row=W_pad, l_in=L_in,
                          l_out=L_out, b_tile=b_tile),
        grid=(n_pad // b_tile,),
        in_specs=[
            pl.BlockSpec((CIN, b_tile * L_in), lambda g: (0, g)),
            pl.BlockSpec((T, COUT, CIN), lambda g: (0, 0, 0)),
            pl.BlockSpec((COUT, 1), lambda g: (0, 0)),
        ],
        out_specs=pl.BlockSpec((b_tile, COUT, L_out), lambda g: (g, 0, 0)),
        out_shape=jax.ShapeDtypeStruct((n_pad, COUT, L_out), jnp.float32),
        compiler_params=pltpu.CompilerParams(
            dimension_semantics=("parallel",)),
    )(x, w_taps, b2)

    # Consumer-side crop back to the module's NCHW output; the kernel's public
    # output stays padded/lane-dense.
    if n_pad != N:
        out = out[:N]
    out = out.reshape(N, COUT, H_out, W_pad)[:, :, :, :W_out]
    return out


def reference_forward(x_nchw, w_t, b):
    # Pure-JAX reference: stride-1 conv_transpose == conv with flipped kernel.
    w_conv = jnp.transpose(jnp.flip(w_t, axis=(2, 3)), (1, 0, 2, 3))   # OIHW
    v1 = jax.lax.conv_general_dilated(
        x_nchw.astype(jnp.float32), w_conv.astype(jnp.float32),
        window_strides=(1, 1),
        padding=[(EQ_PAD_H, EQ_PAD_H), (EQ_PAD_W, EQ_PAD_W)],
        dimension_numbers=("NCHW", "OIHW", "NCHW"))
    v1 = v1 + b[None, :, None, None]
    return v1 + v1 * v1


if __name__ == "__main__":
    key = jax.random.PRNGKey(0)
    k1, k2, k3, k4 = jax.random.split(key, 4)

    # Deterministic synthetic parameters (ConvTranspose2d(3, 8, (3,5)) shapes).
    fan = CIN * KH * KW
    bound = 1.0 / np.sqrt(fan)
    w_t = jax.random.uniform(k2, (CIN, COUT, KH, KW), jnp.float32, -bound, bound)
    b = jax.random.uniform(k3, (COUT,), jnp.float32, -bound, bound)

    # Small-shape check (batch folded into one grid step): (2, 3, 16, 16)
    x_small = jax.random.normal(k1, (2, CIN, 16, 16), dtype=jnp.float32)
    out_small = jax.block_until_ready(model_forward(x_small, w_t, b))  # (2,8,16,12)
    ref_small = reference_forward(x_small, w_t, b)
    np.testing.assert_allclose(np.asarray(out_small), np.asarray(ref_small),
                               rtol=1e-2, atol=1e-2)

    # The module's native shape: (1, 3, 64, 64)
    x_big = jax.random.normal(k4, (1, CIN, 64, 64), dtype=jnp.float32)
    out_big = jax.block_until_ready(model_forward(x_big, w_t, b))      # (1,8,64,60)
    ref_big = reference_forward(x_big, w_t, b)
    np.testing.assert_allclose(np.asarray(out_big), np.asarray(ref_big),
                               rtol=1e-2, atol=1e-2)

    print("KERNEL_OK")
</pallas_src>

<mosaic_0001>
module attributes {stable_mosaic.version = 11 : i64} {
  func.func @_fused_deconv_kernel(%arg0: i32, %arg1: memref<3x768xf32, #tpu.memory_space<vmem>>, %arg2: memref<15x8x3xf32, #tpu.memory_space<vmem>>, %arg3: memref<8x1xf32, #tpu.memory_space<vmem>>, %arg4: memref<2x8x256xf32, #tpu.memory_space<vmem>>) attributes {dimension_semantics = [#tpu.dimension_semantics<parallel>], iteration_bounds = array<i64: 1>, scalar_prefetch = 0 : i64, scratch_operands = 0 : i64, tpu.core_type = #tpu.core_type<tc>, window_params = [{transform_indices = @transform_0, window_bounds = array<i64: 3, 768>}, {pipeline_mode = #tpu.pipeline_mode<synchronous>, transform_indices = @transform_1, window_bounds = array<i64: 15, 8, 3>}, {pipeline_mode = #tpu.pipeline_mode<synchronous>, transform_indices = @transform_2, window_bounds = array<i64: 8, 1>}, {transform_indices = @transform_3, window_bounds = array<i64: 2, 8, 256>}]} {
    %c0 = arith.constant 0 : index
    %c0_0 = arith.constant 0 : index
    %0 = vector.load %arg1[%c0, %c0_0] : memref<3x768xf32, #tpu.memory_space<vmem>>, vector<3x640xf32>
    %c0_1 = arith.constant 0 : index
    %c0_2 = arith.constant 0 : index
    %c0_3 = arith.constant 0 : index
    %1 = vector.load %arg2[%c0_1, %c0_2, %c0_3] : memref<15x8x3xf32, #tpu.memory_space<vmem>>, vector<1x8x3xf32>
    %2 = vector.shape_cast %1 : vector<1x8x3xf32> to vector<8x3xf32>
    %cst = arith.constant dense<0.000000e+00> : vector<8x640xf32>
    %3 = tpu.matmul %2, %0, %cst {dimension_numbers = #tpu.dot_dimension_numbers<[1], [0], [0], [1], [0, 0, 1, 1], [], []>} : vector<8x3xf32>, vector<3x640xf32>, vector<8x640xf32> -> vector<8x640xf32>
    %c0_4 = arith.constant 0 : index
    %c1 = arith.constant 1 : index
    %4 = vector.load %arg1[%c0_4, %c1] : memref<3x768xf32, #tpu.memory_space<vmem>>, vector<3x640xf32>
    %c1_5 = arith.constant 1 : index
    %c0_6 = arith.constant 0 : index
    %c0_7 = arith.constant 0 : index
    %5 = vector.load %arg2[%c1_5, %c0_6, %c0_7] : memref<15x8x3xf32, #tpu.memory_space<vmem>>, vector<1x8x3xf32>
    %6 = vector.shape_cast %5 : vector<1x8x3xf32> to vector<8x3xf32>
    %cst_8 = arith.constant dense<0.000000e+00> : vector<8x640xf32>
    %7 = tpu.matmul %6, %4, %cst_8 {dimension_numbers = #tpu.dot_dimension_numbers<[1], [0], [0], [1], [0, 0, 1, 1], [], []>} : vector<8x3xf32>, vector<3x640xf32>, vector<8x640xf32> -> vector<8x640xf32>
    %8 = arith.addf %3, %7 : vector<8x640xf32>
    %c0_9 = arith.constant 0 : index
    %c2 = arith.constant 2 : index
    %9 = vector.load %arg1[%c0_9, %c2] : memref<3x768xf32, #tpu.memory_space<vmem>>, vector<3x640xf32>
    %c2_10 = arith.constant 2 : index
    %c0_11 = arith.constant 0 : index
    %c0_12 = arith.constant 0 : index
    %10 = vector.load %arg2[%c2_10, %c0_11, %c0_12] : memref<15x8x3xf32, #tpu.memory_space<vmem>>, vector<1x8x3xf32>
    %11 = vector.shape_cast %10 : vector<1x8x3xf32> to vector<8x3xf32>
    %cst_13 = arith.constant dense<0.000000e+00> : vector<8x640xf32>
    %12 = tpu.matmul %11, %9, %cst_13 {dimension_numbers = #tpu.dot_dimension_numbers<[1], [0], [0], [1], [0, 0, 1, 1], [], []>} : vector<8x3xf32>, vector<3x640xf32>, vector<8x640xf32> -> vector<8x640xf32>
    %13 = arith.addf %8, %12 : vector<8x640xf32>
    %c0_14 = arith.constant 0 : index
    %c3 = arith.constant 3 : index
    %14 = vector.load %arg1[%c0_14, %c3] : memref<3x768xf32, #tpu.memory_space<vmem>>, vector<3x640xf32>
    %c3_15 = arith.constant 3 : index
    %c0_16 = arith.constant 0 : index
    %c0_17 = arith.constant 0 : index
    %15 = vector.load %arg2[%c3_15, %c0_16, %c0_17] : memref<15x8x3xf32, #tpu.memory_space<vmem>>, vector<1x8x3xf32>
    %16 = vector.shape_cast %15 : vector<1x8x3xf32> to vector<8x3xf32>
    %cst_18 = arith.constant dense<0.000000e+00> : vector<8x640xf32>
    %17 = tpu.matmul %16, %14, %cst_18 {dimension_numbers = #tpu.dot_dimension_numbers<[1], [0], [0], [1], [0, 0, 1, 1], [], []>} : vector<8x3xf32>, vector<3x640xf32>, vector<8x640xf32> -> vector<8x640xf32>
    %18 = arith.addf %13, %17 : vector<8x640xf32>
    %c0_19 = arith.constant 0 : index
    %c4 = arith.constant 4 : index
    %19 = vector.load %arg1[%c0_19, %c4] : memref<3x768xf32, #tpu.memory_space<vmem>>, vector<3x640xf32>
    %c4_20 = arith.constant 4 : index
    %c0_21 = arith.constant 0 : index
    %c0_22 = arith.constant 0 : index
    %20 = vector.load %arg2[%c4_20, %c0_21, %c0_22] : memref<15x8x3xf32, #tpu.memory_space<vmem>>, vector<1x8x3xf32>
    %21 = vector.shape_cast %20 : vector<1x8x3xf32> to vector<8x3xf32>
    %cst_23 = arith.constant dense<0.000000e+00> : vector<8x640xf32>
    %22 = tpu.matmul %21, %19, %cst_23 {dimension_numbers = #tpu.dot_dimension_numbers<[1], [0], [0], [1], [0, 0, 1, 1], [], []>} : vector<8x3xf32>, vector<3x640xf32>, vector<8x640xf32> -> vector<8x640xf32>
    %23 = arith.addf %18, %22 : vector<8x640xf32>
    %c0_24 = arith.constant 0 : index
    %c16 = arith.constant 16 : index
    %24 = vector.load %arg1[%c0_24, %c16] : memref<3x768xf32, #tpu.memory_space<vmem>>, vector<3x640xf32>
    %c5 = arith.constant 5 : index
    %c0_25 = arith.constant 0 : index
    %c0_26 = arith.constant 0 : index
    %25 = vector.load %arg2[%c5, %c0_25, %c0_26] : memref<15x8x3xf32, #tpu.memory_space<vmem>>, vector<1x8x3xf32>
    %26 = vector.shape_cast %25 : vector<1x8x3xf32> to vector<8x3xf32>
    %cst_27 = arith.constant dense<0.000000e+00> : vector<8x640xf32>
    %27 = tpu.matmul %26, %24, %cst_27 {dimension_numbers = #tpu.dot_dimension_numbers<[1], [0], [0], [1], [0, 0, 1, 1], [], []>} : vector<8x3xf32>, vector<3x640xf32>, vector<8x640xf32> -> vector<8x640xf32>
    %28 = arith.addf %23, %27 : vector<8x640xf32>
    %c0_28 = arith.constant 0 : index
    %c17 = arith.constant 17 : index
    %29 = vector.load %arg1[%c0_28, %c17] : memref<3x768xf32, #tpu.memory_space<vmem>>, vector<3x640xf32>
    %c6 = arith.constant 6 : index
    %c0_29 = arith.constant 0 : index
    %c0_30 = arith.constant 0 : index
    %30 = vector.load %arg2[%c6, %c0_29, %c0_30] : memref<15x8x3xf32, #tpu.memory_space<vmem>>, vector<1x8x3xf32>
    %31 = vector.shape_cast %30 : vector<1x8x3xf32> to vector<8x3xf32>
    %cst_31 = arith.constant dense<0.000000e+00> : vector<8x640xf32>
    %32 = tpu.matmul %31, %29, %cst_31 {dimension_numbers = #tpu.dot_dimension_numbers<[1], [0], [0], [1], [0, 0, 1, 1], [], []>} : vector<8x3xf32>, vector<3x640xf32>, vector<8x640xf32> -> vector<8x640xf32>
    %33 = arith.addf %28, %32 : vector<8x640xf32>
    %c0_32 = arith.constant 0 : index
    %c18 = arith.constant 18 : index
    %34 = vector.load %arg1[%c0_32, %c18] : memref<3x768xf32, #tpu.memory_space<vmem>>, vector<3x640xf32>
    %c7 = arith.constant 7 : index
    %c0_33 = arith.constant 0 : index
    %c0_34 = arith.constant 0 : index
    %35 = vector.load %arg2[%c7, %c0_33, %c0_34] : memref<15x8x3xf32, #tpu.memory_space<vmem>>, vector<1x8x3xf32>
    %36 = vector.shape_cast %35 : vector<1x8x3xf32> to vector<8x3xf32>
    %cst_35 = arith.constant dense<0.000000e+00> : vector<8x640xf32>
    %37 = tpu.matmul %36, %34, %cst_35 {dimension_numbers = #tpu.dot_dimension_numbers<[1], [0], [0], [1], [0, 0, 1, 1], [], []>} : vector<8x3xf32>, vector<3x640xf32>, vector<8x640xf32> -> vector<8x640xf32>
    %38 = arith.addf %33, %37 : vector<8x640xf32>
    %c0_36 = arith.constant 0 : index
    %c19 = arith.constant 19 : index
    %39 = vector.load %arg1[%c0_36, %c19] : memref<3x768xf32, #tpu.memory_space<vmem>>, vector<3x640xf32>
    %c8 = arith.constant 8 : index
    %c0_37 = arith.constant 0 : index
    %c0_38 = arith.constant 0 : index
    %40 = vector.load %arg2[%c8, %c0_37, %c0_38] : memref<15x8x3xf32, #tpu.memory_space<vmem>>, vector<1x8x3xf32>
    %41 = vector.shape_cast %40 : vector<1x8x3xf32> to vector<8x3xf32>
    %cst_39 = arith.constant dense<0.000000e+00> : vector<8x640xf32>
    %42 = tpu.matmul %41, %39, %cst_39 {dimension_numbers = #tpu.dot_dimension_numbers<[1], [0], [0], [1], [0, 0, 1, 1], [], []>} : vector<8x3xf32>, vector<3x640xf32>, vector<8x640xf32> -> vector<8x640xf32>
    %43 = arith.addf %38, %42 : vector<8x640xf32>
    %c0_40 = arith.constant 0 : index
    %c20 = arith.constant 20 : index
    %44 = vector.load %arg1[%c0_40, %c20] : memref<3x768xf32, #tpu.memory_space<vmem>>, vector<3x640xf32>
    %c9 = arith.constant 9 : index
    %c0_41 = arith.constant 0 : index
    %c0_42 = arith.constant 0 : index
    %45 = vector.load %arg2[%c9, %c0_41, %c0_42] : memref<15x8x3xf32, #tpu.memory_space<vmem>>, vector<1x8x3xf32>
    %46 = vector.shape_cast %45 : vector<1x8x3xf32> to vector<8x3xf32>
    %cst_43 = arith.constant dense<0.000000e+00> : vector<8x640xf32>
    %47 = tpu.matmul %46, %44, %cst_43 {dimension_numbers = #tpu.dot_dimension_numbers<[1], [0], [0], [1], [0, 0, 1, 1], [], []>} : vector<8x3xf32>, vector<3x640xf32>, vector<8x640xf32> -> vector<8x640xf32>
    %48 = arith.addf %43, %47 : vector<8x640xf32>
    %c0_44 = arith.constant 0 : index
    %c32 = arith.constant 32 : index
    %49 = vector.load %arg1[%c0_44, %c32] : memref<3x768xf32, #tpu.memory_space<vmem>>, vector<3x640xf32>
    %c10 = arith.constant 10 : index
    %c0_45 = arith.constant 0 : index
    %c0_46 = arith.constant 0 : index
    %50 = vector.load %arg2[%c10, %c0_45, %c0_46] : memref<15x8x3xf32, #tpu.memory_space<vmem>>, vector<1x8x3xf32>
    %51 = vector.shape_cast %50 : vector<1x8x3xf32> to vector<8x3xf32>
    %cst_47 = arith.constant dense<0.000000e+00> : vector<8x640xf32>
    %52 = tpu.matmul %51, %49, %cst_47 {dimension_numbers = #tpu.dot_dimension_numbers<[1], [0], [0], [1], [0, 0, 1, 1], [], []>} : vector<8x3xf32>, vector<3x640xf32>, vector<8x640xf32> -> vector<8x640xf32>
    %53 = arith.addf %48, %52 : vector<8x640xf32>
    %c0_48 = arith.constant 0 : index
    %c33 = arith.constant 33 : index
    %54 = vector.load %arg1[%c0_48, %c33] : memref<3x768xf32, #tpu.memory_space<vmem>>, vector<3x640xf32>
    %c11 = arith.constant 11 : index
    %c0_49 = arith.constant 0 : index
    %c0_50 = arith.constant 0 : index
    %55 = vector.load %arg2[%c11, %c0_49, %c0_50] : memref<15x8x3xf32, #tpu.memory_space<vmem>>, vector<1x8x3xf32>
    %56 = vector.shape_cast %55 : vector<1x8x3xf32> to vector<8x3xf32>
    %cst_51 = arith.constant dense<0.000000e+00> : vector<8x640xf32>
    %57 = tpu.matmul %56, %54, %cst_51 {dimension_numbers = #tpu.dot_dimension_numbers<[1], [0], [0], [1], [0, 0, 1, 1], [], []>} : vector<8x3xf32>, vector<3x640xf32>, vector<8x640xf32> -> vector<8x640xf32>
    %58 = arith.addf %53, %57 : vector<8x640xf32>
    %c0_52 = arith.constant 0 : index
    %c34 = arith.constant 34 : index
    %59 = vector.load %arg1[%c0_52, %c34] : memref<3x768xf32, #tpu.memory_space<vmem>>, vector<3x640xf32>
    %c12 = arith.constant 12 : index
    %c0_53 = arith.constant 0 : index
    %c0_54 = arith.constant 0 : index
    %60 = vector.load %arg2[%c12, %c0_53, %c0_54] : memref<15x8x3xf32, #tpu.memory_space<vmem>>, vector<1x8x3xf32>
    %61 = vector.shape_cast %60 : vector<1x8x3xf32> to vector<8x3xf32>
    %cst_55 = arith.constant dense<0.000000e+00> : vector<8x640xf32>
    %62 = tpu.matmul %61, %59, %cst_55 {dimension_numbers = #tpu.dot_dimension_numbers<[1], [0], [0], [1], [0, 0, 1, 1], [], []>} : vector<8x3xf32>, vector<3x640xf32>, vector<8x640xf32> -> vector<8x640xf32>
    %63 = arith.addf %58, %62 : vector<8x640xf32>
    %c0_56 = arith.constant 0 : index
    %c35 = arith.constant 35 : index
    %64 = vector.load %arg1[%c0_56, %c35] : memref<3x768xf32, #tpu.memory_space<vmem>>, vector<3x640xf32>
    %c13 = arith.constant 13 : index
    %c0_57 = arith.constant 0 : index
    %c0_58 = arith.constant 0 : index
    %65 = vector.load %arg2[%c13, %c0_57, %c0_58] : memref<15x8x3xf32, #tpu.memory_space<vmem>>, vector<1x8x3xf32>
    %66 = vector.shape_cast %65 : vector<1x8x3xf32> to vector<8x3xf32>
    %cst_59 = arith.constant dense<0.000000e+00> : vector<8x640xf32>
    %67 = tpu.matmul %66, %64, %cst_59 {dimension_numbers = #tpu.dot_dimension_numbers<[1], [0], [0], [1], [0, 0, 1, 1], [], []>} : vector<8x3xf32>, vector<3x640xf32>, vector<8x640xf32> -> vector<8x640xf32>
    %68 = arith.addf %63, %67 : vector<8x640xf32>
    %c0_60 = arith.constant 0 : index
    %c36 = arith.constant 36 : index
    %69 = vector.load %arg1[%c0_60, %c36] : memref<3x768xf32, #tpu.memory_space<vmem>>, vector<3x640xf32>
    %c14 = arith.constant 14 : index
    %c0_61 = arith.constant 0 : index
    %c0_62 = arith.constant 0 : index
    %70 = vector.load %arg2[%c14, %c0_61, %c0_62] : memref<15x8x3xf32, #tpu.memory_space<vmem>>, vector<1x8x3xf32>
    %71 = vector.shape_cast %70 : vector<1x8x3xf32> to vector<8x3xf32>
    %cst_63 = arith.constant dense<0.000000e+00> : vector<8x640xf32>
    %72 = tpu.matmul %71, %69, %cst_63 {dimension_numbers = #tpu.dot_dimension_numbers<[1], [0], [0], [1], [0, 0, 1, 1], [], []>} : vector<8x3xf32>, vector<3x640xf32>, vector<8x640xf32> -> vector<8x640xf32>
    %73 = arith.addf %68, %72 : vector<8x640xf32>
    %c0_64 = arith.constant 0 : index
    %c0_65 = arith.constant 0 : index
    %74 = vector.load %arg3[%c0_64, %c0_65] : memref<8x1xf32, #tpu.memory_space<vmem>>, vector<8x1xf32>
    %75 = vector.extract_strided_slice %73 {offsets = [0, 0], sizes = [8, 256], strides = [1, 1]} : vector<8x640xf32> to vector<8x256xf32>
    %76 = vector.broadcast %74 : vector<8x1xf32> to vector<8x256xf32>
    %77 = arith.addf %75, %76 : vector<8x256xf32>
    %78 = arith.mulf %77, %77 : vector<8x256xf32>
    %79 = arith.addf %77, %78 : vector<8x256xf32>
    %c0_66 = arith.constant 0 : index
    %c0_67 = arith.constant 0 : index
    %c0_68 = arith.constant 0 : index
    %80 = vector.load %arg4[%c0_66, %c0_67, %c0_68] : memref<2x8x256xf32, #tpu.memory_space<vmem>>, vector<1x8x256xf32>
    %81 = vector.shape_cast %80 : vector<1x8x256xf32> to vector<8x256xf32>
    %82 = vector.shape_cast %79 : vector<8x256xf32> to vector<1x8x256xf32>
    tpu.vector_store %arg4[%c0_66, %c0_67, %c0_68], %82 {strides = array<i32>} : memref<2x8x256xf32, #tpu.memory_space<vmem>>, vector<1x8x256xf32>,
    %83 = vector.extract_strided_slice %73 {offsets = [0, 384], sizes = [8, 256], strides = [1, 1]} : vector<8x640xf32> to vector<8x256xf32>
    %84 = vector.broadcast %74 : vector<8x1xf32> to vector<8x256xf32>
    %85 = arith.addf %83, %84 : vector<8x256xf32>
    %86 = arith.mulf %85, %85 : vector<8x256xf32>
    %87 = arith.addf %85, %86 : vector<8x256xf32>
    %c1_69 = arith.constant 1 : index
    %c0_70 = arith.constant 0 : index
    %c0_71 = arith.constant 0 : index
    %88 = vector.load %arg4[%c1_69, %c0_70, %c0_71] : memref<2x8x256xf32, #tpu.memory_space<vmem>>, vector<1x8x256xf32>
    %89 = vector.shape_cast %88 : vector<1x8x256xf32> to vector<8x256xf32>
    %90 = vector.shape_cast %87 : vector<8x256xf32> to vector<1x8x256xf32>
    tpu.vector_store %arg4[%c1_69, %c0_70, %c0_71], %90 {strides = array<i32>} : memref<2x8x256xf32, #tpu.memory_space<vmem>>, vector<1x8x256xf32>,
    return
  }
  func.func @transform_0(%arg0: i32) -> (i32, i32) {
    %c0_i32 = arith.constant 0 : i32
    %c0_i32_0 = arith.constant 0 : i32
    return %c0_i32, %arg0 : i32, i32
  }
  func.func @transform_1(%arg0: i32) -> (i32, i32, i32) {
    %c0_i32 = arith.constant 0 : i32
    %c0_i32_0 = arith.constant 0 : i32
    %c0_i32_1 = arith.constant 0 : i32
    %c0_i32_2 = arith.constant 0 : i32
    return %c0_i32, %c0_i32_0, %c0_i32_1 : i32, i32, i32
  }
  func.func @transform_2(%arg0: i32) -> (i32, i32) {
    %c0_i32 = arith.constant 0 : i32
    %c0_i32_0 = arith.constant 0 : i32
    %c0_i32_1 = arith.constant 0 : i32
    return %c0_i32, %c0_i32_0 : i32, i32
  }
  func.func @transform_3(%arg0: i32) -> (i32, i32, i32) {
    %c0_i32 = arith.constant 0 : i32
    %c0_i32_0 = arith.constant 0 : i32
    %c0_i32_1 = arith.constant 0 : i32
    return %arg0, %c0_i32, %c0_i32_0 : i32, i32, i32
  }
}

</mosaic_0001>

<llo_original>
// kernel: tpu_custom_call.1
$region0: #{tpu_custom_call.1}
  #allocation0 [shape = 'u32[]', space=smem, size = 0x4, offset = 0x4, fixed_abs, tag = 'smem constant byte address 0x4 - core index']
  #allocation1 [shape = 'u32[144,128]{1,0:T(1,128)}', space=vmem, size = 0x12000, scoped, tag = 'internal scratch']
  %s0 = inlined_call_operand.vmem [shape: f32[3,768], index: 0, kind: input, shape index: {}]
  %s1 = inlined_call_operand.vmem [shape: f32[15,8,3], index: 1, kind: input, shape index: {}]
  %s2 = inlined_call_operand.vmem [shape: f32[8,1], index: 2, kind: input, shape index: {}]
  %s3 = inlined_call_operand.hbm [shape: f32[2,8,256], index: 3, kind: output, shape index: {}]
  %s4 = sld [smem:[#allocation0]]
  $region22: #{tpu_custom_call.1} parent=0
    _
  %s6 = ssub.s32 1, %s4
  %s7 = scalar_select 0, %s6, %s4
  $region1: #{tpu_custom_call.1} parent=0
    #allocation2 [shape = 'u8[16384]{0}', space=vmem, size = 0x4000, scoped, tag = 'output window, operand 0, single buffered']
    #allocation3 [shape = 's32[1]{0}', space=sflag, size = 0x4, scoped, tag = 'scoped memory for tpu_custom_call.1']
    %8 = vsyncpa [#allocation3], 0
    // Predicated region
    $region2: #{tpu_custom_call.1} parent=1 // pred_check
      _
    $region3: #{tpu_custom_call.1} parent=1 // pred_check_branch
      %10 = sbr.rel (0) target = $region5
    $region4: #{tpu_custom_call.1} parent=1 // pred_region
      _
    $region5: #{tpu_custom_call.1} parent=1 // pred_fallthru
      _
    // Predicated region
    $region6: #{tpu_custom_call.1} parent=1 // pred_check
      _
    $region7: #{tpu_custom_call.1} parent=1 // pred_check_branch
      %12 = sbr.rel (0) target = $region9
    $region8: #{tpu_custom_call.1} parent=1 // pred_region
      _
    $region9: #{tpu_custom_call.1} parent=1 // pred_fallthru
      _
    // Predicated region
    $region10: #{tpu_custom_call.1} parent=1 // pred_check
      _
    $region11: #{tpu_custom_call.1} parent=1 // pred_check_branch
      %14 = sbr.rel (0) target = $region13
    $region12: #{tpu_custom_call.1} parent=1 // pred_region
      _
    $region13: #{tpu_custom_call.1} parent=1 // pred_fallthru
      _
    %v15 = vld [vmem:[%s0] sm:$0x77]
    %v16 = vld [vmem:[%s0 + $0x8] sm:$0x77]
    %v17 = vld [vmem:[%s0 + $0x10] sm:$0x7]
    %v18 = vld [vmem:[%s1] sm:$0xff]
    %v19 = vld [vmem:[%s0 + $0x10] sm:$0x77]
    %s20 = scalar_lea.vmem %s1, 8
    %v21 = vld [vmem:[%s20] sm:$0xff]
    %v25 = vcombine.high %v15, %v15
    %v26 = vcombine.high %v16, %v16
    %v27 = vcombine.high %v19, %v19
    %28 = vrot.lane.b32.xlu0 %v15, 127
    %v29 = vpop.permute.xlu0 %28
    %30 = vrot.lane.b32.xlu0 %v25, 127
    %v31 = vpop.permute.xlu0 %30
    %32 = vrot.lane.b32.xlu0 %v16, 127
    %v33 = vpop.permute.xlu0 %32
    %34 = vrot.lane.b32.xlu0 %v26, 127
    %v35 = vpop.permute.xlu0 %34
    %36 = vrot.lane.b32.xlu0 %v19, 127
    %v37 = vpop.permute.xlu0 %36
    %38 = vrot.lane.b32.xlu0 %v27, 127
    %v39 = vpop.permute.xlu0 %38
    %vm40 = vcmask 1039360
    %v41 = vsel %vm40, %v29, %v31
    %v42 = vsel %vm40, %v31, %v33
    %v43 = vsel %vm40, %v33, %v35
    %v44 = vsel %vm40, %v35, %v37
    %v45 = vsel %vm40, %v37, %v39
    %vm46 = vcmask 23552
    %v48 = vsel %vm46, %v21, 0
    %vm50 = vcmask 1042432
    %v51 = vsel %vm50, %v41, 0
    %v53 = vsel %vm50, %v42, 0
    %v55 = vsel %vm50, %v43, 0
    %v57 = vsel %vm50, %v44, 0
    %v59 = vsel %vm50, %v45, 0
    %61 = vmatprep.subr.mxu0 0.0
    %62 = vmatpush1.msra.mxu0 0.0
    %63 = vmatprep.subr.mxu0 0.0
    %64 = vmatpush1.msra.mxu0 0.0
    %65 = vmatprep.subr.mxu0 0.0
    %66 = vmatpush1.msra.mxu0 0.0
    %67 = vmatprep.subr.mxu0 0.0
    %68 = vmatpush1.msra.mxu0 0.0
    %69 = vmatprep.subr.mxu0 0.0
    %70 = vmatpush1.msra.mxu0 0.0
    %71 = vmatprep.subr.mxu0 0.0
    %72 = vmatpush1.msra.mxu0 0.0
    %73 = vmatprep.subr.mxu0 0.0
    %74 = vmatpush1.msra.mxu0 0.0
    %75 = vmatprep.subr.mxu0 0.0
    %76 = vmatpush1.msra.mxu0 0.0
    %77 = vmatprep.subr.mxu0 0.0
    %78 = vmatpush1.msra.mxu0 0.0
    %79 = vmatprep.subr.mxu0 0.0
    %80 = vmatpush1.msra.mxu0 0.0
    %81 = vmatprep.subr.mxu0 0.0
    %82 = vmatpush1.msra.mxu0 0.0
    %83 = vmatprep.subr.mxu0 0.0
    %84 = vmatpush1.msra.mxu0 0.0
    %85 = vmatprep.subr.mxu0 0.0
    %86 = vmatpush1.msra.mxu0 0.0
    %87 = vmatprep.subr.mxu0 0.0
    %88 = vmatpush1.msra.mxu0 0.0
    %89 = vmatprep.subr.mxu0 0.0
    %90 = vmatpush1.msra.mxu0 0.0
    %91 = vmatprep.subr.mxu0 %v53
    %92 = vmatpush1.msra.mxu0 %v51
    %93 = vmatprep.subr.mxu0 0.0
    %94 = vmatpush2.msra.mxu0 0.0
    %95 = vmatprep.subr.mxu0 0.0
    %96 = vmatpush2.msra.mxu0 0.0
    %97 = vmatprep.subr.mxu0 0.0
    %98 = vmatpush2.msra.mxu0 0.0
    %99 = vmatprep.subr.mxu0 0.0
    %100 = vmatpush2.msra.mxu0 0.0
    %101 = vmatprep.subr.mxu0 0.0
    %102 = vmatpush2.msra.mxu0 0.0
    %103 = vmatprep.subr.mxu0 0.0
    %104 = vmatpush2.msra.mxu0 0.0
    %105 = vmatprep.subr.mxu0 0.0
    %106 = vmatpush2.msra.mxu0 0.0
    %107 = vmatprep.subr.mxu0 0.0
    %108 = vmatpush2.msra.mxu0 0.0
    %109 = vmatprep.subr.mxu0 0.0
    %110 = vmatpush2.msra.mxu0 0.0
    %111 = vmatprep.subr.mxu0 0.0
    %112 = vmatpush2.msra.mxu0 0.0
    %113 = vmatprep.subr.mxu0 0.0
    %114 = vmatpush2.msra.mxu0 0.0
    %115 = vmatprep.subr.mxu0 0.0
    %116 = vmatpush2.msra.mxu0 0.0
    %117 = vmatprep.subr.mxu0 0.0
    %118 = vmatpush2.msra.mxu0 0.0
    %119 = vmatprep.subr.mxu0 0.0
    %120 = vmatpush2.msra.mxu0 0.0
    %121 = vmatprep.subr.mxu0 0.0
    %122 = vmatpush2.msra.mxu0 0.0
    %123 = vmatprep.subr.mxu0 0.0
    %124 = vmatpush2.msra.mxu0 0.0
    %125 = vmatprep.mubr.f32.mxu0 0.0
    %126 = vmatmul.mubr.f32.gmra.mxu0 %v48
    %v127 = vpop.f32.mrf.mxu0
    %v128 = vadd.f32 0.0, %v127
    %v129 = vpop.f32.mrf.mxu0
    %v130 = vadd.f32 0.0, %v129
    %131 = vdwg.mxu0
    %132 = vmatprep.subr.mxu0 0.0
    %133 = vmatpush1.msra.mxu0 0.0
    %134 = vmatprep.subr.mxu0 0.0
    %135 = vmatpush1.msra.mxu0 0.0
    %136 = vmatprep.subr.mxu0 0.0
    %137 = vmatpush1.msra.mxu0 0.0
    %138 = vmatprep.subr.mxu0 0.0
    %139 = vmatpush1.msra.mxu0 0.0
    %140 = vmatprep.subr.mxu0 0.0
    %141 = vmatpush1.msra.mxu0 0.0
    %142 = vmatprep.subr.mxu0 0.0
    %143 = vmatpush1.msra.mxu0 0.0
    %144 = vmatprep.subr.mxu0 0.0
    %145 = vmatpush1.msra.mxu0 0.0
    %146 = vmatprep.subr.mxu0 0.0
    %147 = vmatpush1.msra.mxu0 0.0
    %148 = vmatprep.subr.mxu0 0.0
    %149 = vmatpush1.msra.mxu0 0.0
    %150 = vmatprep.subr.mxu0 0.0
    %151 = vmatpush1.msra.mxu0 0.0
    %152 = vmatprep.subr.mxu0 0.0
    %153 = vmatpush1.msra.mxu0 0.0
    %154 = vmatprep.subr.mxu0 0.0
    %155 = vmatpush1.msra.mxu0 0.0
    %156 = vmatprep.subr.mxu0 0.0
    %157 = vmatpush1.msra.mxu0 0.0
    %158 = vmatprep.subr.mxu0 0.0
    %159 = vmatpush1.msra.mxu0 0.0
    %160 = vmatprep.subr.mxu0 0.0
    %161 = vmatpush1.msra.mxu0 0.0
    %162 = vmatprep.subr.mxu0 %v57
    %163 = vmatpush1.msra.mxu0 %v55
    %164 = vmatprep.subr.mxu0 0.0
    %165 = vmatpush2.msra.mxu0 0.0
    %166 = vmatprep.subr.mxu0 0.0
    %167 = vmatpush2.msra.mxu0 0.0
    %168 = vmatprep.subr.mxu0 0.0
    %169 = vmatpush2.msra.mxu0 0.0
    %170 = vmatprep.subr.mxu0 0.0
    %171 = vmatpush2.msra.mxu0 0.0
    %172 = vmatprep.subr.mxu0 0.0
    %173 = vmatpush2.msra.mxu0 0.0
    %174 = vmatprep.subr.mxu0 0.0
    %175 = vmatpush2.msra.mxu0 0.0
    %176 = vmatprep.subr.mxu0 0.0
    %177 = vmatpush2.msra.mxu0 0.0
    %178 = vmatprep.subr.mxu0 0.0
    %179 = vmatpush2.msra.mxu0 0.0
    %180 = vmatprep.subr.mxu0 0.0
    %181 = vmatpush2.msra.mxu0 0.0
    %182 = vmatprep.subr.mxu0 0.0
    %183 = vmatpush2.msra.mxu0 0.0
    %184 = vmatprep.subr.mxu0 0.0
    %185 = vmatpush2.msra.mxu0 0.0
    %186 = vmatprep.subr.mxu0 0.0
    %187 = vmatpush2.msra.mxu0 0.0
    %188 = vmatprep.subr.mxu0 0.0
    %189 = vmatpush2.msra.mxu0 0.0
    %190 = vmatprep.subr.mxu0 0.0
    %191 = vmatpush2.msra.mxu0 0.0
    %192 = vmatprep.subr.mxu0 0.0
    %193 = vmatpush2.msra.mxu0 0.0
    %194 = vmatprep.subr.mxu0 0.0
    %195 = vmatpush2.msra.mxu0 0.0
    %196 = vmatprep.mubr.f32.mxu0 0.0
    %197 = vmatmul.mubr.f32.gmra.mxu0 %v48
    %v198 = vpop.f32.mrf.mxu0
    %v199 = vpop.f32.mrf.mxu0
    %v200 = vadd.f32 0.0, %v199
    %201 = vdwg.mxu0
    %202 = vmatprep.subr.mxu0 0.0
    %203 = vmatpush1.msra.mxu0 0.0
    %204 = vmatprep.subr.mxu0 0.0
    %205 = vmatpush1.msra.mxu0 0.0
    %206 = vmatprep.subr.mxu0 0.0
    %207 = vmatpush1.msra.mxu0 0.0
    %208 = vmatprep.subr.mxu0 0.0
    %209 = vmatpush1.msra.mxu0 0.0
    %210 = vmatprep.subr.mxu0 0.0
    %211 = vmatpush1.msra.mxu0 0.0
    %212 = vmatprep.subr.mxu0 0.0
    %213 = vmatpush1.msra.mxu0 0.0
    %214 = vmatprep.subr.mxu0 0.0
    %215 = vmatpush1.msra.mxu0 0.0
    %216 = vmatprep.subr.mxu0 0.0
    %217 = vmatpush1.msra.mxu0 0.0
    %218 = vmatprep.subr.mxu0 0.0
    %219 = vmatpush1.msra.mxu0 0.0
    %220 = vmatprep.subr.mxu0 0.0
    %221 = vmatpush1.msra.mxu0 0.0
    %222 = vmatprep.subr.mxu0 0.0
    %223 = vmatpush1.msra.mxu0 0.0
    %224 = vmatprep.subr.mxu0 0.0
    %225 = vmatpush1.msra.mxu0 0.0
    %226 = vmatprep.subr.mxu0 0.0
    %227 = vmatpush1.msra.mxu0 0.0
    %228 = vmatprep.subr.mxu0 0.0
    %229 = vmatpush1.msra.mxu0 0.0
    %230 = vmatprep.subr.mxu0 0.0
    %231 = vmatpush1.msra.mxu0 0.0
    %232 = vmatprep.subr.mxu0 0.0
    %233 = vmatpush1.msra.mxu0 %v59
    %234 = vmatprep.subr.mxu0 0.0
    %235 = vmatpush2.msra.mxu0 0.0
    %236 = vmatprep.subr.mxu0 0.0
    %237 = vmatpush2.msra.mxu0 0.0
    %238 = vmatprep.subr.mxu0 0.0
    %239 = vmatpush2.msra.mxu0 0.0
    %240 = vmatprep.subr.mxu0 0.0
    %241 = vmatpush2.msra.mxu0 0.0
    %242 = vmatprep.subr.mxu0 0.0
    %243 = vmatpush2.msra.mxu0 0.0
    %244 = vmatprep.subr.mxu0 0.0
    %245 = vmatpush2.msra.mxu0 0.0
    %246 = vmatprep.subr.mxu0 0.0
    %247 = vmatpush2.msra.mxu0 0.0
    %248 = vmatprep.subr.mxu0 0.0
    %249 = vmatpush2.msra.mxu0 0.0
    %250 = vmatprep.subr.mxu0 0.0
    %251 = vmatpush2.msra.mxu0 0.0
    %252 = vmatprep.subr.mxu0 0.0
    %253 = vmatpush2.msra.mxu0 0.0
    %254 = vmatprep.subr.mxu0 0.0
    %255 = vmatpush2.msra.mxu0 0.0
    %256 = vmatprep.subr.mxu0 0.0
    %257 = vmatpush2.msra.mxu0 0.0
    %258 = vmatprep.subr.mxu0 0.0
    %259 = vmatpush2.msra.mxu0 0.0
    %260 = vmatprep.subr.mxu0 0.0
    %261 = vmatpush2.msra.mxu0 0.0
    %262 = vmatprep.subr.mxu0 0.0
    %263 = vmatpush2.msra.mxu0 0.0
    %264 = vmatprep.subr.mxu0 0.0
    %265 = vmatpush2.msra.mxu0 0.0
    %266 = vmatprep.mubr.f32.mxu0 0.0
    %267 = vmatmul.mubr.f32.gmra.mxu0 %v48
    %v268 = vpop.f32.mrf.mxu0
    %v269 = vadd.f32 0.0, %v268
    %v270 = vpop.f32.mrf.mxu0
    %271 = vdwg.mxu0
    %v274 = vsel %vm46, %v18, 0
    %v276 = vsel %vm50, %v15, 0
    %v278 = vsel %vm50, %v25, 0
    %v280 = vsel %vm50, %v16, 0
    %v282 = vsel %vm50, %v26, 0
    %v284 = vsel %vm50, %v17, 0
    %286 = vmatprep.subr.mxu0 0.0
    %287 = vmatpush1.msra.mxu0 0.0
    %288 = vmatprep.subr.mxu0 0.0
    %289 = vmatpush1.msra.mxu0 0.0
    %290 = vmatprep.subr.mxu0 0.0
    %291 = vmatpush1.msra.mxu0 0.0
    %292 = vmatprep.subr.mxu0 0.0
    %293 = vmatpush1.msra.mxu0 0.0
    %294 = vmatprep.subr.mxu0 0.0
    %295 = vmatpush1.msra.mxu0 0.0
    %296 = vmatprep.subr.mxu0 0.0
    %297 = vmatpush1.msra.mxu0 0.0
    %298 = vmatprep.subr.mxu0 0.0
    %299 = vmatpush1.msra.mxu0 0.0
    %300 = vmatprep.subr.mxu0 0.0
    %301 = vmatpush1.msra.mxu0 0.0
    %302 = vmatprep.subr.mxu0 0.0
    %303 = vmatpush1.msra.mxu0 0.0
    %304 = vmatprep.subr.mxu0 0.0
    %305 = vmatpush1.msra.mxu0 0.0
    %306 = vmatprep.subr.mxu0 0.0
    %307 = vmatpush1.msra.mxu0 0.0
    %308 = vmatprep.subr.mxu0 0.0
    %309 = vmatpush1.msra.mxu0 0.0
    %310 = vmatprep.subr.mxu0 0.0
    %311 = vmatpush1.msra.mxu0 0.0
    %312 = vmatprep.subr.mxu0 0.0
    %313 = vmatpush1.msra.mxu0 0.0
    %314 = vmatprep.subr.mxu0 0.0
    %315 = vmatpush1.msra.mxu0 0.0
    %316 = vmatprep.subr.mxu0 %v278
    %317 = vmatpush1.msra.mxu0 %v276
    %318 = vmatprep.subr.mxu0 0.0
    %319 = vmatpush2.msra.mxu0 0.0
    %320 = vmatprep.subr.mxu0 0.0
    %321 = vmatpush2.msra.mxu0 0.0
    %322 = vmatprep.subr.mxu0 0.0
    %323 = vmatpush2.msra.mxu0 0.0
    %324 = vmatprep.subr.mxu0 0.0
    %325 = vmatpush2.msra.mxu0 0.0
    %326 = vmatprep.subr.mxu0 0.0
    %327 = vmatpush2.msra.mxu0 0.0
    %328 = vmatprep.subr.mxu0 0.0
    %329 = vmatpush2.msra.mxu0 0.0
    %330 = vmatprep.subr.mxu0 0.0
    %331 = vmatpush2.msra.mxu0 0.0
    %332 = vmatprep.subr.mxu0 0.0
    %333 = vmatpush2.msra.mxu0 0.0
    %334 = vmatprep.subr.mxu0 0.0
    %335 = vmatpush2.msra.mxu0 0.0
    %336 = vmatprep.subr.mxu0 0.0
    %337 = vmatpush2.msra.mxu0 0.0
    %338 = vmatprep.subr.mxu0 0.0
    %339 = vmatpush2.msra.mxu0 0.0
    %340 = vmatprep.subr.mxu0 0.0
    %341 = vmatpush2.msra.mxu0 0.0
    %342 = vmatprep.subr.mxu0 0.0
    %343 = vmatpush2.msra.mxu0 0.0
    %344 = vmatprep.subr.mxu0 0.0
    %345 = vmatpush2.msra.mxu0 0.0
    %346 = vmatprep.subr.mxu0 0.0
    %347 = vmatpush2.msra.mxu0 0.0
    %348 = vmatprep.subr.mxu0 0.0
    %349 = vmatpush2.msra.mxu0 0.0
    %350 = vmatprep.mubr.f32.mxu0 0.0
    %351 = vmatmul.mubr.f32.gmra.mxu0 %v274
    %v352 = vpop.f32.mrf.mxu0
    %v353 = vadd.f32 %v128, %v352
    %v354 = vpop.f32.mrf.mxu0
    %v355 = vadd.f32 %v130, %v354
    %356 = vdwg.mxu0
    %357 = vmatprep.subr.mxu0 0.0
    %358 = vmatpush1.msra.mxu0 0.0
    %359 = vmatprep.subr.mxu0 0.0
    %360 = vmatpush1.msra.mxu0 0.0
    %361 = vmatprep.subr.mxu0 0.0
    %362 = vmatpush1.msra.mxu0 0.0
    %363 = vmatprep.subr.mxu0 0.0
    %364 = vmatpush1.msra.mxu0 0.0
    %365 = vmatprep.subr.mxu0 0.0
    %366 = vmatpush1.msra.mxu0 0.0
    %367 = vmatprep.subr.mxu0 0.0
    %368 = vmatpush1.msra.mxu0 0.0
    %369 = vmatprep.subr.mxu0 0.0
    %370 = vmatpush1.msra.mxu0 0.0
    %371 = vmatprep.subr.mxu0 0.0
    %372 = vmatpush1.msra.mxu0 0.0
    %373 = vmatprep.subr.mxu0 0.0
    %374 = vmatpush1.msra.mxu0 0.0
    %375 = vmatprep.subr.mxu0 0.0
    %376 = vmatpush1.msra.mxu0 0.0
    %377 = vmatprep.subr.mxu0 0.0
    %378 = vmatpush1.msra.mxu0 0.0
    %379 = vmatprep.subr.mxu0 0.0
    %380 = vmatpush1.msra.mxu0 0.0
    %381 = vmatprep.subr.mxu0 0.0
    %382 = vmatpush1.msra.mxu0 0.0
    %383 = vmatprep.subr.mxu0 0.0
    %384 = vmatpush1.msra.mxu0 0.0
    %385 = vmatprep.subr.mxu0 0.0
    %386 = vmatpush1.msra.mxu0 0.0
    %387 = vmatprep.subr.mxu0 %v282
    %388 = vmatpush1.msra.mxu0 %v280
    %389 = vmatprep.subr.mxu0 0.0
    %390 = vmatpush2.msra.mxu0 0.0
    %391 = vmatprep.subr.mxu0 0.0
    %392 = vmatpush2.msra.mxu0 0.0
    %393 = vmatprep.subr.mxu0 0.0
    %394 = vmatpush2.msra.mxu0 0.0
    %395 = vmatprep.subr.mxu0 0.0
    %396 = vmatpush2.msra.mxu0 0.0
    %397 = vmatprep.subr.mxu0 0.0
    %398 = vmatpush2.msra.mxu0 0.0
    %399 = vmatprep.subr.mxu0 0.0
    %400 = vmatpush2.msra.mxu0 0.0
    %401 = vmatprep.subr.mxu0 0.0
    %402 = vmatpush2.msra.mxu0 0.0
    %403 = vmatprep.subr.mxu0 0.0
    %404 = vmatpush2.msra.mxu0 0.0
    %405 = vmatprep.subr.mxu0 0.0
    %406 = vmatpush2.msra.mxu0 0.0
    %407 = vmatprep.subr.mxu0 0.0
    %408 = vmatpush2.msra.mxu0 0.0
    %409 = vmatprep.subr.mxu0 0.0
    %410 = vmatpush2.msra.mxu0 0.0
    %411 = vmatprep.subr.mxu0 0.0
    %412 = vmatpush2.msra.mxu0 0.0
    %413 = vmatprep.subr.mxu0 0.0
    %414 = vmatpush2.msra.mxu0 0.0
    %415 = vmatprep.subr.mxu0 0.0
    %416 = vmatpush2.msra.mxu0 0.0
    %417 = vmatprep.subr.mxu0 0.0
    %418 = vmatpush2.msra.mxu0 0.0
    %419 = vmatprep.subr.mxu0 0.0
    %420 = vmatpush2.msra.mxu0 0.0
    %421 = vmatprep.mubr.f32.mxu0 0.0
    %422 = vmatmul.mubr.f32.gmra.mxu0 %v274
    %v423 = vpop.f32.mrf.mxu0
    %v424 = vpop.f32.mrf.mxu0
    %v425 = vadd.f32 %v200, %v424
    %426 = vdwg.mxu0
    %427 = vmatprep.subr.mxu0 0.0
    %428 = vmatpush1.msra.mxu0 0.0
    %429 = vmatprep.subr.mxu0 0.0
    %430 = vmatpush1.msra.mxu0 0.0
    %431 = vmatprep.subr.mxu0 0.0
    %432 = vmatpush1.msra.mxu0 0.0
    %433 = vmatprep.subr.mxu0 0.0
    %434 = vmatpush1.msra.mxu0 0.0
    %435 = vmatprep.subr.mxu0 0.0
    %436 = vmatpush1.msra.mxu0 0.0
    %437 = vmatprep.subr.mxu0 0.0
    %438 = vmatpush1.msra.mxu0 0.0
    %439 = vmatprep.subr.mxu0 0.0
    %440 = vmatpush1.msra.mxu0 0.0
    %441 = vmatprep.subr.mxu0 0.0
    %442 = vmatpush1.msra.mxu0 0.0
    %443 = vmatprep.subr.mxu0 0.0
    %444 = vmatpush1.msra.mxu0 0.0
    %445 = vmatprep.subr.mxu0 0.0
    %446 = vmatpush1.msra.mxu0 0.0
    %447 = vmatprep.subr.mxu0 0.0
    %448 = vmatpush1.msra.mxu0 0.0
    %449 = vmatprep.subr.mxu0 0.0
    %450 = vmatpush1.msra.mxu0 0.0
    %451 = vmatprep.subr.mxu0 0.0
    %452 = vmatpush1.msra.mxu0 0.0
    %453 = vmatprep.subr.mxu0 0.0
    %454 = vmatpush1.msra.mxu0 0.0
    %455 = vmatprep.subr.mxu0 0.0
    %456 = vmatpush1.msra.mxu0 0.0
    %457 = vmatprep.subr.mxu0 0.0
    %458 = vmatpush1.msra.mxu0 %v284
    %459 = vmatprep.subr.mxu0 0.0
    %460 = vmatpush2.msra.mxu0 0.0
    %461 = vmatprep.subr.mxu0 0.0
    %462 = vmatpush2.msra.mxu0 0.0
    %463 = vmatprep.subr.mxu0 0.0
    %464 = vmatpush2.msra.mxu0 0.0
    %465 = vmatprep.subr.mxu0 0.0
    %466 = vmatpush2.msra.mxu0 0.0
    %467 = vmatprep.subr.mxu0 0.0
    %468 = vmatpush2.msra.mxu0 0.0
    %469 = vmatprep.subr.mxu0 0.0
    %470 = vmatpush2.msra.mxu0 0.0
    %471 = vmatprep.subr.mxu0 0.0
    %472 = vmatpush2.msra.mxu0 0.0
    %473 = vmatprep.subr.mxu0 0.0
    %474 = vmatpush2.msra.mxu0 0.0
    %475 = vmatprep.subr.mxu0 0.0
    %476 = vmatpush2.msra.mxu0 0.0
    %477 = vmatprep.subr.mxu0 0.0
    %478 = vmatpush2.msra.mxu0 0.0
    %479 = vmatprep.subr.mxu0 0.0
    %480 = vmatpush2.msra.mxu0 0.0
    %481 = vmatprep.subr.mxu0 0.0
    %482 = vmatpush2.msra.mxu0 0.0
    %483 = vmatprep.subr.mxu0 0.0
    %484 = vmatpush2.msra.mxu0 0.0
    %485 = vmatprep.subr.mxu0 0.0
    %486 = vmatpush2.msra.mxu0 0.0
    %487 = vmatprep.subr.mxu0 0.0
    %488 = vmatpush2.msra.mxu0 0.0
    %489 = vmatprep.subr.mxu0 0.0
    %490 = vmatpush2.msra.mxu0 0.0
    %491 = vmatprep.mubr.f32.mxu0 0.0
    %492 = vmatmul.mubr.f32.gmra.mxu0 %v274
    %v493 = vpop.f32.mrf.mxu0
    %v494 = vadd.f32 %v269, %v493
    %v495 = vpop.f32.mrf.mxu0
    %496 = vdwg.mxu0
    %v497 = vld [vmem:[%s0] sm:$0x77]
    %v498 = vld [vmem:[%s0 + $0x8] sm:$0x77]
    %v499 = vld [vmem:[%s0 + $0x10] sm:$0x77]
    %s500 = scalar_lea.vmem %s1, 16
    %v501 = vld [vmem:[%s500] sm:$0xff]
    %v505 = vcombine.high %v497, %v497
    %v506 = vcombine.high %v498, %v498
    %v507 = vcombine.high %v499, %v499
    %508 = vrot.lane.b32.xlu0 %v497, 126
    %v509 = vpop.permute.xlu0 %508
    %510 = vrot.lane.b32.xlu0 %v505, 126
    %v511 = vpop.permute.xlu0 %510
    %512 = vrot.lane.b32.xlu0 %v498, 126
    %v513 = vpop.permute.xlu0 %512
    %514 = vrot.lane.b32.xlu0 %v506, 126
    %v515 = vpop.permute.xlu0 %514
    %516 = vrot.lane.b32.xlu0 %v499, 126
    %v517 = vpop.permute.xlu0 %516
    %518 = vrot.lane.b32.xlu0 %v507, 126
    %v519 = vpop.permute.xlu0 %518
    %vm520 = vcmask 1031168
    %v521 = vsel %vm520, %v509, %v511
    %v522 = vsel %vm520, %v511, %v513
    %v523 = vsel %vm520, %v513, %v515
    %v524 = vsel %vm520, %v515, %v517
    %v525 = vsel %vm520, %v517, %v519
    %v527 = vsel %vm46, %v501, 0
    %v529 = vsel %vm50, %v521, 0
    %v531 = vsel %vm50, %v522, 0
    %v533 = vsel %vm50, %v523, 0
    %v535 = vsel %vm50, %v524, 0
    %v537 = vsel %vm50, %v525, 0
    %539 = vmatprep.subr.mxu0 0.0
    %540 = vmatpush1.msra.mxu0 0.0
    %541 = vmatprep.subr.mxu0 0.0
    %542 = vmatpush1.msra.mxu0 0.0
    %543 = vmatprep.subr.mxu0 0.0
    %544 = vmatpush1.msra.mxu0 0.0
    %545 = vmatprep.subr.mxu0 0.0
    %546 = vmatpush1.msra.mxu0 0.0
    %547 = vmatprep.subr.mxu0 0.0
    %548 = vmatpush1.msra.mxu0 0.0
    %549 = vmatprep.subr.mxu0 0.0
    %550 = vmatpush1.msra.mxu0 0.0
    %551 = vmatprep.subr.mxu0 0.0
    %552 = vmatpush1.msra.mxu0 0.0
    %553 = vmatprep.subr.mxu0 0.0
    %554 = vmatpush1.msra.mxu0 0.0
    %555 = vmatprep.subr.mxu0 0.0
    %556 = vmatpush1.msra.mxu0 0.0
    %557 = vmatprep.subr.mxu0 0.0
    %558 = vmatpush1.msra.mxu0 0.0
    %559 = vmatprep.subr.mxu0 0.0
    %560 = vmatpush1.msra.mxu0 0.0
    %561 = vmatprep.subr.mxu0 0.0
    %562 = vmatpush1.msra.mxu0 0.0
    %563 = vmatprep.subr.mxu0 0.0
    %564 = vmatpush1.msra.mxu0 0.0
    %565 = vmatprep.subr.mxu0 0.0
    %566 = vmatpush1.msra.mxu0 0.0
    %567 = vmatprep.subr.mxu0 0.0
    %568 = vmatpush1.msra.mxu0 0.0
    %569 = vmatprep.subr.mxu0 %v531
    %570 = vmatpush1.msra.mxu0 %v529
    %571 = vmatprep.subr.mxu0 0.0
    %572 = vmatpush2.msra.mxu0 0.0
    %573 = vmatprep.subr.mxu0 0.0
    %574 = vmatpush2.msra.mxu0 0.0
    %575 = vmatprep.subr.mxu0 0.0
    %576 = vmatpush2.msra.mxu0 0.0
    %577 = vmatprep.subr.mxu0 0.0
    %578 = vmatpush2.msra.mxu0 0.0
    %579 = vmatprep.subr.mxu0 0.0
    %580 = vmatpush2.msra.mxu0 0.0
    %581 = vmatprep.subr.mxu0 0.0
    %582 = vmatpush2.msra.mxu0 0.0
    %583 = vmatprep.subr.mxu0 0.0
    %584 = vmatpush2.msra.mxu0 0.0
    %585 = vmatprep.subr.mxu0 0.0
    %586 = vmatpush2.msra.mxu0 0.0
    %587 = vmatprep.subr.mxu0 0.0
    %588 = vmatpush2.msra.mxu0 0.0
    %589 = vmatprep.subr.mxu0 0.0
    %590 = vmatpush2.msra.mxu0 0.0
    %591 = vmatprep.subr.mxu0 0.0
    %592 = vmatpush2.msra.mxu0 0.0
    %593 = vmatprep.subr.mxu0 0.0
    %594 = vmatpush2.msra.mxu0 0.0
    %595 = vmatprep.subr.mxu0 0.0
    %596 = vmatpush2.msra.mxu0 0.0
    %597 = vmatprep.subr.mxu0 0.0
    %598 = vmatpush2.msra.mxu0 0.0
    %599 = vmatprep.subr.mxu0 0.0
    %600 = vmatpush2.msra.mxu0 0.0
    %601 = vmatprep.subr.mxu0 0.0
    %602 = vmatpush2.msra.mxu0 0.0
    %603 = vmatprep.mubr.f32.mxu0 0.0
    %604 = vmatmul.mubr.f32.gmra.mxu0 %v527
    %v605 = vpop.f32.mrf.mxu0
    %v606 = vadd.f32 0.0, %v605
    %v607 = vpop.f32.mrf.mxu0
    %v608 = vadd.f32 0.0, %v607
    %609 = vdwg.mxu0
    %610 = vmatprep.subr.mxu0 0.0
    %611 = vmatpush1.msra.mxu0 0.0
    %612 = vmatprep.subr.mxu0 0.0
    %613 = vmatpush1.msra.mxu0 0.0
    %614 = vmatprep.subr.mxu0 0.0
    %615 = vmatpush1.msra.mxu0 0.0
    %616 = vmatprep.subr.mxu0 0.0
    %617 = vmatpush1.msra.mxu0 0.0
    %618 = vmatprep.subr.mxu0 0.0
    %619 = vmatpush1.msra.mxu0 0.0
    %620 = vmatprep.subr.mxu0 0.0
    %621 = vmatpush1.msra.mxu0 0.0
    %622 = vmatprep.subr.mxu0 0.0
    %623 = vmatpush1.msra.mxu0 0.0
    %624 = vmatprep.subr.mxu0 0.0
    %625 = vmatpush1.msra.mxu0 0.0
    %626 = vmatprep.subr.mxu0 0.0
    %627 = vmatpush1.msra.mxu0 0.0
    %628 = vmatprep.subr.mxu0 0.0
    %629 = vmatpush1.msra.mxu0 0.0
    %630 = vmatprep.subr.mxu0 0.0
    %631 = vmatpush1.msra.mxu0 0.0
    %632 = vmatprep.subr.mxu0 0.0
    %633 = vmatpush1.msra.mxu0 0.0
    %634 = vmatprep.subr.mxu0 0.0
    %635 = vmatpush1.msra.mxu0 0.0
    %636 = vmatprep.subr.mxu0 0.0
    %637 = vmatpush1.msra.mxu0 0.0
    %638 = vmatprep.subr.mxu0 0.0
    %639 = vmatpush1.msra.mxu0 0.0
    %640 = vmatprep.subr.mxu0 %v535
    %641 = vmatpush1.msra.mxu0 %v533
    %642 = vmatprep.subr.mxu0 0.0
    %643 = vmatpush2.msra.mxu0 0.0
    %644 = vmatprep.subr.mxu0 0.0
    %645 = vmatpush2.msra.mxu0 0.0
    %646 = vmatprep.subr.mxu0 0.0
    %647 = vmatpush2.msra.mxu0 0.0
    %648 = vmatprep.subr.mxu0 0.0
    %649 = vmatpush2.msra.mxu0 0.0
    %650 = vmatprep.subr.mxu0 0.0
    %651 = vmatpush2.msra.mxu0 0.0
    %652 = vmatprep.subr.mxu0 0.0
    %653 = vmatpush2.msra.mxu0 0.0
    %654 = vmatprep.subr.mxu0 0.0
    %655 = vmatpush2.msra.mxu0 0.0
    %656 = vmatprep.subr.mxu0 0.0
    %657 = vmatpush2.msra.mxu0 0.0
    %658 = vmatprep.subr.mxu0 0.0
    %659 = vmatpush2.msra.mxu0 0.0
    %660 = vmatprep.subr.mxu0 0.0
    %661 = vmatpush2.msra.mxu0 0.0
    %662 = vmatprep.subr.mxu0 0.0
    %663 = vmatpush2.msra.mxu0 0.0
    %664 = vmatprep.subr.mxu0 0.0
    %665 = vmatpush2.msra.mxu0 0.0
    %666 = vmatprep.subr.mxu0 0.0
    %667 = vmatpush2.msra.mxu0 0.0
    %668 = vmatprep.subr.mxu0 0.0
    %669 = vmatpush2.msra.mxu0 0.0
    %670 = vmatprep.subr.mxu0 0.0
    %671 = vmatpush2.msra.mxu0 0.0
    %672 = vmatprep.subr.mxu0 0.0
    %673 = vmatpush2.msra.mxu0 0.0
    %674 = vmatprep.mubr.f32.mxu0 0.0
    %675 = vmatmul.mubr.f32.gmra.mxu0 %v527
    %v676 = vpop.f32.mrf.mxu0
    %v677 = vpop.f32.mrf.mxu0
    %v678 = vadd.f32 0.0, %v677
    %679 = vdwg.mxu0
    %680 = vmatprep.subr.mxu0 0.0
    %681 = vmatpush1.msra.mxu0 0.0
    %682 = vmatprep.subr.mxu0 0.0
    %683 = vmatpush1.msra.mxu0 0.0
    %684 = vmatprep.subr.mxu0 0.0
    %685 = vmatpush1.msra.mxu0 0.0
    %686 = vmatprep.subr.mxu0 0.0
    %687 = vmatpush1.msra.mxu0 0.0
    %688 = vmatprep.subr.mxu0 0.0
    %689 = vmatpush1.msra.mxu0 0.0
    %690 = vmatprep.subr.mxu0 0.0
    %691 = vmatpush1.msra.mxu0 0.0
    %692 = vmatprep.subr.mxu0 0.0
    %693 = vmatpush1.msra.mxu0 0.0
    %694 = vmatprep.subr.mxu0 0.0
    %695 = vmatpush1.msra.mxu0 0.0
    %696 = vmatprep.subr.mxu0 0.0
    %697 = vmatpush1.msra.mxu0 0.0
    %698 = vmatprep.subr.mxu0 0.0
    %699 = vmatpush1.msra.mxu0 0.0
    %700 = vmatprep.subr.mxu0 0.0
    %701 = vmatpush1.msra.mxu0 0.0
    %702 = vmatprep.subr.mxu0 0.0
    %703 = vmatpush1.msra.mxu0 0.0
    %704 = vmatprep.subr.mxu0 0.0
    %705 = vmatpush1.msra.mxu0 0.0
    %706 = vmatprep.subr.mxu0 0.0
    %707 = vmatpush1.msra.mxu0 0.0
    %708 = vmatprep.subr.mxu0 0.0
    %709 = vmatpush1.msra.mxu0 0.0
    %710 = vmatprep.subr.mxu0 0.0
    %711 = vmatpush1.msra.mxu0 %v537
    %712 = vmatprep.subr.mxu0 0.0
    %713 = vmatpush2.msra.mxu0 0.0
    %714 = vmatprep.subr.mxu0 0.0
    %715 = vmatpush2.msra.mxu0 0.0
    %716 = vmatprep.subr.mxu0 0.0
    %717 = vmatpush2.msra.mxu0 0.0
    %718 = vmatprep.subr.mxu0 0.0
    %719 = vmatpush2.msra.mxu0 0.0
    %720 = vmatprep.subr.mxu0 0.0
    %721 = vmatpush2.msra.mxu0 0.0
    %722 = vmatprep.subr.mxu0 0.0
    %723 = vmatpush2.msra.mxu0 0.0
    %724 = vmatprep.subr.mxu0 0.0
    %725 = vmatpush2.msra.mxu0 0.0
    %726 = vmatprep.subr.mxu0 0.0
    %727 = vmatpush2.msra.mxu0 0.0
    %728 = vmatprep.subr.mxu0 0.0
    %729 = vmatpush2.msra.mxu0 0.0
    %730 = vmatprep.subr.mxu0 0.0
    %731 = vmatpush2.msra.mxu0 0.0
    %732 = vmatprep.subr.mxu0 0.0
    %733 = vmatpush2.msra.mxu0 0.0
    %734 = vmatprep.subr.mxu0 0.0
    %735 = vmatpush2.msra.mxu0 0.0
    %736 = vmatprep.subr.mxu0 0.0
    %737 = vmatpush2.msra.mxu0 0.0
    %738 = vmatprep.subr.mxu0 0.0
    %739 = vmatpush2.msra.mxu0 0.0
    %740 = vmatprep.subr.mxu0 0.0
    %741 = vmatpush2.msra.mxu0 0.0
    %742 = vmatprep.subr.mxu0 0.0
    %743 = vmatpush2.msra.mxu0 0.0
    %744 = vmatprep.mubr.f32.mxu0 0.0
    %745 = vmatmul.mubr.f32.gmra.mxu0 %v527
    %v746 = vpop.f32.mrf.mxu0
    %v747 = vadd.f32 0.0, %v746
    %v748 = vpop.f32.mrf.mxu0
    %749 = vdwg.mxu0
    %v750 = vadd.f32 %v353, %v606
    %v751 = vadd.f32 %v355, %v608
    %v752 = vadd.f32 %v425, %v678
    %v753 = vadd.f32 %v494, %v747
    %v754 = vld [vmem:[%s0] sm:$0x77]
    %v755 = vld [vmem:[%s0 + $0x8] sm:$0x77]
    %v756 = vld [vmem:[%s0 + $0x10] sm:$0x77]
    %s757 = scalar_lea.vmem %s1, 24
    %v758 = vld [vmem:[%s757] sm:$0xff]
    %v762 = vcombine.high %v754, %v754
    %v763 = vcombine.high %v755, %v755
    %v764 = vcombine.high %v756, %v756
    %765 = vrot.lane.b32.xlu0 %v754, 125
    %v766 = vpop.permute.xlu0 %765
    %767 = vrot.lane.b32.xlu0 %v762, 125
    %v768 = vpop.permute.xlu0 %767
    %769 = vrot.lane.b32.xlu0 %v755, 125
    %v770 = vpop.permute.xlu0 %769
    %771 = vrot.lane.b32.xlu0 %v763, 125
    %v772 = vpop.permute.xlu0 %771
    %773 = vrot.lane.b32.xlu0 %v756, 125
    %v774 = vpop.permute.xlu0 %773
    %775 = vrot.lane.b32.xlu0 %v764, 125
    %v776 = vpop.permute.xlu0 %775
    %vm777 = vcmask 1022976
    %v778 = vsel %vm777, %v766, %v768
    %v779 = vsel %vm777, %v768, %v770
    %v780 = vsel %vm777, %v770, %v772
    %v781 = vsel %vm777, %v772, %v774
    %v782 = vsel %vm777, %v774, %v776
    %v784 = vsel %vm46, %v758, 0
    %v786 = vsel %vm50, %v778, 0
    %v788 = vsel %vm50, %v779, 0
    %v790 = vsel %vm50, %v780, 0
    %v792 = vsel %vm50, %v781, 0
    %v794 = vsel %vm50, %v782, 0
    %796 = vmatprep.subr.mxu0 0.0
    %797 = vmatpush1.msra.mxu0 0.0
    %798 = vmatprep.subr.mxu0 0.0
    %799 = vmatpush1.msra.mxu0 0.0
    %800 = vmatprep.subr.mxu0 0.0
    %801 = vmatpush1.msra.mxu0 0.0
    %802 = vmatprep.subr.mxu0 0.0
    %803 = vmatpush1.msra.mxu0 0.0
    %804 = vmatprep.subr.mxu0 0.0
    %805 = vmatpush1.msra.mxu0 0.0
    %806 = vmatprep.subr.mxu0 0.0
    %807 = vmatpush1.msra.mxu0 0.0
    %808 = vmatprep.subr.mxu0 0.0
    %809 = vmatpush1.msra.mxu0 0.0
    %810 = vmatprep.subr.mxu0 0.0
    %811 = vmatpush1.msra.mxu0 0.0
    %812 = vmatprep.subr.mxu0 0.0
    %813 = vmatpush1.msra.mxu0 0.0
    %814 = vmatprep.subr.mxu0 0.0
    %815 = vmatpush1.msra.mxu0 0.0
    %816 = vmatprep.subr.mxu0 0.0
    %817 = vmatpush1.msra.mxu0 0.0
    %818 = vmatprep.subr.mxu0 0.0
    %819 = vmatpush1.msra.mxu0 0.0
    %820 = vmatprep.subr.mxu0 0.0
    %821 = vmatpush1.msra.mxu0 0.0
    %822 = vmatprep.subr.mxu0 0.0
    %823 = vmatpush1.msra.mxu0 0.0
    %824 = vmatprep.subr.mxu0 0.0
    %825 = vmatpush1.msra.mxu0 0.0
    %826 = vmatprep.subr.mxu0 %v788
    %827 = vmatpush1.msra.mxu0 %v786
    %828 = vmatprep.subr.mxu0 0.0
    %829 = vmatpush2.msra.mxu0 0.0
    %830 = vmatprep.subr.mxu0 0.0
    %831 = vmatpush2.msra.mxu0 0.0
    %832 = vmatprep.subr.mxu0 0.0
    %833 = vmatpush2.msra.mxu0 0.0
    %834 = vmatprep.subr.mxu0 0.0
    %835 = vmatpush2.msra.mxu0 0.0
    %836 = vmatprep.subr.mxu0 0.0
    %837 = vmatpush2.msra.mxu0 0.0
    %838 = vmatprep.subr.mxu0 0.0
    %839 = vmatpush2.msra.mxu0 0.0
    %840 = vmatprep.subr.mxu0 0.0
    %841 = vmatpush2.msra.mxu0 0.0
    %842 = vmatprep.subr.mxu0 0.0
    %843 = vmatpush2.msra.mxu0 0.0
    %844 = vmatprep.subr.mxu0 0.0
    %845 = vmatpush2.msra.mxu0 0.0
    %846 = vmatprep.subr.mxu0 0.0
    %847 = vmatpush2.msra.mxu0 0.0
    %848 = vmatprep.subr.mxu0 0.0
    %849 = vmatpush2.msra.mxu0 0.0
    %850 = vmatprep.subr.mxu0 0.0
    %851 = vmatpush2.msra.mxu0 0.0
    %852 = vmatprep.subr.mxu0 0.0
    %853 = vmatpush2.msra.mxu0 0.0
    %854 = vmatprep.subr.mxu0 0.0
    %855 = vmatpush2.msra.mxu0 0.0
    %856 = vmatprep.subr.mxu0 0.0
    %857 = vmatpush2.msra.mxu0 0.0
    %858 = vmatprep.subr.mxu0 0.0
    %859 = vmatpush2.msra.mxu0 0.0
    %860 = vmatprep.mubr.f32.mxu0 0.0
    %861 = vmatmul.mubr.f32.gmra.mxu0 %v784
    %v862 = vpop.f32.mrf.mxu0
    %v863 = vadd.f32 0.0, %v862
    %v864 = vpop.f32.mrf.mxu0
    %v865 = vadd.f32 0.0, %v864
    %866 = vdwg.mxu0
    %867 = vmatprep.subr.mxu0 0.0
    %868 = vmatpush1.msra.mxu0 0.0
    %869 = vmatprep.subr.mxu0 0.0
    %870 = vmatpush1.msra.mxu0 0.0
    %871 = vmatprep.subr.mxu0 0.0
    %872 = vmatpush1.msra.mxu0 0.0
    %873 = vmatprep.subr.mxu0 0.0
    %874 = vmatpush1.msra.mxu0 0.0
    %875 = vmatprep.subr.mxu0 0.0
    %876 = vmatpush1.msra.mxu0 0.0
    %877 = vmatprep.subr.mxu0 0.0
    %878 = vmatpush1.msra.mxu0 0.0
    %879 = vmatprep.subr.mxu0 0.0
    %880 = vmatpush1.msra.mxu0 0.0
    %881 = vmatprep.subr.mxu0 0.0
    %882 = vmatpush1.msra.mxu0 0.0
    %883 = vmatprep.subr.mxu0 0.0
    %884 = vmatpush1.msra.mxu0 0.0
    %885 = vmatprep.subr.mxu0 0.0
    %886 = vmatpush1.msra.mxu0 0.0
    %887 = vmatprep.subr.mxu0 0.0
    %888 = vmatpush1.msra.mxu0 0.0
    %889 = vmatprep.subr.mxu0 0.0
    %890 = vmatpush1.msra.mxu0 0.0
    %891 = vmatprep.subr.mxu0 0.0
    %892 = vmatpush1.msra.mxu0 0.0
    %893 = vmatprep.subr.mxu0 0.0
    %894 = vmatpush1.msra.mxu0 0.0
    %895 = vmatprep.subr.mxu0 0.0
    %896 = vmatpush1.msra.mxu0 0.0
    %897 = vmatprep.subr.mxu0 %v792
    %898 = vmatpush1.msra.mxu0 %v790
    %899 = vmatprep.subr.mxu0 0.0
    %900 = vmatpush2.msra.mxu0 0.0
    %901 = vmatprep.subr.mxu0 0.0
    %902 = vmatpush2.msra.mxu0 0.0
    %903 = vmatprep.subr.mxu0 0.0
    %904 = vmatpush2.msra.mxu0 0.0
    %905 = vmatprep.subr.mxu0 0.0
    %906 = vmatpush2.msra.mxu0 0.0
    %907 = vmatprep.subr.mxu0 0.0
    %908 = vmatpush2.msra.mxu0 0.0
    %909 = vmatprep.subr.mxu0 0.0
    %910 = vmatpush2.msra.mxu0 0.0
    %911 = vmatprep.subr.mxu0 0.0
    %912 = vmatpush2.msra.mxu0 0.0
    %913 = vmatprep.subr.mxu0 0.0
    %914 = vmatpush2.msra.mxu0 0.0
    %915 = vmatprep.subr.mxu0 0.0
    %916 = vmatpush2.msra.mxu0 0.0
    %917 = vmatprep.subr.mxu0 0.0
    %918 = vmatpush2.msra.mxu0 0.0
    %919 = vmatprep.subr.mxu0 0.0
    %920 = vmatpush2.msra.mxu0 0.0
    %921 = vmatprep.subr.mxu0 0.0
    %922 = vmatpush2.msra.mxu0 0.0
    %923 = vmatprep.subr.mxu0 0.0
    %924 = vmatpush2.msra.mxu0 0.0
    %925 = vmatprep.subr.mxu0 0.0
    %926 = vmatpush2.msra.mxu0 0.0
    %927 = vmatprep.subr.mxu0 0.0
    %928 = vmatpush2.msra.mxu0 0.0
    %929 = vmatprep.subr.mxu0 0.0
    %930 = vmatpush2.msra.mxu0 0.0
    %931 = vmatprep.mubr.f32.mxu0 0.0
    %932 = vmatmul.mubr.f32.gmra.mxu0 %v784
    %v933 = vpop.f32.mrf.mxu0
    %v934 = vpop.f32.mrf.mxu0
    %v935 = vadd.f32 0.0, %v934
    %936 = vdwg.mxu0
    %937 = vmatprep.subr.mxu0 0.0
    %938 = vmatpush1.msra.mxu0 0.0
    %939 = vmatprep.subr.mxu0 0.0
    %940 = vmatpush1.msra.mxu0 0.0
    %941 = vmatprep.subr.mxu0 0.0
    %942 = vmatpush1.msra.mxu0 0.0
    %943 = vmatprep.subr.mxu0 0.0
    %944 = vmatpush1.msra.mxu0 0.0
    %945 = vmatprep.subr.mxu0 0.0
    %946 = vmatpush1.msra.mxu0 0.0
    %947 = vmatprep.subr.mxu0 0.0
    %948 = vmatpush1.msra.mxu0 0.0
    %949 = vmatprep.subr.mxu0 0.0
    %950 = vmatpush1.msra.mxu0 0.0
    %951 = vmatprep.subr.mxu0 0.0
    %952 = vmatpush1.msra.mxu0 0.0
    %953 = vmatprep.subr.mxu0 0.0
    %954 = vmatpush1.msra.mxu0 0.0
    %955 = vmatprep.subr.mxu0 0.0
    %956 = vmatpush1.msra.mxu0 0.0
    %957 = vmatprep.subr.mxu0 0.0
    %958 = vmatpush1.msra.mxu0 0.0
    %959 = vmatprep.subr.mxu0 0.0
    %960 = vmatpush1.msra.mxu0 0.0
    %961 = vmatprep.subr.mxu0 0.0
    %962 = vmatpush1.msra.mxu0 0.0
    %963 = vmatprep.subr.mxu0 0.0
    %964 = vmatpush1.msra.mxu0 0.0
    %965 = vmatprep.subr.mxu0 0.0
    %966 = vmatpush1.msra.mxu0 0.0
    %967 = vmatprep.subr.mxu0 0.0
    %968 = vmatpush1.msra.mxu0 %v794
    %969 = vmatprep.subr.mxu0 0.0
    %970 = vmatpush2.msra.mxu0 0.0
    %971 = vmatprep.subr.mxu0 0.0
    %972 = vmatpush2.msra.mxu0 0.0
    %973 = vmatprep.subr.mxu0 0.0
    %974 = vmatpush2.msra.mxu0 0.0
    %975 = vmatprep.subr.mxu0 0.0
    %976 = vmatpush2.msra.mxu0 0.0
    %977 = vmatprep.subr.mxu0 0.0
    %978 = vmatpush2.msra.mxu0 0.0
    %979 = vmatprep.subr.mxu0 0.0
    %980 = vmatpush2.msra.mxu0 0.0
    %981 = vmatprep.subr.mxu0 0.0
    %982 = vmatpush2.msra.mxu0 0.0
    %983 = vmatprep.subr.mxu0 0.0
    %984 = vmatpush2.msra.mxu0 0.0
    %985 = vmatprep.subr.mxu0 0.0
    %986 = vmatpush2.msra.mxu0 0.0
    %987 = vmatprep.subr.mxu0 0.0
    %988 = vmatpush2.msra.mxu0 0.0
    %989 = vmatprep.subr.mxu0 0.0
    %990 = vmatpush2.msra.mxu0 0.0
    %991 = vmatprep.subr.mxu0 0.0
    %992 = vmatpush2.msra.mxu0 0.0
    %993 = vmatprep.subr.mxu0 0.0
    %994 = vmatpush2.msra.mxu0 0.0
    %995 = vmatprep.subr.mxu0 0.0
    %996 = vmatpush2.msra.mxu0 0.0
    %997 = vmatprep.subr.mxu0 0.0
    %998 = vmatpush2.msra.mxu0 0.0
    %999 = vmatprep.subr.mxu0 0.0
    %1000 = vmatpush2.msra.mxu0 0.0
    %1001 = vmatprep.mubr.f32.mxu0 0.0
    %1002 = vmatmul.mubr.f32.gmra.mxu0 %v784
    %v1003 = vpop.f32.mrf.mxu0
    %v1004 = vadd.f32 0.0, %v1003
    %v1005 = vpop.f32.mrf.mxu0
    %1006 = vdwg.mxu0
    %v1007 = vadd.f32 %v750, %v863
    %v1008 = vadd.f32 %v751, %v865
    %v1009 = vadd.f32 %v752, %v935
    %v1010 = vadd.f32 %v753, %v1004
    %v1011 = vld [vmem:[%s0] sm:$0x77]
    %v1012 = vld [vmem:[%s0 + $0x8] sm:$0x77]
    %v1013 = vld [vmem:[%s0 + $0x10] sm:$0x77]
    %s1014 = scalar_lea.vmem %s1, 32
    %v1015 = vld [vmem:[%s1014] sm:$0xff]
    %v1019 = vcombine.high %v1011, %v1011
    %v1020 = vcombine.high %v1012, %v1012
    %v1021 = vcombine.high %v1013, %v1013
    %1022 = vrot.lane.b32.xlu0 %v1011, 124
    %v1023 = vpop.permute.xlu0 %1022
    %1024 = vrot.lane.b32.xlu0 %v1019, 124
    %v1025 = vpop.permute.xlu0 %1024
    %1026 = vrot.lane.b32.xlu0 %v1012, 124
    %v1027 = vpop.permute.xlu0 %1026
    %1028 = vrot.lane.b32.xlu0 %v1020, 124
    %v1029 = vpop.permute.xlu0 %1028
    %1030 = vrot.lane.b32.xlu0 %v1013, 124
    %v1031 = vpop.permute.xlu0 %1030
    %1032 = vrot.lane.b32.xlu0 %v1021, 124
    %v1033 = vpop.permute.xlu0 %1032
    %vm1034 = vcmask 1014784
    %v1035 = vsel %vm1034, %v1023, %v1025
    %v1036 = vsel %vm1034, %v1025, %v1027
    %v1037 = vsel %vm1034, %v1027, %v1029
    %v1038 = vsel %vm1034, %v1029, %v1031
    %v1039 = vsel %vm1034, %v1031, %v1033
    %v1041 = vsel %vm46, %v1015, 0
    %v1043 = vsel %vm50, %v1035, 0
    %v1045 = vsel %vm50, %v1036, 0
    %v1047 = vsel %vm50, %v1037, 0
    %v1049 = vsel %vm50, %v1038, 0
    %v1051 = vsel %vm50, %v1039, 0
    %1053 = vmatprep.subr.mxu0 0.0
    %1054 = vmatpush1.msra.mxu0 0.0
    %1055 = vmatprep.subr.mxu0 0.0
    %1056 = vmatpush1.msra.mxu0 0.0
    %1057 = vmatprep.subr.mxu0 0.0
    %1058 = vmatpush1.msra.mxu0 0.0
    %1059 = vmatprep.subr.mxu0 0.0
    %1060 = vmatpush1.msra.mxu0 0.0
    %1061 = vmatprep.subr.mxu0 0.0
    %1062 = vmatpush1.msra.mxu0 0.0
    %1063 = vmatprep.subr.mxu0 0.0
    %1064 = vmatpush1.msra.mxu0 0.0
    %1065 = vmatprep.subr.mxu0 0.0
    %1066 = vmatpush1.msra.mxu0 0.0
    %1067 = vmatprep.subr.mxu0 0.0
    %1068 = vmatpush1.msra.mxu0 0.0
    %1069 = vmatprep.subr.mxu0 0.0
    %1070 = vmatpush1.msra.mxu0 0.0
    %1071 = vmatprep.subr.mxu0 0.0
    %1072 = vmatpush1.msra.mxu0 0.0
    %1073 = vmatprep.subr.mxu0 0.0
    %1074 = vmatpush1.msra.mxu0 0.0
    %1075 = vmatprep.subr.mxu0 0.0
    %1076 = vmatpush1.msra.mxu0 0.0
    %1077 = vmatprep.subr.mxu0 0.0
    %1078 = vmatpush1.msra.mxu0 0.0
    %1079 = vmatprep.subr.mxu0 0.0
    %1080 = vmatpush1.msra.mxu0 0.0
    %1081 = vmatprep.subr.mxu0 0.0
    %1082 = vmatpush1.msra.mxu0 0.0
    %1083 = vmatprep.subr.mxu0 %v1045
    %1084 = vmatpush1.msra.mxu0 %v1043
    %1085 = vmatprep.subr.mxu0 0.0
    %1086 = vmatpush2.msra.mxu0 0.0
    %1087 = vmatprep.subr.mxu0 0.0
    %1088 = vmatpush2.msra.mxu0 0.0
    %1089 = vmatprep.subr.mxu0 0.0
    %1090 = vmatpush2.msra.mxu0 0.0
    %1091 = vmatprep.subr.mxu0 0.0
    %1092 = vmatpush2.msra.mxu0 0.0
    %1093 = vmatprep.subr.mxu0 0.0
    %1094 = vmatpush2.msra.mxu0 0.0
    %1095 = vmatprep.subr.mxu0 0.0
    %1096 = vmatpush2.msra.mxu0 0.0
    %1097 = vmatprep.subr.mxu0 0.0
    %1098 = vmatpush2.msra.mxu0 0.0
    %1099 = vmatprep.subr.mxu0 0.0
    %1100 = vmatpush2.msra.mxu0 0.0
    %1101 = vmatprep.subr.mxu0 0.0
    %1102 = vmatpush2.msra.mxu0 0.0
    %1103 = vmatprep.subr.mxu0 0.0
    %1104 = vmatpush2.msra.mxu0 0.0
    %1105 = vmatprep.subr.mxu0 0.0
    %1106 = vmatpush2.msra.mxu0 0.0
    %1107 = vmatprep.subr.mxu0 0.0
    %1108 = vmatpush2.msra.mxu0 0.0
    %1109 = vmatprep.subr.mxu0 0.0
    %1110 = vmatpush2.msra.mxu0 0.0
    %1111 = vmatprep.subr.mxu0 0.0
    %1112 = vmatpush2.msra.mxu0 0.0
    %1113 = vmatprep.subr.mxu0 0.0
    %1114 = vmatpush2.msra.mxu0 0.0
    %1115 = vmatprep.subr.mxu0 0.0
    %1116 = vmatpush2.msra.mxu0 0.0
    %1117 = vmatprep.mubr.f32.mxu0 0.0
    %1118 = vmatmul.mubr.f32.gmra.mxu0 %v1041
    %v1119 = vpop.f32.mrf.mxu0
    %v1120 = vadd.f32 0.0, %v1119
    %v1121 = vpop.f32.mrf.mxu0
    %v1122 = vadd.f32 0.0, %v1121
    %1123 = vdwg.mxu0
    %1124 = vmatprep.subr.mxu0 0.0
    %1125 = vmatpush1.msra.mxu0 0.0
    %1126 = vmatprep.subr.mxu0 0.0
    %1127 = vmatpush1.msra.mxu0 0.0
    %1128 = vmatprep.subr.mxu0 0.0
    %1129 = vmatpush1.msra.mxu0 0.0
    %1130 = vmatprep.subr.mxu0 0.0
    %1131 = vmatpush1.msra.mxu0 0.0
    %1132 = vmatprep.subr.mxu0 0.0
    %1133 = vmatpush1.msra.mxu0 0.0
    %1134 = vmatprep.subr.mxu0 0.0
    %1135 = vmatpush1.msra.mxu0 0.0
    %1136 = vmatprep.subr.mxu0 0.0
    %1137 = vmatpush1.msra.mxu0 0.0
    %1138 = vmatprep.subr.mxu0 0.0
    %1139 = vmatpush1.msra.mxu0 0.0
    %1140 = vmatprep.subr.mxu0 0.0
    %1141 = vmatpush1.msra.mxu0 0.0
    %1142 = vmatprep.subr.mxu0 0.0
    %1143 = vmatpush1.msra.mxu0 0.0
    %1144 = vmatprep.subr.mxu0 0.0
    %1145 = vmatpush1.msra.mxu0 0.0
    %1146 = vmatprep.subr.mxu0 0.0
    %1147 = vmatpush1.msra.mxu0 0.0
    %1148 = vmatprep.subr.mxu0 0.0
    %1149 = vmatpush1.msra.mxu0 0.0
    %1150 = vmatprep.subr.mxu0 0.0
    %1151 = vmatpush1.msra.mxu0 0.0
    %1152 = vmatprep.subr.mxu0 0.0
    %1153 = vmatpush1.msra.mxu0 0.0
    %1154 = vmatprep.subr.mxu0 %v1049
    %1155 = vmatpush1.msra.mxu0 %v1047
    %1156 = vmatprep.subr.mxu0 0.0
    %1157 = vmatpush2.msra.mxu0 0.0
    %1158 = vmatprep.subr.mxu0 0.0
    %1159 = vmatpush2.msra.mxu0 0.0
    %1160 = vmatprep.subr.mxu0 0.0
    %1161 = vmatpush2.msra.mxu0 0.0
    %1162 = vmatprep.subr.mxu0 0.0
    %1163 = vmatpush2.msra.mxu0 0.0
    %1164 = vmatprep.subr.mxu0 0.0
    %1165 = vmatpush2.msra.mxu0 0.0
    %1166 = vmatprep.subr.mxu0 0.0
    %1167 = vmatpush2.msra.mxu0 0.0
    %1168 = vmatprep.subr.mxu0 0.0
    %1169 = vmatpush2.msra.mxu0 0.0
    %1170 = vmatprep.subr.mxu0 0.0
    %1171 = vmatpush2.msra.mxu0 0.0
    %1172 = vmatprep.subr.mxu0 0.0
    %1173 = vmatpush2.msra.mxu0 0.0
    %1174 = vmatprep.subr.mxu0 0.0
    %1175 = vmatpush2.msra.mxu0 0.0
    %1176 = vmatprep.subr.mxu0 0.0
    %1177 = vmatpush2.msra.mxu0 0.0
    %1178 = vmatprep.subr.mxu0 0.0
    %1179 = vmatpush2.msra.mxu0 0.0
    %1180 = vmatprep.subr.mxu0 0.0
    %1181 = vmatpush2.msra.mxu0 0.0
    %1182 = vmatprep.subr.mxu0 0.0
    %1183 = vmatpush2.msra.mxu0 0.0
    %1184 = vmatprep.subr.mxu0 0.0
    %1185 = vmatpush2.msra.mxu0 0.0
    %1186 = vmatprep.subr.mxu0 0.0
    %1187 = vmatpush2.msra.mxu0 0.0
    %1188 = vmatprep.mubr.f32.mxu0 0.0
    %1189 = vmatmul.mubr.f32.gmra.mxu0 %v1041
    %v1190 = vpop.f32.mrf.mxu0
    %v1191 = vpop.f32.mrf.mxu0
    %v1192 = vadd.f32 0.0, %v1191
    %1193 = vdwg.mxu0
    %1194 = vmatprep.subr.mxu0 0.0
    %1195 = vmatpush1.msra.mxu0 0.0
    %1196 = vmatprep.subr.mxu0 0.0
    %1197 = vmatpush1.msra.mxu0 0.0
    %1198 = vmatprep.subr.mxu0 0.0
    %1199 = vmatpush1.msra.mxu0 0.0
    %1200 = vmatprep.subr.mxu0 0.0
    %1201 = vmatpush1.msra.mxu0 0.0
    %1202 = vmatprep.subr.mxu0 0.0
    %1203 = vmatpush1.msra.mxu0 0.0
    %1204 = vmatprep.subr.mxu0 0.0
    %1205 = vmatpush1.msra.mxu0 0.0
    %1206 = vmatprep.subr.mxu0 0.0
    %1207 = vmatpush1.msra.mxu0 0.0
    %1208 = vmatprep.subr.mxu0 0.0
    %1209 = vmatpush1.msra.mxu0 0.0
    %1210 = vmatprep.subr.mxu0 0.0
    %1211 = vmatpush1.msra.mxu0 0.0
    %1212 = vmatprep.subr.mxu0 0.0
    %1213 = vmatpush1.msra.mxu0 0.0
    %1214 = vmatprep.subr.mxu0 0.0
    %1215 = vmatpush1.msra.mxu0 0.0
    %1216 = vmatprep.subr.mxu0 0.0
    %1217 = vmatpush1.msra.mxu0 0.0
    %1218 = vmatprep.subr.mxu0 0.0
    %1219 = vmatpush1.msra.mxu0 0.0
    %1220 = vmatprep.subr.mxu0 0.0
    %1221 = vmatpush1.msra.mxu0 0.0
    %1222 = vmatprep.subr.mxu0 0.0
    %1223 = vmatpush1.msra.mxu0 0.0
    %1224 = vmatprep.subr.mxu0 0.0
    %1225 = vmatpush1.msra.mxu0 %v1051
    %1226 = vmatprep.subr.mxu0 0.0
    %1227 = vmatpush2.msra.mxu0 0.0
    %1228 = vmatprep.subr.mxu0 0.0
    %1229 = vmatpush2.msra.mxu0 0.0
    %1230 = vmatprep.subr.mxu0 0.0
    %1231 = vmatpush2.msra.mxu0 0.0
    %1232 = vmatprep.subr.mxu0 0.0
    %1233 = vmatpush2.msra.mxu0 0.0
    %1234 = vmatprep.subr.mxu0 0.0
    %1235 = vmatpush2.msra.mxu0 0.0
    %1236 = vmatprep.subr.mxu0 0.0
    %1237 = vmatpush2.msra.mxu0 0.0
    %1238 = vmatprep.subr.mxu0 0.0
    %1239 = vmatpush2.msra.mxu0 0.0
    %1240 = vmatprep.subr.mxu0 0.0
    %1241 = vmatpush2.msra.mxu0 0.0
    %1242 = vmatprep.subr.mxu0 0.0
    %1243 = vmatpush2.msra.mxu0 0.0
    %1244 = vmatprep.subr.mxu0 0.0
    %1245 = vmatpush2.msra.mxu0 0.0
    %1246 = vmatprep.subr.mxu0 0.0
    %1247 = vmatpush2.msra.mxu0 0.0
    %1248 = vmatprep.subr.mxu0 0.0
    %1249 = vmatpush2.msra.mxu0 0.0
    %1250 = vmatprep.subr.mxu0 0.0
    %1251 = vmatpush2.msra.mxu0 0.0
    %1252 = vmatprep.subr.mxu0 0.0
    %1253 = vmatpush2.msra.mxu0 0.0
    %1254 = vmatprep.subr.mxu0 0.0
    %1255 = vmatpush2.msra.mxu0 0.0
    %1256 = vmatprep.subr.mxu0 0.0
    %1257 = vmatpush2.msra.mxu0 0.0
    %1258 = vmatprep.mubr.f32.mxu0 0.0
    %1259 = vmatmul.mubr.f32.gmra.mxu0 %v1041
    %v1260 = vpop.f32.mrf.mxu0
    %v1261 = vadd.f32 0.0, %v1260
    %v1262 = vpop.f32.mrf.mxu0
    %1263 = vdwg.mxu0
    %v1264 = vadd.f32 %v1007, %v1120
    %v1265 = vadd.f32 %v1008, %v1122
    %v1266 = vadd.f32 %v1009, %v1192
    %v1267 = vadd.f32 %v1010, %v1261
    %v1268 = vld [vmem:[%s0] sm:$0x77]
    %v1269 = vld [vmem:[%s0 + $0x8] sm:$0x77]
    %v1270 = vld [vmem:[%s0 + $0x10] sm:$0x77]
    %s1271 = scalar_lea.vmem %s1, 40
    %v1272 = vld [vmem:[%s1271] sm:$0xff]
    %v1276 = vcombine.high %v1268, %v1268
    %v1277 = vcombine.high %v1269, %v1269
    %v1278 = vcombine.high %v1270, %v1270
    %1279 = vrot.lane.b32.xlu0 %v1268, 112
    %v1280 = vpop.permute.xlu0 %1279
    %1281 = vrot.lane.b32.xlu0 %v1276, 112
    %v1282 = vpop.permute.xlu0 %1281
    %1283 = vrot.lane.b32.xlu0 %v1269, 112
    %v1284 = vpop.permute.xlu0 %1283
    %1285 = vrot.lane.b32.xlu0 %v1277, 112
    %v1286 = vpop.permute.xlu0 %1285
    %1287 = vrot.lane.b32.xlu0 %v1270, 112
    %v1288 = vpop.permute.xlu0 %1287
    %1289 = vrot.lane.b32.xlu0 %v1278, 112
    %v1290 = vpop.permute.xlu0 %1289
    %vm1291 = vcmask 916480
    %v1292 = vsel %vm1291, %v1280, %v1282
    %v1293 = vsel %vm1291, %v1282, %v1284
    %v1294 = vsel %vm1291, %v1284, %v1286
    %v1295 = vsel %vm1291, %v1286, %v1288
    %v1296 = vsel %vm1291, %v1288, %v1290
    %v1298 = vsel %vm46, %v1272, 0
    %v1300 = vsel %vm50, %v1292, 0
    %v1302 = vsel %vm50, %v1293, 0
    %v1304 = vsel %vm50, %v1294, 0
    %v1306 = vsel %vm50, %v1295, 0
    %v1308 = vsel %vm50, %v1296, 0
    %1310 = vmatprep.subr.mxu0 0.0
    %1311 = vmatpush1.msra.mxu0 0.0
    %1312 = vmatprep.subr.mxu0 0.0
    %1313 = vmatpush1.msra.mxu0 0.0
    %1314 = vmatprep.subr.mxu0 0.0
    %1315 = vmatpush1.msra.mxu0 0.0
    %1316 = vmatprep.subr.mxu0 0.0
    %1317 = vmatpush1.msra.mxu0 0.0
    %1318 = vmatprep.subr.mxu0 0.0
    %1319 = vmatpush1.msra.mxu0 0.0
    %1320 = vmatprep.subr.mxu0 0.0
    %1321 = vmatpush1.msra.mxu0 0.0
    %1322 = vmatprep.subr.mxu0 0.0
    %1323 = vmatpush1.msra.mxu0 0.0
    %1324 = vmatprep.subr.mxu0 0.0
    %1325 = vmatpush1.msra.mxu0 0.0
    %1326 = vmatprep.subr.mxu0 0.0
    %1327 = vmatpush1.msra.mxu0 0.0
    %1328 = vmatprep.subr.mxu0 0.0
    %1329 = vmatpush1.msra.mxu0 0.0
    %1330 = vmatprep.subr.mxu0 0.0
    %1331 = vmatpush1.msra.mxu0 0.0
    %1332 = vmatprep.subr.mxu0 0.0
    %1333 = vmatpush1.msra.mxu0 0.0
    %1334 = vmatprep.subr.mxu0 0.0
    %1335 = vmatpush1.msra.mxu0 0.0
    %1336 = vmatprep.subr.mxu0 0.0
    %1337 = vmatpush1.msra.mxu0 0.0
    %1338 = vmatprep.subr.mxu0 0.0
    %1339 = vmatpush1.msra.mxu0 0.0
    %1340 = vmatprep.subr.mxu0 %v1302
    %1341 = vmatpush1.msra.mxu0 %v1300
    %1342 = vmatprep.subr.mxu0 0.0
    %1343 = vmatpush2.msra.mxu0 0.0
    %1344 = vmatprep.subr.mxu0 0.0
    %1345 = vmatpush2.msra.mxu0 0.0
    %1346 = vmatprep.subr.mxu0 0.0
    %1347 = vmatpush2.msra.mxu0 0.0
    %1348 = vmatprep.subr.mxu0 0.0
    %1349 = vmatpush2.msra.mxu0 0.0
    %1350 = vmatprep.subr.mxu0 0.0
    %1351 = vmatpush2.msra.mxu0 0.0
    %1352 = vmatprep.subr.mxu0 0.0
    %1353 = vmatpush2.msra.mxu0 0.0
    %1354 = vmatprep.subr.mxu0 0.0
    %1355 = vmatpush2.msra.mxu0 0.0
    %1356 = vmatprep.subr.mxu0 0.0
    %1357 = vmatpush2.msra.mxu0 0.0
    %1358 = vmatprep.subr.mxu0 0.0
    %1359 = vmatpush2.msra.mxu0 0.0
    %1360 = vmatprep.subr.mxu0 0.0
    %1361 = vmatpush2.msra.mxu0 0.0
    %1362 = vmatprep.subr.mxu0 0.0
    %1363 = vmatpush2.msra.mxu0 0.0
    %1364 = vmatprep.subr.mxu0 0.0
    %1365 = vmatpush2.msra.mxu0 0.0
    %1366 = vmatprep.subr.mxu0 0.0
    %1367 = vmatpush2.msra.mxu0 0.0
    %1368 = vmatprep.subr.mxu0 0.0
    %1369 = vmatpush2.msra.mxu0 0.0
    %1370 = vmatprep.subr.mxu0 0.0
    %1371 = vmatpush2.msra.mxu0 0.0
    %1372 = vmatprep.subr.mxu0 0.0
    %1373 = vmatpush2.msra.mxu0 0.0
    %1374 = vmatprep.mubr.f32.mxu0 0.0
    %1375 = vmatmul.mubr.f32.gmra.mxu0 %v1298
    %v1376 = vpop.f32.mrf.mxu0
    %v1377 = vadd.f32 0.0, %v1376
    %v1378 = vpop.f32.mrf.mxu0
    %v1379 = vadd.f32 0.0, %v1378
    %1380 = vdwg.mxu0
    %1381 = vmatprep.subr.mxu0 0.0
    %1382 = vmatpush1.msra.mxu0 0.0
    %1383 = vmatprep.subr.mxu0 0.0
    %1384 = vmatpush1.msra.mxu0 0.0
    %1385 = vmatprep.subr.mxu0 0.0
    %1386 = vmatpush1.msra.mxu0 0.0
    %1387 = vmatprep.subr.mxu0 0.0
    %1388 = vmatpush1.msra.mxu0 0.0
    %1389 = vmatprep.subr.mxu0 0.0
    %1390 = vmatpush1.msra.mxu0 0.0
    %1391 = vmatprep.subr.mxu0 0.0
    %1392 = vmatpush1.msra.mxu0 0.0
    %1393 = vmatprep.subr.mxu0 0.0
    %1394 = vmatpush1.msra.mxu0 0.0
    %1395 = vmatprep.subr.mxu0 0.0
    %1396 = vmatpush1.msra.mxu0 0.0
    %1397 = vmatprep.subr.mxu0 0.0
    %1398 = vmatpush1.msra.mxu0 0.0
    %1399 = vmatprep.subr.mxu0 0.0
    %1400 = vmatpush1.msra.mxu0 0.0
    %1401 = vmatprep.subr.mxu0 0.0
    %1402 = vmatpush1.msra.mxu0 0.0
    %1403 = vmatprep.subr.mxu0 0.0
    %1404 = vmatpush1.msra.mxu0 0.0
    %1405 = vmatprep.subr.mxu0 0.0
    %1406 = vmatpush1.msra.mxu0 0.0
    %1407 = vmatprep.subr.mxu0 0.0
    %1408 = vmatpush1.msra.mxu0 0.0
    %1409 = vmatprep.subr.mxu0 0.0
    %1410 = vmatpush1.msra.mxu0 0.0
    %1411 = vmatprep.subr.mxu0 %v1306
    %1412 = vmatpush1.msra.mxu0 %v1304
    %1413 = vmatprep.subr.mxu0 0.0
    %1414 = vmatpush2.msra.mxu0 0.0
    %1415 = vmatprep.subr.mxu0 0.0
    %1416 = vmatpush2.msra.mxu0 0.0
    %1417 = vmatprep.subr.mxu0 0.0
    %1418 = vmatpush2.msra.mxu0 0.0
    %1419 = vmatprep.subr.mxu0 0.0
    %1420 = vmatpush2.msra.mxu0 0.0
    %1421 = vmatprep.subr.mxu0 0.0
    %1422 = vmatpush2.msra.mxu0 0.0
    %1423 = vmatprep.subr.mxu0 0.0
    %1424 = vmatpush2.msra.mxu0 0.0
    %1425 = vmatprep.subr.mxu0 0.0
    %1426 = vmatpush2.msra.mxu0 0.0
    %1427 = vmatprep.subr.mxu0 0.0
    %1428 = vmatpush2.msra.mxu0 0.0
    %1429 = vmatprep.subr.mxu0 0.0
    %1430 = vmatpush2.msra.mxu0 0.0
    %1431 = vmatprep.subr.mxu0 0.0
    %1432 = vmatpush2.msra.mxu0 0.0
    %1433 = vmatprep.subr.mxu0 0.0
    %1434 = vmatpush2.msra.mxu0 0.0
    %1435 = vmatprep.subr.mxu0 0.0
    %1436 = vmatpush2.msra.mxu0 0.0
    %1437 = vmatprep.subr.mxu0 0.0
    %1438 = vmatpush2.msra.mxu0 0.0
    %1439 = vmatprep.subr.mxu0 0.0
    %1440 = vmatpush2.msra.mxu0 0.0
    %1441 = vmatprep.subr.mxu0 0.0
    %1442 = vmatpush2.msra.mxu0 0.0
    %1443 = vmatprep.subr.mxu0 0.0
    %1444 = vmatpush2.msra.mxu0 0.0
    %1445 = vmatprep.mubr.f32.mxu0 0.0
    %1446 = vmatmul.mubr.f32.gmra.mxu0 %v1298
    %v1447 = vpop.f32.mrf.mxu0
    %v1448 = vpop.f32.mrf.mxu0
    %v1449 = vadd.f32 0.0, %v1448
    %1450 = vdwg.mxu0
    %1451 = vmatprep.subr.mxu0 0.0
    %1452 = vmatpush1.msra.mxu0 0.0
    %1453 = vmatprep.subr.mxu0 0.0
    %1454 = vmatpush1.msra.mxu0 0.0
    %1455 = vmatprep.subr.mxu0 0.0
    %1456 = vmatpush1.msra.mxu0 0.0
    %1457 = vmatprep.subr.mxu0 0.0
    %1458 = vmatpush1.msra.mxu0 0.0
    %1459 = vmatprep.subr.mxu0 0.0
    %1460 = vmatpush1.msra.mxu0 0.0
    %1461 = vmatprep.subr.mxu0 0.0
    %1462 = vmatpush1.msra.mxu0 0.0
    %1463 = vmatprep.subr.mxu0 0.0
    %1464 = vmatpush1.msra.mxu0 0.0
    %1465 = vmatprep.subr.mxu0 0.0
    %1466 = vmatpush1.msra.mxu0 0.0
    %1467 = vmatprep.subr.mxu0 0.0
    %1468 = vmatpush1.msra.mxu0 0.0
    %1469 = vmatprep.subr.mxu0 0.0
    %1470 = vmatpush1.msra.mxu0 0.0
    %1471 = vmatprep.subr.mxu0 0.0
    %1472 = vmatpush1.msra.mxu0 0.0
    %1473 = vmatprep.subr.mxu0 0.0
    %1474 = vmatpush1.msra.mxu0 0.0
    %1475 = vmatprep.subr.mxu0 0.0
    %1476 = vmatpush1.msra.mxu0 0.0
    %1477 = vmatprep.subr.mxu0 0.0
    %1478 = vmatpush1.msra.mxu0 0.0
    %1479 = vmatprep.subr.mxu0 0.0
    %1480 = vmatpush1.msra.mxu0 0.0
    %1481 = vmatprep.subr.mxu0 0.0
    %1482 = vmatpush1.msra.mxu0 %v1308
    %1483 = vmatprep.subr.mxu0 0.0
    %1484 = vmatpush2.msra.mxu0 0.0
    %1485 = vmatprep.subr.mxu0 0.0
    %1486 = vmatpush2.msra.mxu0 0.0
    %1487 = vmatprep.subr.mxu0 0.0
    %1488 = vmatpush2.msra.mxu0 0.0
    %1489 = vmatprep.subr.mxu0 0.0
    %1490 = vmatpush2.msra.mxu0 0.0
    %1491 = vmatprep.subr.mxu0 0.0
    %1492 = vmatpush2.msra.mxu0 0.0
    %1493 = vmatprep.subr.mxu0 0.0
    %1494 = vmatpush2.msra.mxu0 0.0
    %1495 = vmatprep.subr.mxu0 0.0
    %1496 = vmatpush2.msra.mxu0 0.0
    %1497 = vmatprep.subr.mxu0 0.0
    %1498 = vmatpush2.msra.mxu0 0.0
    %1499 = vmatprep.subr.mxu0 0.0
    %1500 = vmatpush2.msra.mxu0 0.0
    %1501 = vmatprep.subr.mxu0 0.0
    %1502 = vmatpush2.msra.mxu0 0.0
    %1503 = vmatprep.subr.mxu0 0.0
    %1504 = vmatpush2.msra.mxu0 0.0
    %1505 = vmatprep.subr.mxu0 0.0
    %1506 = vmatpush2.msra.mxu0 0.0
    %1507 = vmatprep.subr.mxu0 0.0
    %1508 = vmatpush2.msra.mxu0 0.0
    %1509 = vmatprep.subr.mxu0 0.0
    %1510 = vmatpush2.msra.mxu0 0.0
    %1511 = vmatprep.subr.mxu0 0.0
    %1512 = vmatpush2.msra.mxu0 0.0
    %1513 = vmatprep.subr.mxu0 0.0
    %1514 = vmatpush2.msra.mxu0 0.0
    %1515 = vmatprep.mubr.f32.mxu0 0.0
    %1516 = vmatmul.mubr.f32.gmra.mxu0 %v1298
    %v1517 = vpop.f32.mrf.mxu0
    %v1518 = vadd.f32 0.0, %v1517
    %v1519 = vpop.f32.mrf.mxu0
    %1520 = vdwg.mxu0
    %v1521 = vadd.f32 %v1264, %v1377
    %v1522 = vadd.f32 %v1265, %v1379
    %v1523 = vadd.f32 %v1266, %v1449
    %v1524 = vadd.f32 %v1267, %v1518
    %v1525 = vld [vmem:[%s0] sm:$0x77]
    %v1526 = vld [vmem:[%s0 + $0x8] sm:$0x77]
    %v1527 = vld [vmem:[%s0 + $0x10] sm:$0x77]
    %s1528 = scalar_lea.vmem %s1, 48
    %v1529 = vld [vmem:[%s1528] sm:$0xff]
    %v1533 = vcombine.high %v1525, %v1525
    %v1534 = vcombine.high %v1526, %v1526
    %v1535 = vcombine.high %v1527, %v1527
    %1536 = vrot.lane.b32.xlu0 %v1525, 111
    %v1537 = vpop.permute.xlu0 %1536
    %1538 = vrot.lane.b32.xlu0 %v1533, 111
    %v1539 = vpop.permute.xlu0 %1538
    %1540 = vrot.lane.b32.xlu0 %v1526, 111
    %v1541 = vpop.permute.xlu0 %1540
    %1542 = vrot.lane.b32.xlu0 %v1534, 111
    %v1543 = vpop.permute.xlu0 %1542
    %1544 = vrot.lane.b32.xlu0 %v1527, 111
    %v1545 = vpop.permute.xlu0 %1544
    %1546 = vrot.lane.b32.xlu0 %v1535, 111
    %v1547 = vpop.permute.xlu0 %1546
    %vm1548 = vcmask 908288
    %v1549 = vsel %vm1548, %v1537, %v1539
    %v1550 = vsel %vm1548, %v1539, %v1541
    %v1551 = vsel %vm1548, %v1541, %v1543
    %v1552 = vsel %vm1548, %v1543, %v1545
    %v1553 = vsel %vm1548, %v1545, %v1547
    %v1555 = vsel %vm46, %v1529, 0
    %v1557 = vsel %vm50, %v1549, 0
    %v1559 = vsel %vm50, %v1550, 0
    %v1561 = vsel %vm50, %v1551, 0
    %v1563 = vsel %vm50, %v1552, 0
    %v1565 = vsel %vm50, %v1553, 0
    %1567 = vmatprep.subr.mxu0 0.0
    %1568 = vmatpush1.msra.mxu0 0.0
    %1569 = vmatprep.subr.mxu0 0.0
    %1570 = vmatpush1.msra.mxu0 0.0
    %1571 = vmatprep.subr.mxu0 0.0
    %1572 = vmatpush1.msra.mxu0 0.0
    %1573 = vmatprep.subr.mxu0 0.0
    %1574 = vmatpush1.msra.mxu0 0.0
    %1575 = vmatprep.subr.mxu0 0.0
    %1576 = vmatpush1.msra.mxu0 0.0
    %1577 = vmatprep.subr.mxu0 0.0
    %1578 = vmatpush1.msra.mxu0 0.0
    %1579 = vmatprep.subr.mxu0 0.0
    %1580 = vmatpush1.msra.mxu0 0.0
    %1581 = vmatprep.subr.mxu0 0.0
    %1582 = vmatpush1.msra.mxu0 0.0
    %1583 = vmatprep.subr.mxu0 0.0
    %1584 = vmatpush1.msra.mxu0 0.0
    %1585 = vmatprep.subr.mxu0 0.0
    %1586 = vmatpush1.msra.mxu0 0.0
    %1587 = vmatprep.subr.mxu0 0.0
    %1588 = vmatpush1.msra.mxu0 0.0
    %1589 = vmatprep.subr.mxu0 0.0
    %1590 = vmatpush1.msra.mxu0 0.0
    %1591 = vmatprep.subr.mxu0 0.0
    %1592 = vmatpush1.msra.mxu0 0.0
    %1593 = vmatprep.subr.mxu0 0.0
    %1594 = vmatpush1.msra.mxu0 0.0
    %1595 = vmatprep.subr.mxu0 0.0
    %1596 = vmatpush1.msra.mxu0 0.0
    %1597 = vmatprep.subr.mxu0 %v1559
    %1598 = vmatpush1.msra.mxu0 %v1557
    %1599 = vmatprep.subr.mxu0 0.0
    %1600 = vmatpush2.msra.mxu0 0.0
    %1601 = vmatprep.subr.mxu0 0.0
    %1602 = vmatpush2.msra.mxu0 0.0
    %1603 = vmatprep.subr.mxu0 0.0
    %1604 = vmatpush2.msra.mxu0 0.0
    %1605 = vmatprep.subr.mxu0 0.0
    %1606 = vmatpush2.msra.mxu0 0.0
    %1607 = vmatprep.subr.mxu0 0.0
    %1608 = vmatpush2.msra.mxu0 0.0
    %1609 = vmatprep.subr.mxu0 0.0
    %1610 = vmatpush2.msra.mxu0 0.0
    %1611 = vmatprep.subr.mxu0 0.0
    %1612 = vmatpush2.msra.mxu0 0.0
    %1613 = vmatprep.subr.mxu0 0.0
    %1614 = vmatpush2.msra.mxu0 0.0
    %1615 = vmatprep.subr.mxu0 0.0
    %1616 = vmatpush2.msra.mxu0 0.0
    %1617 = vmatprep.subr.mxu0 0.0
    %1618 = vmatpush2.msra.mxu0 0.0
    %1619 = vmatprep.subr.mxu0 0.0
    %1620 = vmatpush2.msra.mxu0 0.0
    %1621 = vmatprep.subr.mxu0 0.0
    %1622 = vmatpush2.msra.mxu0 0.0
    %1623 = vmatprep.subr.mxu0 0.0
    %1624 = vmatpush2.msra.mxu0 0.0
    %1625 = vmatprep.subr.mxu0 0.0
    %1626 = vmatpush2.msra.mxu0 0.0
    %1627 = vmatprep.subr.mxu0 0.0
    %1628 = vmatpush2.msra.mxu0 0.0
    %1629 = vmatprep.subr.mxu0 0.0
    %1630 = vmatpush2.msra.mxu0 0.0
    %1631 = vmatprep.mubr.f32.mxu0 0.0
    %1632 = vmatmul.mubr.f32.gmra.mxu0 %v1555
    %v1633 = vpop.f32.mrf.mxu0
    %v1634 = vadd.f32 0.0, %v1633
    %v1635 = vpop.f32.mrf.mxu0
    %v1636 = vadd.f32 0.0, %v1635
    %1637 = vdwg.mxu0
    %1638 = vmatprep.subr.mxu0 0.0
    %1639 = vmatpush1.msra.mxu0 0.0
    %1640 = vmatprep.subr.mxu0 0.0
    %1641 = vmatpush1.msra.mxu0 0.0
    %1642 = vmatprep.subr.mxu0 0.0
    %1643 = vmatpush1.msra.mxu0 0.0
    %1644 = vmatprep.subr.mxu0 0.0
    %1645 = vmatpush1.msra.mxu0 0.0
    %1646 = vmatprep.subr.mxu0 0.0
    %1647 = vmatpush1.msra.mxu0 0.0
    %1648 = vmatprep.subr.mxu0 0.0
    %1649 = vmatpush1.msra.mxu0 0.0
    %1650 = vmatprep.subr.mxu0 0.0
    %1651 = vmatpush1.msra.mxu0 0.0
    %1652 = vmatprep.subr.mxu0 0.0
    %1653 = vmatpush1.msra.mxu0 0.0
    %1654 = vmatprep.subr.mxu0 0.0
    %1655 = vmatpush1.msra.mxu0 0.0
    %1656 = vmatprep.subr.mxu0 0.0
    %1657 = vmatpush1.msra.mxu0 0.0
    %1658 = vmatprep.subr.mxu0 0.0
    %1659 = vmatpush1.msra.mxu0 0.0
    %1660 = vmatprep.subr.mxu0 0.0
    %1661 = vmatpush1.msra.mxu0 0.0
    %1662 = vmatprep.subr.mxu0 0.0
    %1663 = vmatpush1.msra.mxu0 0.0
    %1664 = vmatprep.subr.mxu0 0.0
    %1665 = vmatpush1.msra.mxu0 0.0
    %1666 = vmatprep.subr.mxu0 0.0
    %1667 = vmatpush1.msra.mxu0 0.0
    %1668 = vmatprep.subr.mxu0 %v1563
    %1669 = vmatpush1.msra.mxu0 %v1561
    %1670 = vmatprep.subr.mxu0 0.0
    %1671 = vmatpush2.msra.mxu0 0.0
    %1672 = vmatprep.subr.mxu0 0.0
    %1673 = vmatpush2.msra.mxu0 0.0
    %1674 = vmatprep.subr.mxu0 0.0
    %1675 = vmatpush2.msra.mxu0 0.0
    %1676 = vmatprep.subr.mxu0 0.0
    %1677 = vmatpush2.msra.mxu0 0.0
    %1678 = vmatprep.subr.mxu0 0.0
    %1679 = vmatpush2.msra.mxu0 0.0
    %1680 = vmatprep.subr.mxu0 0.0
    %1681 = vmatpush2.msra.mxu0 0.0
    %1682 = vmatprep.subr.mxu0 0.0
    %1683 = vmatpush2.msra.mxu0 0.0
    %1684 = vmatprep.subr.mxu0 0.0
    %1685 = vmatpush2.msra.mxu0 0.0
    %1686 = vmatprep.subr.mxu0 0.0
    %1687 = vmatpush2.msra.mxu0 0.0
    %1688 = vmatprep.subr.mxu0 0.0
    %1689 = vmatpush2.msra.mxu0 0.0
    %1690 = vmatprep.subr.mxu0 0.0
    %1691 = vmatpush2.msra.mxu0 0.0
    %1692 = vmatprep.subr.mxu0 0.0
    %1693 = vmatpush2.msra.mxu0 0.0
    %1694 = vmatprep.subr.mxu0 0.0
    %1695 = vmatpush2.msra.mxu0 0.0
    %1696 = vmatprep.subr.mxu0 0.0
    %1697 = vmatpush2.msra.mxu0 0.0
    %1698 = vmatprep.subr.mxu0 0.0
    %1699 = vmatpush2.msra.mxu0 0.0
    %1700 = vmatprep.subr.mxu0 0.0
    %1701 = vmatpush2.msra.mxu0 0.0
    %1702 = vmatprep.mubr.f32.mxu0 0.0
    %1703 = vmatmul.mubr.f32.gmra.mxu0 %v1555
    %v1704 = vpop.f32.mrf.mxu0
    %v1705 = vpop.f32.mrf.mxu0
    %v1706 = vadd.f32 0.0, %v1705
    %1707 = vdwg.mxu0
    %1708 = vmatprep.subr.mxu0 0.0
    %1709 = vmatpush1.msra.mxu0 0.0
    %1710 = vmatprep.subr.mxu0 0.0
    %1711 = vmatpush1.msra.mxu0 0.0
    %1712 = vmatprep.subr.mxu0 0.0
    %1713 = vmatpush1.msra.mxu0 0.0
    %1714 = vmatprep.subr.mxu0 0.0
    %1715 = vmatpush1.msra.mxu0 0.0
    %1716 = vmatprep.subr.mxu0 0.0
    %1717 = vmatpush1.msra.mxu0 0.0
    %1718 = vmatprep.subr.mxu0 0.0
    %1719 = vmatpush1.msra.mxu0 0.0
    %1720 = vmatprep.subr.mxu0 0.0
    %1721 = vmatpush1.msra.mxu0 0.0
    %1722 = vmatprep.subr.mxu0 0.0
    %1723 = vmatpush1.msra.mxu0 0.0
    %1724 = vmatprep.subr.mxu0 0.0
    %1725 = vmatpush1.msra.mxu0 0.0
    %1726 = vmatprep.subr.mxu0 0.0
    %1727 = vmatpush1.msra.mxu0 0.0
    %1728 = vmatprep.subr.mxu0 0.0
    %1729 = vmatpush1.msra.mxu0 0.0
    %1730 = vmatprep.subr.mxu0 0.0
    %1731 = vmatpush1.msra.mxu0 0.0
    %1732 = vmatprep.subr.mxu0 0.0
    %1733 = vmatpush1.msra.mxu0 0.0
    %1734 = vmatprep.subr.mxu0 0.0
    %1735 = vmatpush1.msra.mxu0 0.0
    %1736 = vmatprep.subr.mxu0 0.0
    %1737 = vmatpush1.msra.mxu0 0.0
    %1738 = vmatprep.subr.mxu0 0.0
    %1739 = vmatpush1.msra.mxu0 %v1565
    %1740 = vmatprep.subr.mxu0 0.0
    %1741 = vmatpush2.msra.mxu0 0.0
    %1742 = vmatprep.subr.mxu0 0.0
    %1743 = vmatpush2.msra.mxu0 0.0
    %1744 = vmatprep.subr.mxu0 0.0
    %1745 = vmatpush2.msra.mxu0 0.0
    %1746 = vmatprep.subr.mxu0 0.0
    %1747 = vmatpush2.msra.mxu0 0.0
    %1748 = vmatprep.subr.mxu0 0.0
    %1749 = vmatpush2.msra.mxu0 0.0
    %1750 = vmatprep.subr.mxu0 0.0
    %1751 = vmatpush2.msra.mxu0 0.0
    %1752 = vmatprep.subr.mxu0 0.0
    %1753 = vmatpush2.msra.mxu0 0.0
    %1754 = vmatprep.subr.mxu0 0.0
    %1755 = vmatpush2.msra.mxu0 0.0
    %1756 = vmatprep.subr.mxu0 0.0
    %1757 = vmatpush2.msra.mxu0 0.0
    %1758 = vmatprep.subr.mxu0 0.0
    %1759 = vmatpush2.msra.mxu0 0.0
    %1760 = vmatprep.subr.mxu0 0.0
    %1761 = vmatpush2.msra.mxu0 0.0
    %1762 = vmatprep.subr.mxu0 0.0
    %1763 = vmatpush2.msra.mxu0 0.0
    %1764 = vmatprep.subr.mxu0 0.0
    %1765 = vmatpush2.msra.mxu0 0.0
    %1766 = vmatprep.subr.mxu0 0.0
    %1767 = vmatpush2.msra.mxu0 0.0
    %1768 = vmatprep.subr.mxu0 0.0
    %1769 = vmatpush2.msra.mxu0 0.0
    %1770 = vmatprep.subr.mxu0 0.0
    %1771 = vmatpush2.msra.mxu0 0.0
    %1772 = vmatprep.mubr.f32.mxu0 0.0
    %1773 = vmatmul.mubr.f32.gmra.mxu0 %v1555
    %v1774 = vpop.f32.mrf.mxu0
    %v1775 = vadd.f32 0.0, %v1774
    %v1776 = vpop.f32.mrf.mxu0
    %1777 = vdwg.mxu0
    %v1778 = vadd.f32 %v1521, %v1634
    %v1779 = vadd.f32 %v1522, %v1636
    %v1780 = vadd.f32 %v1523, %v1706
    %v1781 = vadd.f32 %v1524, %v1775
    %v1782 = vld [vmem:[%s0] sm:$0x77]
    %v1783 = vld [vmem:[%s0 + $0x8] sm:$0x77]
    %v1784 = vld [vmem:[%s0 + $0x10] sm:$0x77]
    %s1785 = scalar_lea.vmem %s1, 56
    %v1786 = vld [vmem:[%s1785] sm:$0xff]
    %v1790 = vcombine.high %v1782, %v1782
    %v1791 = vcombine.high %v1783, %v1783
    %v1792 = vcombine.high %v1784, %v1784
    %1793 = vrot.lane.b32.xlu0 %v1782, 110
    %v1794 = vpop.permute.xlu0 %1793
    %1795 = vrot.lane.b32.xlu0 %v1790, 110
    %v1796 = vpop.permute.xlu0 %1795
    %1797 = vrot.lane.b32.xlu0 %v1783, 110
    %v1798 = vpop.permute.xlu0 %1797
    %1799 = vrot.lane.b32.xlu0 %v1791, 110
    %v1800 = vpop.permute.xlu0 %1799
    %1801 = vrot.lane.b32.xlu0 %v1784, 110
    %v1802 = vpop.permute.xlu0 %1801
    %1803 = vrot.lane.b32.xlu0 %v1792, 110
    %v1804 = vpop.permute.xlu0 %1803
    %vm1805 = vcmask 900096
    %v1806 = vsel %vm1805, %v1794, %v1796
    %v1807 = vsel %vm1805, %v1796, %v1798
    %v1808 = vsel %vm1805, %v1798, %v1800
    %v1809 = vsel %vm1805, %v1800, %v1802
    %v1810 = vsel %vm1805, %v1802, %v1804
    %v1812 = vsel %vm46, %v1786, 0
    %v1814 = vsel %vm50, %v1806, 0
    %v1816 = vsel %vm50, %v1807, 0
    %v1818 = vsel %vm50, %v1808, 0
    %v1820 = vsel %vm50, %v1809, 0
    %v1822 = vsel %vm50, %v1810, 0
    %1824 = vmatprep.subr.mxu0 0.0
    %1825 = vmatpush1.msra.mxu0 0.0
    %1826 = vmatprep.subr.mxu0 0.0
    %1827 = vmatpush1.msra.mxu0 0.0
    %1828 = vmatprep.subr.mxu0 0.0
    %1829 = vmatpush1.msra.mxu0 0.0
    %1830 = vmatprep.subr.mxu0 0.0
    %1831 = vmatpush1.msra.mxu0 0.0
    %1832 = vmatprep.subr.mxu0 0.0
    %1833 = vmatpush1.msra.mxu0 0.0
    %1834 = vmatprep.subr.mxu0 0.0
    %1835 = vmatpush1.msra.mxu0 0.0
    %1836 = vmatprep.subr.mxu0 0.0
    %1837 = vmatpush1.msra.mxu0 0.0
    %1838 = vmatprep.subr.mxu0 0.0
    %1839 = vmatpush1.msra.mxu0 0.0
    %1840 = vmatprep.subr.mxu0 0.0
    %1841 = vmatpush1.msra.mxu0 0.0
    %1842 = vmatprep.subr.mxu0 0.0
    %1843 = vmatpush1.msra.mxu0 0.0
    %1844 = vmatprep.subr.mxu0 0.0
    %1845 = vmatpush1.msra.mxu0 0.0
    %1846 = vmatprep.subr.mxu0 0.0
    %1847 = vmatpush1.msra.mxu0 0.0
    %1848 = vmatprep.subr.mxu0 0.0
    %1849 = vmatpush1.msra.mxu0 0.0
    %1850 = vmatprep.subr.mxu0 0.0
    %1851 = vmatpush1.msra.mxu0 0.0
    %1852 = vmatprep.subr.mxu0 0.0
    %1853 = vmatpush1.msra.mxu0 0.0
    %1854 = vmatprep.subr.mxu0 %v1816
    %1855 = vmatpush1.msra.mxu0 %v1814
    %1856 = vmatprep.subr.mxu0 0.0
    %1857 = vmatpush2.msra.mxu0 0.0
    %1858 = vmatprep.subr.mxu0 0.0
    %1859 = vmatpush2.msra.mxu0 0.0
    %1860 = vmatprep.subr.mxu0 0.0
    %1861 = vmatpush2.msra.mxu0 0.0
    %1862 = vmatprep.subr.mxu0 0.0
    %1863 = vmatpush2.msra.mxu0 0.0
    %1864 = vmatprep.subr.mxu0 0.0
    %1865 = vmatpush2.msra.mxu0 0.0
    %1866 = vmatprep.subr.mxu0 0.0
    %1867 = vmatpush2.msra.mxu0 0.0
    %1868 = vmatprep.subr.mxu0 0.0
    %1869 = vmatpush2.msra.mxu0 0.0
    %1870 = vmatprep.subr.mxu0 0.0
    %1871 = vmatpush2.msra.mxu0 0.0
    %1872 = vmatprep.subr.mxu0 0.0
    %1873 = vmatpush2.msra.mxu0 0.0
    %1874 = vmatprep.subr.mxu0 0.0
    %1875 = vmatpush2.msra.mxu0 0.0
    %1876 = vmatprep.subr.mxu0 0.0
    %1877 = vmatpush2.msra.mxu0 0.0
    %1878 = vmatprep.subr.mxu0 0.0
    %1879 = vmatpush2.msra.mxu0 0.0
    %1880 = vmatprep.subr.mxu0 0.0
    %1881 = vmatpush2.msra.mxu0 0.0
    %1882 = vmatprep.subr.mxu0 0.0
    %1883 = vmatpush2.msra.mxu0 0.0
    %1884 = vmatprep.subr.mxu0 0.0
    %1885 = vmatpush2.msra.mxu0 0.0
    %1886 = vmatprep.subr.mxu0 0.0
    %1887 = vmatpush2.msra.mxu0 0.0
    %1888 = vmatprep.mubr.f32.mxu0 0.0
    %1889 = vmatmul.mubr.f32.gmra.mxu0 %v1812
    %v1890 = vpop.f32.mrf.mxu0
    %v1891 = vadd.f32 0.0, %v1890
    %v1892 = vpop.f32.mrf.mxu0
    %v1893 = vadd.f32 0.0, %v1892
    %1894 = vdwg.mxu0
    %1895 = vmatprep.subr.mxu0 0.0
    %1896 = vmatpush1.msra.mxu0 0.0
    %1897 = vmatprep.subr.mxu0 0.0
    %1898 = vmatpush1.msra.mxu0 0.0
    %1899 = vmatprep.subr.mxu0 0.0
    %1900 = vmatpush1.msra.mxu0 0.0
    %1901 = vmatprep.subr.mxu0 0.0
    %1902 = vmatpush1.msra.mxu0 0.0
    %1903 = vmatprep.subr.mxu0 0.0
    %1904 = vmatpush1.msra.mxu0 0.0
    %1905 = vmatprep.subr.mxu0 0.0
    %1906 = vmatpush1.msra.mxu0 0.0
    %1907 = vmatprep.subr.mxu0 0.0
    %1908 = vmatpush1.msra.mxu0 0.0
    %1909 = vmatprep.subr.mxu0 0.0
    %1910 = vmatpush1.msra.mxu0 0.0
    %1911 = vmatprep.subr.mxu0 0.0
    %1912 = vmatpush1.msra.mxu0 0.0
    %1913 = vmatprep.subr.mxu0 0.0
    %1914 = vmatpush1.msra.mxu0 0.0
    %1915 = vmatprep.subr.mxu0 0.0
    %1916 = vmatpush1.msra.mxu0 0.0
    %1917 = vmatprep.subr.mxu0 0.0
    %1918 = vmatpush1.msra.mxu0 0.0
    %1919 = vmatprep.subr.mxu0 0.0
    %1920 = vmatpush1.msra.mxu0 0.0
    %1921 = vmatprep.subr.mxu0 0.0
    %1922 = vmatpush1.msra.mxu0 0.0
    %1923 = vmatprep.subr.mxu0 0.0
    %1924 = vmatpush1.msra.mxu0 0.0
    %1925 = vmatprep.subr.mxu0 %v1820
    %1926 = vmatpush1.msra.mxu0 %v1818
    %1927 = vmatprep.subr.mxu0 0.0
    %1928 = vmatpush2.msra.mxu0 0.0
    %1929 = vmatprep.subr.mxu0 0.0
    %1930 = vmatpush2.msra.mxu0 0.0
    %1931 = vmatprep.subr.mxu0 0.0
    %1932 = vmatpush2.msra.mxu0 0.0
    %1933 = vmatprep.subr.mxu0 0.0
    %1934 = vmatpush2.msra.mxu0 0.0
    %1935 = vmatprep.subr.mxu0 0.0
    %1936 = vmatpush2.msra.mxu0 0.0
    %1937 = vmatprep.subr.mxu0 0.0
    %1938 = vmatpush2.msra.mxu0 0.0
    %1939 = vmatprep.subr.mxu0 0.0
    %1940 = vmatpush2.msra.mxu0 0.0
    %1941 = vmatprep.subr.mxu0 0.0
    %1942 = vmatpush2.msra.mxu0 0.0
    %1943 = vmatprep.subr.mxu0 0.0
    %1944 = vmatpush2.msra.mxu0 0.0
    %1945 = vmatprep.subr.mxu0 0.0
    %1946 = vmatpush2.msra.mxu0 0.0
    %1947 = vmatprep.subr.mxu0 0.0
    %1948 = vmatpush2.msra.mxu0 0.0
    %1949 = vmatprep.subr.mxu0 0.0
    %1950 = vmatpush2.msra.mxu0 0.0
    %1951 = vmatprep.subr.mxu0 0.0
    %1952 = vmatpush2.msra.mxu0 0.0
    %1953 = vmatprep.subr.mxu0 0.0
    %1954 = vmatpush2.msra.mxu0 0.0
    %1955 = vmatprep.subr.mxu0 0.0
    %1956 = vmatpush2.msra.mxu0 0.0
    %1957 = vmatprep.subr.mxu0 0.0
    %1958 = vmatpush2.msra.mxu0 0.0
    %1959 = vmatprep.mubr.f32.mxu0 0.0
    %1960 = vmatmul.mubr.f32.gmra.mxu0 %v1812
    %v1961 = vpop.f32.mrf.mxu0
    %v1962 = vpop.f32.mrf.mxu0
    %v1963 = vadd.f32 0.0, %v1962
    %1964 = vdwg.mxu0
    %1965 = vmatprep.subr.mxu0 0.0
    %1966 = vmatpush1.msra.mxu0 0.0
    %1967 = vmatprep.subr.mxu0 0.0
    %1968 = vmatpush1.msra.mxu0 0.0
    %1969 = vmatprep.subr.mxu0 0.0
    %1970 = vmatpush1.msra.mxu0 0.0
    %1971 = vmatprep.subr.mxu0 0.0
    %1972 = vmatpush1.msra.mxu0 0.0
    %1973 = vmatprep.subr.mxu0 0.0
    %1974 = vmatpush1.msra.mxu0 0.0
    %1975 = vmatprep.subr.mxu0 0.0
    %1976 = vmatpush1.msra.mxu0 0.0
    %1977 = vmatprep.subr.mxu0 0.0
    %1978 = vmatpush1.msra.mxu0 0.0
    %1979 = vmatprep.subr.mxu0 0.0
    %1980 = vmatpush1.msra.mxu0 0.0
    %1981 = vmatprep.subr.mxu0 0.0
    %1982 = vmatpush1.msra.mxu0 0.0
    %1983 = vmatprep.subr.mxu0 0.0
    %1984 = vmatpush1.msra.mxu0 0.0
    %1985 = vmatprep.subr.mxu0 0.0
    %1986 = vmatpush1.msra.mxu0 0.0
    %1987 = vmatprep.subr.mxu0 0.0
    %1988 = vmatpush1.msra.mxu0 0.0
    %1989 = vmatprep.subr.mxu0 0.0
    %1990 = vmatpush1.msra.mxu0 0.0
    %1991 = vmatprep.subr.mxu0 0.0
    %1992 = vmatpush1.msra.mxu0 0.0
    %1993 = vmatprep.subr.mxu0 0.0
    %1994 = vmatpush1.msra.mxu0 0.0
    %1995 = vmatprep.subr.mxu0 0.0
    %1996 = vmatpush1.msra.mxu0 %v1822
    %1997 = vmatprep.subr.mxu0 0.0
    %1998 = vmatpush2.msra.mxu0 0.0
    %1999 = vmatprep.subr.mxu0 0.0
    %2000 = vmatpush2.msra.mxu0 0.0
    %2001 = vmatprep.subr.mxu0 0.0
    %2002 = vmatpush2.msra.mxu0 0.0
    %2003 = vmatprep.subr.mxu0 0.0
    %2004 = vmatpush2.msra.mxu0 0.0
    %2005 = vmatprep.subr.mxu0 0.0
    %2006 = vmatpush2.msra.mxu0 0.0
    %2007 = vmatprep.subr.mxu0 0.0
    %2008 = vmatpush2.msra.mxu0 0.0
    %2009 = vmatprep.subr.mxu0 0.0
    %2010 = vmatpush2.msra.mxu0 0.0
    %2011 = vmatprep.subr.mxu0 0.0
    %2012 = vmatpush2.msra.mxu0 0.0
    %2013 = vmatprep.subr.mxu0 0.0
    %2014 = vmatpush2.msra.mxu0 0.0
    %2015 = vmatprep.subr.mxu0 0.0
    %2016 = vmatpush2.msra.mxu0 0.0
    %2017 = vmatprep.subr.mxu0 0.0
    %2018 = vmatpush2.msra.mxu0 0.0
    %2019 = vmatprep.subr.mxu0 0.0
    %2020 = vmatpush2.msra.mxu0 0.0
    %2021 = vmatprep.subr.mxu0 0.0
    %2022 = vmatpush2.msra.mxu0 0.0
    %2023 = vmatprep.subr.mxu0 0.0
    %2024 = vmatpush2.msra.mxu0 0.0
    %2025 = vmatprep.subr.mxu0 0.0
    %2026 = vmatpush2.msra.mxu0 0.0
    %2027 = vmatprep.subr.mxu0 0.0
    %2028 = vmatpush2.msra.mxu0 0.0
    %2029 = vmatprep.mubr.f32.mxu0 0.0
    %2030 = vmatmul.mubr.f32.gmra.mxu0 %v1812
    %v2031 = vpop.f32.mrf.mxu0
    %v2032 = vadd.f32 0.0, %v2031
    %v2033 = vpop.f32.mrf.mxu0
    %2034 = vdwg.mxu0
    %v2035 = vadd.f32 %v1778, %v1891
    %v2036 = vadd.f32 %v1779, %v1893
    %v2037 = vadd.f32 %v1780, %v1963
    %v2038 = vadd.f32 %v1781, %v2032
    %v2039 = vld [vmem:[%s0] sm:$0x77]
    %v2040 = vld [vmem:[%s0 + $0x8] sm:$0x77]
    %v2041 = vld [vmem:[%s0 + $0x10] sm:$0x77]
    %s2042 = scalar_lea.vmem %s1, 64
    %v2043 = vld [vmem:[%s2042] sm:$0xff]
    %v2047 = vcombine.high %v2039, %v2039
    %v2048 = vcombine.high %v2040, %v2040
    %v2049 = vcombine.high %v2041, %v2041
    %2050 = vrot.lane.b32.xlu0 %v2039, 109
    %v2051 = vpop.permute.xlu0 %2050
    %2052 = vrot.lane.b32.xlu0 %v2047, 109
    %v2053 = vpop.permute.xlu0 %2052
    %2054 = vrot.lane.b32.xlu0 %v2040, 109
    %v2055 = vpop.permute.xlu0 %2054
    %2056 = vrot.lane.b32.xlu0 %v2048, 109
    %v2057 = vpop.permute.xlu0 %2056
    %2058 = vrot.lane.b32.xlu0 %v2041, 109
    %v2059 = vpop.permute.xlu0 %2058
    %2060 = vrot.lane.b32.xlu0 %v2049, 109
    %v2061 = vpop.permute.xlu0 %2060
    %vm2062 = vcmask 891904
    %v2063 = vsel %vm2062, %v2051, %v2053
    %v2064 = vsel %vm2062, %v2053, %v2055
    %v2065 = vsel %vm2062, %v2055, %v2057
    %v2066 = vsel %vm2062, %v2057, %v2059
    %v2067 = vsel %vm2062, %v2059, %v2061
    %v2069 = vsel %vm46, %v2043, 0
    %v2071 = vsel %vm50, %v2063, 0
    %v2073 = vsel %vm50, %v2064, 0
    %v2075 = vsel %vm50, %v2065, 0
    %v2077 = vsel %vm50, %v2066, 0
    %v2079 = vsel %vm50, %v2067, 0
    %2081 = vmatprep.subr.mxu0 0.0
    %2082 = vmatpush1.msra.mxu0 0.0
    %2083 = vmatprep.subr.mxu0 0.0
    %2084 = vmatpush1.msra.mxu0 0.0
    %2085 = vmatprep.subr.mxu0 0.0
    %2086 = vmatpush1.msra.mxu0 0.0
    %2087 = vmatprep.subr.mxu0 0.0
    %2088 = vmatpush1.msra.mxu0 0.0
    %2089 = vmatprep.subr.mxu0 0.0
    %2090 = vmatpush1.msra.mxu0 0.0
    %2091 = vmatprep.subr.mxu0 0.0
    %2092 = vmatpush1.msra.mxu0 0.0
    %2093 = vmatprep.subr.mxu0 0.0
    %2094 = vmatpush1.msra.mxu0 0.0
    %2095 = vmatprep.subr.mxu0 0.0
    %2096 = vmatpush1.msra.mxu0 0.0
    %2097 = vmatprep.subr.mxu0 0.0
    %2098 = vmatpush1.msra.mxu0 0.0
    %2099 = vmatprep.subr.mxu0 0.0
    %2100 = vmatpush1.msra.mxu0 0.0
    %2101 = vmatprep.subr.mxu0 0.0
    %2102 = vmatpush1.msra.mxu0 0.0
    %2103 = vmatprep.subr.mxu0 0.0
    %2104 = vmatpush1.msra.mxu0 0.0
    %2105 = vmatprep.subr.mxu0 0.0
    %2106 = vmatpush1.msra.mxu0 0.0
    %2107 = vmatprep.subr.mxu0 0.0
    %2108 = vmatpush1.msra.mxu0 0.0
    %2109 = vmatprep.subr.mxu0 0.0
    %2110 = vmatpush1.msra.mxu0 0.0
    %2111 = vmatprep.subr.mxu0 %v2073
    %2112 = vmatpush1.msra.mxu0 %v2071
    %2113 = vmatprep.subr.mxu0 0.0
    %2114 = vmatpush2.msra.mxu0 0.0
    %2115 = vmatprep.subr.mxu0 0.0
    %2116 = vmatpush2.msra.mxu0 0.0
    %2117 = vmatprep.subr.mxu0 0.0
    %2118 = vmatpush2.msra.mxu0 0.0
    %2119 = vmatprep.subr.mxu0 0.0
    %2120 = vmatpush2.msra.mxu0 0.0
    %2121 = vmatprep.subr.mxu0 0.0
    %2122 = vmatpush2.msra.mxu0 0.0
    %2123 = vmatprep.subr.mxu0 0.0
    %2124 = vmatpush2.msra.mxu0 0.0
    %2125 = vmatprep.subr.mxu0 0.0
    %2126 = vmatpush2.msra.mxu0 0.0
    %2127 = vmatprep.subr.mxu0 0.0
    %2128 = vmatpush2.msra.mxu0 0.0
    %2129 = vmatprep.subr.mxu0 0.0
    %2130 = vmatpush2.msra.mxu0 0.0
    %2131 = vmatprep.subr.mxu0 0.0
    %2132 = vmatpush2.msra.mxu0 0.0
    %2133 = vmatprep.subr.mxu0 0.0
    %2134 = vmatpush2.msra.mxu0 0.0
    %2135 = vmatprep.subr.mxu0 0.0
    %2136 = vmatpush2.msra.mxu0 0.0
    %2137 = vmatprep.subr.mxu0 0.0
    %2138 = vmatpush2.msra.mxu0 0.0
    %2139 = vmatprep.subr.mxu0 0.0
    %2140 = vmatpush2.msra.mxu0 0.0
    %2141 = vmatprep.subr.mxu0 0.0
    %2142 = vmatpush2.msra.mxu0 0.0
    %2143 = vmatprep.subr.mxu0 0.0
    %2144 = vmatpush2.msra.mxu0 0.0
    %2145 = vmatprep.mubr.f32.mxu0 0.0
    %2146 = vmatmul.mubr.f32.gmra.mxu0 %v2069
    %v2147 = vpop.f32.mrf.mxu0
    %v2148 = vadd.f32 0.0, %v2147
    %v2149 = vpop.f32.mrf.mxu0
    %v2150 = vadd.f32 0.0, %v2149
    %2151 = vdwg.mxu0
    %2152 = vmatprep.subr.mxu0 0.0
    %2153 = vmatpush1.msra.mxu0 0.0
    %2154 = vmatprep.subr.mxu0 0.0
    %2155 = vmatpush1.msra.mxu0 0.0
    %2156 = vmatprep.subr.mxu0 0.0
    %2157 = vmatpush1.msra.mxu0 0.0
    %2158 = vmatprep.subr.mxu0 0.0
    %2159 = vmatpush1.msra.mxu0 0.0
    %2160 = vmatprep.subr.mxu0 0.0
    %2161 = vmatpush1.msra.mxu0 0.0
    %2162 = vmatprep.subr.mxu0 0.0
    %2163 = vmatpush1.msra.mxu0 0.0
    %2164 = vmatprep.subr.mxu0 0.0
    %2165 = vmatpush1.msra.mxu0 0.0
    %2166 = vmatprep.subr.mxu0 0.0
    %2167 = vmatpush1.msra.mxu0 0.0
    %2168 = vmatprep.subr.mxu0 0.0
    %2169 = vmatpush1.msra.mxu0 0.0
    %2170 = vmatprep.subr.mxu0 0.0
    %2171 = vmatpush1.msra.mxu0 0.0
    %2172 = vmatprep.subr.mxu0 0.0
    %2173 = vmatpush1.msra.mxu0 0.0
    %2174 = vmatprep.subr.mxu0 0.0
    %2175 = vmatpush1.msra.mxu0 0.0
    %2176 = vmatprep.subr.mxu0 0.0
    %2177 = vmatpush1.msra.mxu0 0.0
    %2178 = vmatprep.subr.mxu0 0.0
    %2179 = vmatpush1.msra.mxu0 0.0
    %2180 = vmatprep.subr.mxu0 0.0
    %2181 = vmatpush1.msra.mxu0 0.0
    %2182 = vmatprep.subr.mxu0 %v2077
    %2183 = vmatpush1.msra.mxu0 %v2075
    %2184 = vmatprep.subr.mxu0 0.0
    %2185 = vmatpush2.msra.mxu0 0.0
    %2186 = vmatprep.subr.mxu0 0.0
    %2187 = vmatpush2.msra.mxu0 0.0
    %2188 = vmatprep.subr.mxu0 0.0
    %2189 = vmatpush2.msra.mxu0 0.0
    %2190 = vmatprep.subr.mxu0 0.0
    %2191 = vmatpush2.msra.mxu0 0.0
    %2192 = vmatprep.subr.mxu0 0.0
    %2193 = vmatpush2.msra.mxu0 0.0
    %2194 = vmatprep.subr.mxu0 0.0
    %2195 = vmatpush2.msra.mxu0 0.0
    %2196 = vmatprep.subr.mxu0 0.0
    %2197 = vmatpush2.msra.mxu0 0.0
    %2198 = vmatprep.subr.mxu0 0.0
    %2199 = vmatpush2.msra.mxu0 0.0
    %2200 = vmatprep.subr.mxu0 0.0
    %2201 = vmatpush2.msra.mxu0 0.0
    %2202 = vmatprep.subr.mxu0 0.0
    %2203 = vmatpush2.msra.mxu0 0.0
    %2204 = vmatprep.subr.mxu0 0.0
    %2205 = vmatpush2.msra.mxu0 0.0
    %2206 = vmatprep.subr.mxu0 0.0
    %2207 = vmatpush2.msra.mxu0 0.0
    %2208 = vmatprep.subr.mxu0 0.0
    %2209 = vmatpush2.msra.mxu0 0.0
    %2210 = vmatprep.subr.mxu0 0.0
    %2211 = vmatpush2.msra.mxu0 0.0
    %2212 = vmatprep.subr.mxu0 0.0
    %2213 = vmatpush2.msra.mxu0 0.0
    %2214 = vmatprep.subr.mxu0 0.0
    %2215 = vmatpush2.msra.mxu0 0.0
    %2216 = vmatprep.mubr.f32.mxu0 0.0
    %2217 = vmatmul.mubr.f32.gmra.mxu0 %v2069
    %v2218 = vpop.f32.mrf.mxu0
    %v2219 = vpop.f32.mrf.mxu0
    %v2220 = vadd.f32 0.0, %v2219
    %2221 = vdwg.mxu0
    %2222 = vmatprep.subr.mxu0 0.0
    %2223 = vmatpush1.msra.mxu0 0.0
    %2224 = vmatprep.subr.mxu0 0.0
    %2225 = vmatpush1.msra.mxu0 0.0
    %2226 = vmatprep.subr.mxu0 0.0
    %2227 = vmatpush1.msra.mxu0 0.0
    %2228 = vmatprep.subr.mxu0 0.0
    %2229 = vmatpush1.msra.mxu0 0.0
    %2230 = vmatprep.subr.mxu0 0.0
    %2231 = vmatpush1.msra.mxu0 0.0
    %2232 = vmatprep.subr.mxu0 0.0
    %2233 = vmatpush1.msra.mxu0 0.0
    %2234 = vmatprep.subr.mxu0 0.0
    %2235 = vmatpush1.msra.mxu0 0.0
    %2236 = vmatprep.subr.mxu0 0.0
    %2237 = vmatpush1.msra.mxu0 0.0
    %2238 = vmatprep.subr.mxu0 0.0
    %2239 = vmatpush1.msra.mxu0 0.0
    %2240 = vmatprep.subr.mxu0 0.0
    %2241 = vmatpush1.msra.mxu0 0.0
    %2242 = vmatprep.subr.mxu0 0.0
    %2243 = vmatpush1.msra.mxu0 0.0
    %2244 = vmatprep.subr.mxu0 0.0
    %2245 = vmatpush1.msra.mxu0 0.0
    %2246 = vmatprep.subr.mxu0 0.0
    %2247 = vmatpush1.msra.mxu0 0.0
    %2248 = vmatprep.subr.mxu0 0.0
    %2249 = vmatpush1.msra.mxu0 0.0
    %2250 = vmatprep.subr.mxu0 0.0
    %2251 = vmatpush1.msra.mxu0 0.0
    %2252 = vmatprep.subr.mxu0 0.0
    %2253 = vmatpush1.msra.mxu0 %v2079
    %2254 = vmatprep.subr.mxu0 0.0
    %2255 = vmatpush2.msra.mxu0 0.0
    %2256 = vmatprep.subr.mxu0 0.0
    %2257 = vmatpush2.msra.mxu0 0.0
    %2258 = vmatprep.subr.mxu0 0.0
    %2259 = vmatpush2.msra.mxu0 0.0
    %2260 = vmatprep.subr.mxu0 0.0
    %2261 = vmatpush2.msra.mxu0 0.0
    %2262 = vmatprep.subr.mxu0 0.0
    %2263 = vmatpush2.msra.mxu0 0.0
    %2264 = vmatprep.subr.mxu0 0.0
    %2265 = vmatpush2.msra.mxu0 0.0
    %2266 = vmatprep.subr.mxu0 0.0
    %2267 = vmatpush2.msra.mxu0 0.0
    %2268 = vmatprep.subr.mxu0 0.0
    %2269 = vmatpush2.msra.mxu0 0.0
    %2270 = vmatprep.subr.mxu0 0.0
    %2271 = vmatpush2.msra.mxu0 0.0
    %2272 = vmatprep.subr.mxu0 0.0
    %2273 = vmatpush2.msra.mxu0 0.0
    %2274 = vmatprep.subr.mxu0 0.0
    %2275 = vmatpush2.msra.mxu0 0.0
    %2276 = vmatprep.subr.mxu0 0.0
    %2277 = vmatpush2.msra.mxu0 0.0
    %2278 = vmatprep.subr.mxu0 0.0
    %2279 = vmatpush2.msra.mxu0 0.0
    %2280 = vmatprep.subr.mxu0 0.0
    %2281 = vmatpush2.msra.mxu0 0.0
    %2282 = vmatprep.subr.mxu0 0.0
    %2283 = vmatpush2.msra.mxu0 0.0
    %2284 = vmatprep.subr.mxu0 0.0
    %2285 = vmatpush2.msra.mxu0 0.0
    %2286 = vmatprep.mubr.f32.mxu0 0.0
    %2287 = vmatmul.mubr.f32.gmra.mxu0 %v2069
    %v2288 = vpop.f32.mrf.mxu0
    %v2289 = vadd.f32 0.0, %v2288
    %v2290 = vpop.f32.mrf.mxu0
    %2291 = vdwg.mxu0
    %v2292 = vadd.f32 %v2035, %v2148
    %v2293 = vadd.f32 %v2036, %v2150
    %v2294 = vadd.f32 %v2037, %v2220
    %v2295 = vadd.f32 %v2038, %v2289
    %v2296 = vld [vmem:[%s0] sm:$0x77]
    %v2297 = vld [vmem:[%s0 + $0x8] sm:$0x77]
    %v2298 = vld [vmem:[%s0 + $0x10] sm:$0x77]
    %s2299 = scalar_lea.vmem %s1, 72
    %v2300 = vld [vmem:[%s2299] sm:$0xff]
    %v2304 = vcombine.high %v2296, %v2296
    %v2305 = vcombine.high %v2297, %v2297
    %v2306 = vcombine.high %v2298, %v2298
    %2307 = vrot.lane.b32.xlu0 %v2296, 108
    %v2308 = vpop.permute.xlu0 %2307
    %2309 = vrot.lane.b32.xlu0 %v2304, 108
    %v2310 = vpop.permute.xlu0 %2309
    %2311 = vrot.lane.b32.xlu0 %v2297, 108
    %v2312 = vpop.permute.xlu0 %2311
    %2313 = vrot.lane.b32.xlu0 %v2305, 108
    %v2314 = vpop.permute.xlu0 %2313
    %2315 = vrot.lane.b32.xlu0 %v2298, 108
    %v2316 = vpop.permute.xlu0 %2315
    %2317 = vrot.lane.b32.xlu0 %v2306, 108
    %v2318 = vpop.permute.xlu0 %2317
    %vm2319 = vcmask 883712
    %v2320 = vsel %vm2319, %v2308, %v2310
    %v2321 = vsel %vm2319, %v2310, %v2312
    %v2322 = vsel %vm2319, %v2312, %v2314
    %v2323 = vsel %vm2319, %v2314, %v2316
    %v2324 = vsel %vm2319, %v2316, %v2318
    %v2326 = vsel %vm46, %v2300, 0
    %v2328 = vsel %vm50, %v2320, 0
    %v2330 = vsel %vm50, %v2321, 0
    %v2332 = vsel %vm50, %v2322, 0
    %v2334 = vsel %vm50, %v2323, 0
    %v2336 = vsel %vm50, %v2324, 0
    %2338 = vmatprep.subr.mxu0 0.0
    %2339 = vmatpush1.msra.mxu0 0.0
    %2340 = vmatprep.subr.mxu0 0.0
    %2341 = vmatpush1.msra.mxu0 0.0
    %2342 = vmatprep.subr.mxu0 0.0
    %2343 = vmatpush1.msra.mxu0 0.0
    %2344 = vmatprep.subr.mxu0 0.0
    %2345 = vmatpush1.msra.mxu0 0.0
    %2346 = vmatprep.subr.mxu0 0.0
    %2347 = vmatpush1.msra.mxu0 0.0
    %2348 = vmatprep.subr.mxu0 0.0
    %2349 = vmatpush1.msra.mxu0 0.0
    %2350 = vmatprep.subr.mxu0 0.0
    %2351 = vmatpush1.msra.mxu0 0.0
    %2352 = vmatprep.subr.mxu0 0.0
    %2353 = vmatpush1.msra.mxu0 0.0
    %2354 = vmatprep.subr.mxu0 0.0
    %2355 = vmatpush1.msra.mxu0 0.0
    %2356 = vmatprep.subr.mxu0 0.0
    %2357 = vmatpush1.msra.mxu0 0.0
    %2358 = vmatprep.subr.mxu0 0.0
    %2359 = vmatpush1.msra.mxu0 0.0
    %2360 = vmatprep.subr.mxu0 0.0
    %2361 = vmatpush1.msra.mxu0 0.0
    %2362 = vmatprep.subr.mxu0 0.0
    %2363 = vmatpush1.msra.mxu0 0.0
    %2364 = vmatprep.subr.mxu0 0.0
    %2365 = vmatpush1.msra.mxu0 0.0
    %2366 = vmatprep.subr.mxu0 0.0
    %2367 = vmatpush1.msra.mxu0 0.0
    %2368 = vmatprep.subr.mxu0 %v2330
    %2369 = vmatpush1.msra.mxu0 %v2328
    %2370 = vmatprep.subr.mxu0 0.0
    %2371 = vmatpush2.msra.mxu0 0.0
    %2372 = vmatprep.subr.mxu0 0.0
    %2373 = vmatpush2.msra.mxu0 0.0
    %2374 = vmatprep.subr.mxu0 0.0
    %2375 = vmatpush2.msra.mxu0 0.0
    %2376 = vmatprep.subr.mxu0 0.0
    %2377 = vmatpush2.msra.mxu0 0.0
    %2378 = vmatprep.subr.mxu0 0.0
    %2379 = vmatpush2.msra.mxu0 0.0
    %2380 = vmatprep.subr.mxu0 0.0
    %2381 = vmatpush2.msra.mxu0 0.0
    %2382 = vmatprep.subr.mxu0 0.0
    %2383 = vmatpush2.msra.mxu0 0.0
    %2384 = vmatprep.subr.mxu0 0.0
    %2385 = vmatpush2.msra.mxu0 0.0
    %2386 = vmatprep.subr.mxu0 0.0
    %2387 = vmatpush2.msra.mxu0 0.0
    %2388 = vmatprep.subr.mxu0 0.0
    %2389 = vmatpush2.msra.mxu0 0.0
    %2390 = vmatprep.subr.mxu0 0.0
    %2391 = vmatpush2.msra.mxu0 0.0
    %2392 = vmatprep.subr.mxu0 0.0
    %2393 = vmatpush2.msra.mxu0 0.0
    %2394 = vmatprep.subr.mxu0 0.0
    %2395 = vmatpush2.msra.mxu0 0.0
    %2396 = vmatprep.subr.mxu0 0.0
    %2397 = vmatpush2.msra.mxu0 0.0
    %2398 = vmatprep.subr.mxu0 0.0
    %2399 = vmatpush2.msra.mxu0 0.0
    %2400 = vmatprep.subr.mxu0 0.0
    %2401 = vmatpush2.msra.mxu0 0.0
    %2402 = vmatprep.mubr.f32.mxu0 0.0
    %2403 = vmatmul.mubr.f32.gmra.mxu0 %v2326
    %v2404 = vpop.f32.mrf.mxu0
    %v2405 = vadd.f32 0.0, %v2404
    %v2406 = vpop.f32.mrf.mxu0
    %v2407 = vadd.f32 0.0, %v2406
    %2408 = vdwg.mxu0
    %2409 = vmatprep.subr.mxu0 0.0
    %2410 = vmatpush1.msra.mxu0 0.0
    %2411 = vmatprep.subr.mxu0 0.0
    %2412 = vmatpush1.msra.mxu0 0.0
    %2413 = vmatprep.subr.mxu0 0.0
    %2414 = vmatpush1.msra.mxu0 0.0
    %2415 = vmatprep.subr.mxu0 0.0
    %2416 = vmatpush1.msra.mxu0 0.0
    %2417 = vmatprep.subr.mxu0 0.0
    %2418 = vmatpush1.msra.mxu0 0.0
    %2419 = vmatprep.subr.mxu0 0.0
    %2420 = vmatpush1.msra.mxu0 0.0
    %2421 = vmatprep.subr.mxu0 0.0
    %2422 = vmatpush1.msra.mxu0 0.0
    %2423 = vmatprep.subr.mxu0 0.0
    %2424 = vmatpush1.msra.mxu0 0.0
    %2425 = vmatprep.subr.mxu0 0.0
    %2426 = vmatpush1.msra.mxu0 0.0
    %2427 = vmatprep.subr.mxu0 0.0
    %2428 = vmatpush1.msra.mxu0 0.0
    %2429 = vmatprep.subr.mxu0 0.0
    %2430 = vmatpush1.msra.mxu0 0.0
    %2431 = vmatprep.subr.mxu0 0.0
    %2432 = vmatpush1.msra.mxu0 0.0
    %2433 = vmatprep.subr.mxu0 0.0
    %2434 = vmatpush1.msra.mxu0 0.0
    %2435 = vmatprep.subr.mxu0 0.0
    %2436 = vmatpush1.msra.mxu0 0.0
    %2437 = vmatprep.subr.mxu0 0.0
    %2438 = vmatpush1.msra.mxu0 0.0
    %2439 = vmatprep.subr.mxu0 %v2334
    %2440 = vmatpush1.msra.mxu0 %v2332
    %2441 = vmatprep.subr.mxu0 0.0
    %2442 = vmatpush2.msra.mxu0 0.0
    %2443 = vmatprep.subr.mxu0 0.0
    %2444 = vmatpush2.msra.mxu0 0.0
    %2445 = vmatprep.subr.mxu0 0.0
    %2446 = vmatpush2.msra.mxu0 0.0
    %2447 = vmatprep.subr.mxu0 0.0
    %2448 = vmatpush2.msra.mxu0 0.0
    %2449 = vmatprep.subr.mxu0 0.0
    %2450 = vmatpush2.msra.mxu0 0.0
    %2451 = vmatprep.subr.mxu0 0.0
    %2452 = vmatpush2.msra.mxu0 0.0
    %2453 = vmatprep.subr.mxu0 0.0
    %2454 = vmatpush2.msra.mxu0 0.0
    %2455 = vmatprep.subr.mxu0 0.0
    %2456 = vmatpush2.msra.mxu0 0.0
    %2457 = vmatprep.subr.mxu0 0.0
    %2458 = vmatpush2.msra.mxu0 0.0
    %2459 = vmatprep.subr.mxu0 0.0
    %2460 = vmatpush2.msra.mxu0 0.0
    %2461 = vmatprep.subr.mxu0 0.0
    %2462 = vmatpush2.msra.mxu0 0.0
    %2463 = vmatprep.subr.mxu0 0.0
    %2464 = vmatpush2.msra.mxu0 0.0
    %2465 = vmatprep.subr.mxu0 0.0
    %2466 = vmatpush2.msra.mxu0 0.0
    %2467 = vmatprep.subr.mxu0 0.0
    %2468 = vmatpush2.msra.mxu0 0.0
    %2469 = vmatprep.subr.mxu0 0.0
    %2470 = vmatpush2.msra.mxu0 0.0
    %2471 = vmatprep.subr.mxu0 0.0
    %2472 = vmatpush2.msra.mxu0 0.0
    %2473 = vmatprep.mubr.f32.mxu0 0.0
    %2474 = vmatmul.mubr.f32.gmra.mxu0 %v2326
    %v2475 = vpop.f32.mrf.mxu0
    %v2476 = vpop.f32.mrf.mxu0
    %v2477 = vadd.f32 0.0, %v2476
    %2478 = vdwg.mxu0
    %2479 = vmatprep.subr.mxu0 0.0
    %2480 = vmatpush1.msra.mxu0 0.0
    %2481 = vmatprep.subr.mxu0 0.0
    %2482 = vmatpush1.msra.mxu0 0.0
    %2483 = vmatprep.subr.mxu0 0.0
    %2484 = vmatpush1.msra.mxu0 0.0
    %2485 = vmatprep.subr.mxu0 0.0
    %2486 = vmatpush1.msra.mxu0 0.0
    %2487 = vmatprep.subr.mxu0 0.0
    %2488 = vmatpush1.msra.mxu0 0.0
    %2489 = vmatprep.subr.mxu0 0.0
    %2490 = vmatpush1.msra.mxu0 0.0
    %2491 = vmatprep.subr.mxu0 0.0
    %2492 = vmatpush1.msra.mxu0 0.0
    %2493 = vmatprep.subr.mxu0 0.0
    %2494 = vmatpush1.msra.mxu0 0.0
    %2495 = vmatprep.subr.mxu0 0.0
    %2496 = vmatpush1.msra.mxu0 0.0
    %2497 = vmatprep.subr.mxu0 0.0
    %2498 = vmatpush1.msra.mxu0 0.0
    %2499 = vmatprep.subr.mxu0 0.0
    %2500 = vmatpush1.msra.mxu0 0.0
    %2501 = vmatprep.subr.mxu0 0.0
    %2502 = vmatpush1.msra.mxu0 0.0
    %2503 = vmatprep.subr.mxu0 0.0
    %2504 = vmatpush1.msra.mxu0 0.0
    %2505 = vmatprep.subr.mxu0 0.0
    %2506 = vmatpush1.msra.mxu0 0.0
    %2507 = vmatprep.subr.mxu0 0.0
    %2508 = vmatpush1.msra.mxu0 0.0
    %2509 = vmatprep.subr.mxu0 0.0
    %2510 = vmatpush1.msra.mxu0 %v2336
    %2511 = vmatprep.subr.mxu0 0.0
    %2512 = vmatpush2.msra.mxu0 0.0
    %2513 = vmatprep.subr.mxu0 0.0
    %2514 = vmatpush2.msra.mxu0 0.0
    %2515 = vmatprep.subr.mxu0 0.0
    %2516 = vmatpush2.msra.mxu0 0.0
    %2517 = vmatprep.subr.mxu0 0.0
    %2518 = vmatpush2.msra.mxu0 0.0
    %2519 = vmatprep.subr.mxu0 0.0
    %2520 = vmatpush2.msra.mxu0 0.0
    %2521 = vmatprep.subr.mxu0 0.0
    %2522 = vmatpush2.msra.mxu0 0.0
    %2523 = vmatprep.subr.mxu0 0.0
    %2524 = vmatpush2.msra.mxu0 0.0
    %2525 = vmatprep.subr.mxu0 0.0
    %2526 = vmatpush2.msra.mxu0 0.0
    %2527 = vmatprep.subr.mxu0 0.0
    %2528 = vmatpush2.msra.mxu0 0.0
    %2529 = vmatprep.subr.mxu0 0.0
    %2530 = vmatpush2.msra.mxu0 0.0
    %2531 = vmatprep.subr.mxu0 0.0
    %2532 = vmatpush2.msra.mxu0 0.0
    %2533 = vmatprep.subr.mxu0 0.0
    %2534 = vmatpush2.msra.mxu0 0.0
    %2535 = vmatprep.subr.mxu0 0.0
    %2536 = vmatpush2.msra.mxu0 0.0
    %2537 = vmatprep.subr.mxu0 0.0
    %2538 = vmatpush2.msra.mxu0 0.0
    %2539 = vmatprep.subr.mxu0 0.0
    %2540 = vmatpush2.msra.mxu0 0.0
    %2541 = vmatprep.subr.mxu0 0.0
    %2542 = vmatpush2.msra.mxu0 0.0
    %2543 = vmatprep.mubr.f32.mxu0 0.0
    %2544 = vmatmul.mubr.f32.gmra.mxu0 %v2326
    %v2545 = vpop.f32.mrf.mxu0
    %v2546 = vadd.f32 0.0, %v2545
    %v2547 = vpop.f32.mrf.mxu0
    %2548 = vdwg.mxu0
    %v2549 = vadd.f32 %v2292, %v2405
    %v2550 = vadd.f32 %v2293, %v2407
    %v2551 = vadd.f32 %v2294, %v2477
    %v2552 = vadd.f32 %v2295, %v2546
    %v2553 = vld [vmem:[%s0] sm:$0x77]
    %v2554 = vld [vmem:[%s0 + $0x8] sm:$0x77]
    %v2555 = vld [vmem:[%s0 + $0x10] sm:$0x77]
    %s2556 = scalar_lea.vmem %s1, 80
    %v2557 = vld [vmem:[%s2556] sm:$0xff]
    %v2561 = vcombine.high %v2553, %v2553
    %v2562 = vcombine.high %v2554, %v2554
    %v2563 = vcombine.high %v2555, %v2555
    %2564 = vrot.lane.b32.xlu0 %v2553, 96
    %v2565 = vpop.permute.xlu0 %2564
    %2566 = vrot.lane.b32.xlu0 %v2561, 96
    %v2567 = vpop.permute.xlu0 %2566
    %2568 = vrot.lane.b32.xlu0 %v2554, 96
    %v2569 = vpop.permute.xlu0 %2568
    %2570 = vrot.lane.b32.xlu0 %v2562, 96
    %v2571 = vpop.permute.xlu0 %2570
    %2572 = vrot.lane.b32.xlu0 %v2555, 96
    %v2573 = vpop.permute.xlu0 %2572
    %2574 = vrot.lane.b32.xlu0 %v2563, 96
    %v2575 = vpop.permute.xlu0 %2574
    %vm2576 = vcmask 785408
    %v2577 = vsel %vm2576, %v2565, %v2567
    %v2578 = vsel %vm2576, %v2567, %v2569
    %v2579 = vsel %vm2576, %v2569, %v2571
    %v2580 = vsel %vm2576, %v2571, %v2573
    %v2581 = vsel %vm2576, %v2573, %v2575
    %v2583 = vsel %vm46, %v2557, 0
    %v2585 = vsel %vm50, %v2577, 0
    %v2587 = vsel %vm50, %v2578, 0
    %v2589 = vsel %vm50, %v2579, 0
    %v2591 = vsel %vm50, %v2580, 0
    %v2593 = vsel %vm50, %v2581, 0
    %2595 = vmatprep.subr.mxu0 0.0
    %2596 = vmatpush1.msra.mxu0 0.0
    %2597 = vmatprep.subr.mxu0 0.0
    %2598 = vmatpush1.msra.mxu0 0.0
    %2599 = vmatprep.subr.mxu0 0.0
    %2600 = vmatpush1.msra.mxu0 0.0
    %2601 = vmatprep.subr.mxu0 0.0
    %2602 = vmatpush1.msra.mxu0 0.0
    %2603 = vmatprep.subr.mxu0 0.0
    %2604 = vmatpush1.msra.mxu0 0.0
    %2605 = vmatprep.subr.mxu0 0.0
    %2606 = vmatpush1.msra.mxu0 0.0
    %2607 = vmatprep.subr.mxu0 0.0
    %2608 = vmatpush1.msra.mxu0 0.0
    %2609 = vmatprep.subr.mxu0 0.0
    %2610 = vmatpush1.msra.mxu0 0.0
    %2611 = vmatprep.subr.mxu0 0.0
    %2612 = vmatpush1.msra.mxu0 0.0
    %2613 = vmatprep.subr.mxu0 0.0
    %2614 = vmatpush1.msra.mxu0 0.0
    %2615 = vmatprep.subr.mxu0 0.0
    %2616 = vmatpush1.msra.mxu0 0.0
    %2617 = vmatprep.subr.mxu0 0.0
    %2618 = vmatpush1.msra.mxu0 0.0
    %2619 = vmatprep.subr.mxu0 0.0
    %2620 = vmatpush1.msra.mxu0 0.0
    %2621 = vmatprep.subr.mxu0 0.0
    %2622 = vmatpush1.msra.mxu0 0.0
    %2623 = vmatprep.subr.mxu0 0.0
    %2624 = vmatpush1.msra.mxu0 0.0
    %2625 = vmatprep.subr.mxu0 %v2587
    %2626 = vmatpush1.msra.mxu0 %v2585
    %2627 = vmatprep.subr.mxu0 0.0
    %2628 = vmatpush2.msra.mxu0 0.0
    %2629 = vmatprep.subr.mxu0 0.0
    %2630 = vmatpush2.msra.mxu0 0.0
    %2631 = vmatprep.subr.mxu0 0.0
    %2632 = vmatpush2.msra.mxu0 0.0
    %2633 = vmatprep.subr.mxu0 0.0
    %2634 = vmatpush2.msra.mxu0 0.0
    %2635 = vmatprep.subr.mxu0 0.0
    %2636 = vmatpush2.msra.mxu0 0.0
    %2637 = vmatprep.subr.mxu0 0.0
    %2638 = vmatpush2.msra.mxu0 0.0
    %2639 = vmatprep.subr.mxu0 0.0
    %2640 = vmatpush2.msra.mxu0 0.0
    %2641 = vmatprep.subr.mxu0 0.0
    %2642 = vmatpush2.msra.mxu0 0.0
    %2643 = vmatprep.subr.mxu0 0.0
    %2644 = vmatpush2.msra.mxu0 0.0
    %2645 = vmatprep.subr.mxu0 0.0
    %2646 = vmatpush2.msra.mxu0 0.0
    %2647 = vmatprep.subr.mxu0 0.0
    %2648 = vmatpush2.msra.mxu0 0.0
    %2649 = vmatprep.subr.mxu0 0.0
    %2650 = vmatpush2.msra.mxu0 0.0
    %2651 = vmatprep.subr.mxu0 0.0
    %2652 = vmatpush2.msra.mxu0 0.0
    %2653 = vmatprep.subr.mxu0 0.0
    %2654 = vmatpush2.msra.mxu0 0.0
    %2655 = vmatprep.subr.mxu0 0.0
    %2656 = vmatpush2.msra.mxu0 0.0
    %2657 = vmatprep.subr.mxu0 0.0
    %2658 = vmatpush2.msra.mxu0 0.0
    %2659 = vmatprep.mubr.f32.mxu0 0.0
    %2660 = vmatmul.mubr.f32.gmra.mxu0 %v2583
    %v2661 = vpop.f32.mrf.mxu0
    %v2662 = vadd.f32 0.0, %v2661
    %v2663 = vpop.f32.mrf.mxu0
    %v2664 = vadd.f32 0.0, %v2663
    %2665 = vdwg.mxu0
    %2666 = vmatprep.subr.mxu0 0.0
    %2667 = vmatpush1.msra.mxu0 0.0
    %2668 = vmatprep.subr.mxu0 0.0
    %2669 = vmatpush1.msra.mxu0 0.0
    %2670 = vmatprep.subr.mxu0 0.0
    %2671 = vmatpush1.msra.mxu0 0.0
    %2672 = vmatprep.subr.mxu0 0.0
    %2673 = vmatpush1.msra.mxu0 0.0
    %2674 = vmatprep.subr.mxu0 0.0
    %2675 = vmatpush1.msra.mxu0 0.0
    %2676 = vmatprep.subr.mxu0 0.0
    %2677 = vmatpush1.msra.mxu0 0.0
    %2678 = vmatprep.subr.mxu0 0.0
    %2679 = vmatpush1.msra.mxu0 0.0
    %2680 = vmatprep.subr.mxu0 0.0
    %2681 = vmatpush1.msra.mxu0 0.0
    %2682 = vmatprep.subr.mxu0 0.0
    %2683 = vmatpush1.msra.mxu0 0.0
    %2684 = vmatprep.subr.mxu0 0.0
    %2685 = vmatpush1.msra.mxu0 0.0
    %2686 = vmatprep.subr.mxu0 0.0
    %2687 = vmatpush1.msra.mxu0 0.0
    %2688 = vmatprep.subr.mxu0 0.0
    %2689 = vmatpush1.msra.mxu0 0.0
    %2690 = vmatprep.subr.mxu0 0.0
    %2691 = vmatpush1.msra.mxu0 0.0
    %2692 = vmatprep.subr.mxu0 0.0
    %2693 = vmatpush1.msra.mxu0 0.0
    %2694 = vmatprep.subr.mxu0 0.0
    %2695 = vmatpush1.msra.mxu0 0.0
    %2696 = vmatprep.subr.mxu0 %v2591
    %2697 = vmatpush1.msra.mxu0 %v2589
    %2698 = vmatprep.subr.mxu0 0.0
    %2699 = vmatpush2.msra.mxu0 0.0
    %2700 = vmatprep.subr.mxu0 0.0
    %2701 = vmatpush2.msra.mxu0 0.0
    %2702 = vmatprep.subr.mxu0 0.0
    %2703 = vmatpush2.msra.mxu0 0.0
    %2704 = vmatprep.subr.mxu0 0.0
    %2705 = vmatpush2.msra.mxu0 0.0
    %2706 = vmatprep.subr.mxu0 0.0
    %2707 = vmatpush2.msra.mxu0 0.0
    %2708 = vmatprep.subr.mxu0 0.0
    %2709 = vmatpush2.msra.mxu0 0.0
    %2710 = vmatprep.subr.mxu0 0.0
    %2711 = vmatpush2.msra.mxu0 0.0
    %2712 = vmatprep.subr.mxu0 0.0
    %2713 = vmatpush2.msra.mxu0 0.0
    %2714 = vmatprep.subr.mxu0 0.0
    %2715 = vmatpush2.msra.mxu0 0.0
    %2716 = vmatprep.subr.mxu0 0.0
    %2717 = vmatpush2.msra.mxu0 0.0
    %2718 = vmatprep.subr.mxu0 0.0
    %2719 = vmatpush2.msra.mxu0 0.0
    %2720 = vmatprep.subr.mxu0 0.0
    %2721 = vmatpush2.msra.mxu0 0.0
    %2722 = vmatprep.subr.mxu0 0.0
    %2723 = vmatpush2.msra.mxu0 0.0
    %2724 = vmatprep.subr.mxu0 0.0
    %2725 = vmatpush2.msra.mxu0 0.0
    %2726 = vmatprep.subr.mxu0 0.0
    %2727 = vmatpush2.msra.mxu0 0.0
    %2728 = vmatprep.subr.mxu0 0.0
    %2729 = vmatpush2.msra.mxu0 0.0
    %2730 = vmatprep.mubr.f32.mxu0 0.0
    %2731 = vmatmul.mubr.f32.gmra.mxu0 %v2583
    %v2732 = vpop.f32.mrf.mxu0
    %v2733 = vpop.f32.mrf.mxu0
    %v2734 = vadd.f32 0.0, %v2733
    %2735 = vdwg.mxu0
    %2736 = vmatprep.subr.mxu0 0.0
    %2737 = vmatpush1.msra.mxu0 0.0
    %2738 = vmatprep.subr.mxu0 0.0
    %2739 = vmatpush1.msra.mxu0 0.0
    %2740 = vmatprep.subr.mxu0 0.0
    %2741 = vmatpush1.msra.mxu0 0.0
    %2742 = vmatprep.subr.mxu0 0.0
    %2743 = vmatpush1.msra.mxu0 0.0
    %2744 = vmatprep.subr.mxu0 0.0
    %2745 = vmatpush1.msra.mxu0 0.0
    %2746 = vmatprep.subr.mxu0 0.0
    %2747 = vmatpush1.msra.mxu0 0.0
    %2748 = vmatprep.subr.mxu0 0.0
    %2749 = vmatpush1.msra.mxu0 0.0
    %2750 = vmatprep.subr.mxu0 0.0
    %2751 = vmatpush1.msra.mxu0 0.0
    %2752 = vmatprep.subr.mxu0 0.0
    %2753 = vmatpush1.msra.mxu0 0.0
    %2754 = vmatprep.subr.mxu0 0.0
    %2755 = vmatpush1.msra.mxu0 0.0
    %2756 = vmatprep.subr.mxu0 0.0
    %2757 = vmatpush1.msra.mxu0 0.0
    %2758 = vmatprep.subr.mxu0 0.0
    %2759 = vmatpush1.msra.mxu0 0.0
    %2760 = vmatprep.subr.mxu0 0.0
    %2761 = vmatpush1.msra.mxu0 0.0
    %2762 = vmatprep.subr.mxu0 0.0
    %2763 = vmatpush1.msra.mxu0 0.0
    %2764 = vmatprep.subr.mxu0 0.0
    %2765 = vmatpush1.msra.mxu0 0.0
    %2766 = vmatprep.subr.mxu0 0.0
    %2767 = vmatpush1.msra.mxu0 %v2593
    %2768 = vmatprep.subr.mxu0 0.0
    %2769 = vmatpush2.msra.mxu0 0.0
    %2770 = vmatprep.subr.mxu0 0.0
    %2771 = vmatpush2.msra.mxu0 0.0
    %2772 = vmatprep.subr.mxu0 0.0
    %2773 = vmatpush2.msra.mxu0 0.0
    %2774 = vmatprep.subr.mxu0 0.0
    %2775 = vmatpush2.msra.mxu0 0.0
    %2776 = vmatprep.subr.mxu0 0.0
    %2777 = vmatpush2.msra.mxu0 0.0
    %2778 = vmatprep.subr.mxu0 0.0
    %2779 = vmatpush2.msra.mxu0 0.0
    %2780 = vmatprep.subr.mxu0 0.0
    %2781 = vmatpush2.msra.mxu0 0.0
    %2782 = vmatprep.subr.mxu0 0.0
    %2783 = vmatpush2.msra.mxu0 0.0
    %2784 = vmatprep.subr.mxu0 0.0
    %2785 = vmatpush2.msra.mxu0 0.0
    %2786 = vmatprep.subr.mxu0 0.0
    %2787 = vmatpush2.msra.mxu0 0.0
    %2788 = vmatprep.subr.mxu0 0.0
    %2789 = vmatpush2.msra.mxu0 0.0
    %2790 = vmatprep.subr.mxu0 0.0
    %2791 = vmatpush2.msra.mxu0 0.0
    %2792 = vmatprep.subr.mxu0 0.0
    %2793 = vmatpush2.msra.mxu0 0.0
    %2794 = vmatprep.subr.mxu0 0.0
    %2795 = vmatpush2.msra.mxu0 0.0
    %2796 = vmatprep.subr.mxu0 0.0
    %2797 = vmatpush2.msra.mxu0 0.0
    %2798 = vmatprep.subr.mxu0 0.0
    %2799 = vmatpush2.msra.mxu0 0.0
    %2800 = vmatprep.mubr.f32.mxu0 0.0
    %2801 = vmatmul.mubr.f32.gmra.mxu0 %v2583
    %v2802 = vpop.f32.mrf.mxu0
    %v2803 = vadd.f32 0.0, %v2802
    %v2804 = vpop.f32.mrf.mxu0
    %2805 = vdwg.mxu0
    %v2806 = vadd.f32 %v2549, %v2662
    %v2807 = vadd.f32 %v2550, %v2664
    %v2808 = vadd.f32 %v2551, %v2734
    %v2809 = vadd.f32 %v2552, %v2803
    %v2810 = vld [vmem:[%s0] sm:$0x77]
    %v2811 = vld [vmem:[%s0 + $0x8] sm:$0x77]
    %v2812 = vld [vmem:[%s0 + $0x10] sm:$0x77]
    %s2813 = scalar_lea.vmem %s1, 88
    %v2814 = vld [vmem:[%s2813] sm:$0xff]
    %v2818 = vcombine.high %v2810, %v2810
    %v2819 = vcombine.high %v2811, %v2811
    %v2820 = vcombine.high %v2812, %v2812
    %2821 = vrot.lane.b32.xlu0 %v2810, 95
    %v2822 = vpop.permute.xlu0 %2821
    %2823 = vrot.lane.b32.xlu0 %v2818, 95
    %v2824 = vpop.permute.xlu0 %2823
    %2825 = vrot.lane.b32.xlu0 %v2811, 95
    %v2826 = vpop.permute.xlu0 %2825
    %2827 = vrot.lane.b32.xlu0 %v2819, 95
    %v2828 = vpop.permute.xlu0 %2827
    %2829 = vrot.lane.b32.xlu0 %v2812, 95
    %v2830 = vpop.permute.xlu0 %2829
    %2831 = vrot.lane.b32.xlu0 %v2820, 95
    %v2832 = vpop.permute.xlu0 %2831
    %vm2833 = vcmask 777216
    %v2834 = vsel %vm2833, %v2822, %v2824
    %v2835 = vsel %vm2833, %v2824, %v2826
    %v2836 = vsel %vm2833, %v2826, %v2828
    %v2837 = vsel %vm2833, %v2828, %v2830
    %v2838 = vsel %vm2833, %v2830, %v2832
    %v2840 = vsel %vm46, %v2814, 0
    %v2842 = vsel %vm50, %v2834, 0
    %v2844 = vsel %vm50, %v2835, 0
    %v2846 = vsel %vm50, %v2836, 0
    %v2848 = vsel %vm50, %v2837, 0
    %v2850 = vsel %vm50, %v2838, 0
    %2852 = vmatprep.subr.mxu0 0.0
    %2853 = vmatpush1.msra.mxu0 0.0
    %2854 = vmatprep.subr.mxu0 0.0
    %2855 = vmatpush1.msra.mxu0 0.0
    %2856 = vmatprep.subr.mxu0 0.0
    %2857 = vmatpush1.msra.mxu0 0.0
    %2858 = vmatprep.subr.mxu0 0.0
    %2859 = vmatpush1.msra.mxu0 0.0
    %2860 = vmatprep.subr.mxu0 0.0
    %2861 = vmatpush1.msra.mxu0 0.0
    %2862 = vmatprep.subr.mxu0 0.0
    %2863 = vmatpush1.msra.mxu0 0.0
    %2864 = vmatprep.subr.mxu0 0.0
    %2865 = vmatpush1.msra.mxu0 0.0
    %2866 = vmatprep.subr.mxu0 0.0
    %2867 = vmatpush1.msra.mxu0 0.0
    %2868 = vmatprep.subr.mxu0 0.0
    %2869 = vmatpush1.msra.mxu0 0.0
    %2870 = vmatprep.subr.mxu0 0.0
    %2871 = vmatpush1.msra.mxu0 0.0
    %2872 = vmatprep.subr.mxu0 0.0
    %2873 = vmatpush1.msra.mxu0 0.0
    %2874 = vmatprep.subr.mxu0 0.0
    %2875 = vmatpush1.msra.mxu0 0.0
    %2876 = vmatprep.subr.mxu0 0.0
    %2877 = vmatpush1.msra.mxu0 0.0
    %2878 = vmatprep.subr.mxu0 0.0
    %2879 = vmatpush1.msra.mxu0 0.0
    %2880 = vmatprep.subr.mxu0 0.0
    %2881 = vmatpush1.msra.mxu0 0.0
    %2882 = vmatprep.subr.mxu0 %v2844
    %2883 = vmatpush1.msra.mxu0 %v2842
    %2884 = vmatprep.subr.mxu0 0.0
    %2885 = vmatpush2.msra.mxu0 0.0
    %2886 = vmatprep.subr.mxu0 0.0
    %2887 = vmatpush2.msra.mxu0 0.0
    %2888 = vmatprep.subr.mxu0 0.0
    %2889 = vmatpush2.msra.mxu0 0.0
    %2890 = vmatprep.subr.mxu0 0.0
    %2891 = vmatpush2.msra.mxu0 0.0
    %2892 = vmatprep.subr.mxu0 0.0
    %2893 = vmatpush2.msra.mxu0 0.0
    %2894 = vmatprep.subr.mxu0 0.0
    %2895 = vmatpush2.msra.mxu0 0.0
    %2896 = vmatprep.subr.mxu0 0.0
    %2897 = vmatpush2.msra.mxu0 0.0
    %2898 = vmatprep.subr.mxu0 0.0
    %2899 = vmatpush2.msra.mxu0 0.0
    %2900 = vmatprep.subr.mxu0 0.0
    %2901 = vmatpush2.msra.mxu0 0.0
    %2902 = vmatprep.subr.mxu0 0.0
    %2903 = vmatpush2.msra.mxu0 0.0
    %2904 = vmatprep.subr.mxu0 0.0
    %2905 = vmatpush2.msra.mxu0 0.0
    %2906 = vmatprep.subr.mxu0 0.0
    %2907 = vmatpush2.msra.mxu0 0.0
    %2908 = vmatprep.subr.mxu0 0.0
    %2909 = vmatpush2.msra.mxu0 0.0
    %2910 = vmatprep.subr.mxu0 0.0
    %2911 = vmatpush2.msra.mxu0 0.0
    %2912 = vmatprep.subr.mxu0 0.0
    %2913 = vmatpush2.msra.mxu0 0.0
    %2914 = vmatprep.subr.mxu0 0.0
    %2915 = vmatpush2.msra.mxu0 0.0
    %2916 = vmatprep.mubr.f32.mxu0 0.0
    %2917 = vmatmul.mubr.f32.gmra.mxu0 %v2840
    %v2918 = vpop.f32.mrf.mxu0
    %v2919 = vadd.f32 0.0, %v2918
    %v2920 = vpop.f32.mrf.mxu0
    %v2921 = vadd.f32 0.0, %v2920
    %2922 = vdwg.mxu0
    %2923 = vmatprep.subr.mxu0 0.0
    %2924 = vmatpush1.msra.mxu0 0.0
    %2925 = vmatprep.subr.mxu0 0.0
    %2926 = vmatpush1.msra.mxu0 0.0
    %2927 = vmatprep.subr.mxu0 0.0
    %2928 = vmatpush1.msra.mxu0 0.0
    %2929 = vmatprep.subr.mxu0 0.0
    %2930 = vmatpush1.msra.mxu0 0.0
    %2931 = vmatprep.subr.mxu0 0.0
    %2932 = vmatpush1.msra.mxu0 0.0
    %2933 = vmatprep.subr.mxu0 0.0
    %2934 = vmatpush1.msra.mxu0 0.0
    %2935 = vmatprep.subr.mxu0 0.0
    %2936 = vmatpush1.msra.mxu0 0.0
    %2937 = vmatprep.subr.mxu0 0.0
    %2938 = vmatpush1.msra.mxu0 0.0
    %2939 = vmatprep.subr.mxu0 0.0
    %2940 = vmatpush1.msra.mxu0 0.0
    %2941 = vmatprep.subr.mxu0 0.0
    %2942 = vmatpush1.msra.mxu0 0.0
    %2943 = vmatprep.subr.mxu0 0.0
    %2944 = vmatpush1.msra.mxu0 0.0
    %2945 = vmatprep.subr.mxu0 0.0
    %2946 = vmatpush1.msra.mxu0 0.0
    %2947 = vmatprep.subr.mxu0 0.0
    %2948 = vmatpush1.msra.mxu0 0.0
    %2949 = vmatprep.subr.mxu0 0.0
    %2950 = vmatpush1.msra.mxu0 0.0
    %2951 = vmatprep.subr.mxu0 0.0
    %2952 = vmatpush1.msra.mxu0 0.0
    %2953 = vmatprep.subr.mxu0 %v2848
    %2954 = vmatpush1.msra.mxu0 %v2846
    %2955 = vmatprep.subr.mxu0 0.0
    %2956 = vmatpush2.msra.mxu0 0.0
    %2957 = vmatprep.subr.mxu0 0.0
    %2958 = vmatpush2.msra.mxu0 0.0
    %2959 = vmatprep.subr.mxu0 0.0
    %2960 = vmatpush2.msra.mxu0 0.0
    %2961 = vmatprep.subr.mxu0 0.0
    %2962 = vmatpush2.msra.mxu0 0.0
    %2963 = vmatprep.subr.mxu0 0.0
    %2964 = vmatpush2.msra.mxu0 0.0
    %2965 = vmatprep.subr.mxu0 0.0
    %2966 = vmatpush2.msra.mxu0 0.0
    %2967 = vmatprep.subr.mxu0 0.0
    %2968 = vmatpush2.msra.mxu0 0.0
    %2969 = vmatprep.subr.mxu0 0.0
    %2970 = vmatpush2.msra.mxu0 0.0
    %2971 = vmatprep.subr.mxu0 0.0
    %2972 = vmatpush2.msra.mxu0 0.0
    %2973 = vmatprep.subr.mxu0 0.0
    %2974 = vmatpush2.msra.mxu0 0.0
    %2975 = vmatprep.subr.mxu0 0.0
    %2976 = vmatpush2.msra.mxu0 0.0
    %2977 = vmatprep.subr.mxu0 0.0
    %2978 = vmatpush2.msra.mxu0 0.0
    %2979 = vmatprep.subr.mxu0 0.0
    %2980 = vmatpush2.msra.mxu0 0.0
    %2981 = vmatprep.subr.mxu0 0.0
    %2982 = vmatpush2.msra.mxu0 0.0
    %2983 = vmatprep.subr.mxu0 0.0
    %2984 = vmatpush2.msra.mxu0 0.0
    %2985 = vmatprep.subr.mxu0 0.0
    %2986 = vmatpush2.msra.mxu0 0.0
    %2987 = vmatprep.mubr.f32.mxu0 0.0
    %2988 = vmatmul.mubr.f32.gmra.mxu0 %v2840
    %v2989 = vpop.f32.mrf.mxu0
    %v2990 = vpop.f32.mrf.mxu0
    %v2991 = vadd.f32 0.0, %v2990
    %2992 = vdwg.mxu0
    %2993 = vmatprep.subr.mxu0 0.0
    %2994 = vmatpush1.msra.mxu0 0.0
    %2995 = vmatprep.subr.mxu0 0.0
    %2996 = vmatpush1.msra.mxu0 0.0
    %2997 = vmatprep.subr.mxu0 0.0
    %2998 = vmatpush1.msra.mxu0 0.0
    %2999 = vmatprep.subr.mxu0 0.0
    %3000 = vmatpush1.msra.mxu0 0.0
    %3001 = vmatprep.subr.mxu0 0.0
    %3002 = vmatpush1.msra.mxu0 0.0
    %3003 = vmatprep.subr.mxu0 0.0
    %3004 = vmatpush1.msra.mxu0 0.0
    %3005 = vmatprep.subr.mxu0 0.0
    %3006 = vmatpush1.msra.mxu0 0.0
    %3007 = vmatprep.subr.mxu0 0.0
    %3008 = vmatpush1.msra.mxu0 0.0
    %3009 = vmatprep.subr.mxu0 0.0
    %3010 = vmatpush1.msra.mxu0 0.0
    %3011 = vmatprep.subr.mxu0 0.0
    %3012 = vmatpush1.msra.mxu0 0.0
    %3013 = vmatprep.subr.mxu0 0.0
    %3014 = vmatpush1.msra.mxu0 0.0
    %3015 = vmatprep.subr.mxu0 0.0
    %3016 = vmatpush1.msra.mxu0 0.0
    %3017 = vmatprep.subr.mxu0 0.0
    %3018 = vmatpush1.msra.mxu0 0.0
    %3019 = vmatprep.subr.mxu0 0.0
    %3020 = vmatpush1.msra.mxu0 0.0
    %3021 = vmatprep.subr.mxu0 0.0
    %3022 = vmatpush1.msra.mxu0 0.0
    %3023 = vmatprep.subr.mxu0 0.0
    %3024 = vmatpush1.msra.mxu0 %v2850
    %3025 = vmatprep.subr.mxu0 0.0
    %3026 = vmatpush2.msra.mxu0 0.0
    %3027 = vmatprep.subr.mxu0 0.0
    %3028 = vmatpush2.msra.mxu0 0.0
    %3029 = vmatprep.subr.mxu0 0.0
    %3030 = vmatpush2.msra.mxu0 0.0
    %3031 = vmatprep.subr.mxu0 0.0
    %3032 = vmatpush2.msra.mxu0 0.0
    %3033 = vmatprep.subr.mxu0 0.0
    %3034 = vmatpush2.msra.mxu0 0.0
    %3035 = vmatprep.subr.mxu0 0.0
    %3036 = vmatpush2.msra.mxu0 0.0
    %3037 = vmatprep.subr.mxu0 0.0
    %3038 = vmatpush2.msra.mxu0 0.0
    %3039 = vmatprep.subr.mxu0 0.0
    %3040 = vmatpush2.msra.mxu0 0.0
    %3041 = vmatprep.subr.mxu0 0.0
    %3042 = vmatpush2.msra.mxu0 0.0
    %3043 = vmatprep.subr.mxu0 0.0
    %3044 = vmatpush2.msra.mxu0 0.0
    %3045 = vmatprep.subr.mxu0 0.0
    %3046 = vmatpush2.msra.mxu0 0.0
    %3047 = vmatprep.subr.mxu0 0.0
    %3048 = vmatpush2.msra.mxu0 0.0
    %3049 = vmatprep.subr.mxu0 0.0
    %3050 = vmatpush2.msra.mxu0 0.0
    %3051 = vmatprep.subr.mxu0 0.0
    %3052 = vmatpush2.msra.mxu0 0.0
    %3053 = vmatprep.subr.mxu0 0.0
    %3054 = vmatpush2.msra.mxu0 0.0
    %3055 = vmatprep.subr.mxu0 0.0
    %3056 = vmatpush2.msra.mxu0 0.0
    %3057 = vmatprep.mubr.f32.mxu0 0.0
    %3058 = vmatmul.mubr.f32.gmra.mxu0 %v2840
    %v3059 = vpop.f32.mrf.mxu0
    %v3060 = vadd.f32 0.0, %v3059
    %v3061 = vpop.f32.mrf.mxu0
    %3062 = vdwg.mxu0
    %v3063 = vadd.f32 %v2806, %v2919
    %v3064 = vadd.f32 %v2807, %v2921
    %v3065 = vadd.f32 %v2808, %v2991
    %v3066 = vadd.f32 %v2809, %v3060
    %v3067 = vld [vmem:[%s0] sm:$0x77]
    %v3068 = vld [vmem:[%s0 + $0x8] sm:$0x77]
    %v3069 = vld [vmem:[%s0 + $0x10] sm:$0x77]
    %s3070 = scalar_lea.vmem %s1, 96
    %v3071 = vld [vmem:[%s3070] sm:$0xff]
    %v3075 = vcombine.high %v3067, %v3067
    %v3076 = vcombine.high %v3068, %v3068
    %v3077 = vcombine.high %v3069, %v3069
    %3078 = vrot.lane.b32.xlu0 %v3067, 94
    %v3079 = vpop.permute.xlu0 %3078
    %3080 = vrot.lane.b32.xlu0 %v3075, 94
    %v3081 = vpop.permute.xlu0 %3080
    %3082 = vrot.lane.b32.xlu0 %v3068, 94
    %v3083 = vpop.permute.xlu0 %3082
    %3084 = vrot.lane.b32.xlu0 %v3076, 94
    %v3085 = vpop.permute.xlu0 %3084
    %3086 = vrot.lane.b32.xlu0 %v3069, 94
    %v3087 = vpop.permute.xlu0 %3086
    %3088 = vrot.lane.b32.xlu0 %v3077, 94
    %v3089 = vpop.permute.xlu0 %3088
    %vm3090 = vcmask 769024
    %v3091 = vsel %vm3090, %v3079, %v3081
    %v3092 = vsel %vm3090, %v3081, %v3083
    %v3093 = vsel %vm3090, %v3083, %v3085
    %v3094 = vsel %vm3090, %v3085, %v3087
    %v3095 = vsel %vm3090, %v3087, %v3089
    %v3097 = vsel %vm46, %v3071, 0
    %v3099 = vsel %vm50, %v3091, 0
    %v3101 = vsel %vm50, %v3092, 0
    %v3103 = vsel %vm50, %v3093, 0
    %v3105 = vsel %vm50, %v3094, 0
    %v3107 = vsel %vm50, %v3095, 0
    %3109 = vmatprep.subr.mxu0 0.0
    %3110 = vmatpush1.msra.mxu0 0.0
    %3111 = vmatprep.subr.mxu0 0.0
    %3112 = vmatpush1.msra.mxu0 0.0
    %3113 = vmatprep.subr.mxu0 0.0
    %3114 = vmatpush1.msra.mxu0 0.0
    %3115 = vmatprep.subr.mxu0 0.0
    %3116 = vmatpush1.msra.mxu0 0.0
    %3117 = vmatprep.subr.mxu0 0.0
    %3118 = vmatpush1.msra.mxu0 0.0
    %3119 = vmatprep.subr.mxu0 0.0
    %3120 = vmatpush1.msra.mxu0 0.0
    %3121 = vmatprep.subr.mxu0 0.0
    %3122 = vmatpush1.msra.mxu0 0.0
    %3123 = vmatprep.subr.mxu0 0.0
    %3124 = vmatpush1.msra.mxu0 0.0
    %3125 = vmatprep.subr.mxu0 0.0
    %3126 = vmatpush1.msra.mxu0 0.0
    %3127 = vmatprep.subr.mxu0 0.0
    %3128 = vmatpush1.msra.mxu0 0.0
    %3129 = vmatprep.subr.mxu0 0.0
    %3130 = vmatpush1.msra.mxu0 0.0
    %3131 = vmatprep.subr.mxu0 0.0
    %3132 = vmatpush1.msra.mxu0 0.0
    %3133 = vmatprep.subr.mxu0 0.0
    %3134 = vmatpush1.msra.mxu0 0.0
    %3135 = vmatprep.subr.mxu0 0.0
    %3136 = vmatpush1.msra.mxu0 0.0
    %3137 = vmatprep.subr.mxu0 0.0
    %3138 = vmatpush1.msra.mxu0 0.0
    %3139 = vmatprep.subr.mxu0 %v3101
    %3140 = vmatpush1.msra.mxu0 %v3099
    %3141 = vmatprep.subr.mxu0 0.0
    %3142 = vmatpush2.msra.mxu0 0.0
    %3143 = vmatprep.subr.mxu0 0.0
    %3144 = vmatpush2.msra.mxu0 0.0
    %3145 = vmatprep.subr.mxu0 0.0
    %3146 = vmatpush2.msra.mxu0 0.0
    %3147 = vmatprep.subr.mxu0 0.0
    %3148 = vmatpush2.msra.mxu0 0.0
    %3149 = vmatprep.subr.mxu0 0.0
    %3150 = vmatpush2.msra.mxu0 0.0
    %3151 = vmatprep.subr.mxu0 0.0
    %3152 = vmatpush2.msra.mxu0 0.0
    %3153 = vmatprep.subr.mxu0 0.0
    %3154 = vmatpush2.msra.mxu0 0.0
    %3155 = vmatprep.subr.mxu0 0.0
    %3156 = vmatpush2.msra.mxu0 0.0
    %3157 = vmatprep.subr.mxu0 0.0
    %3158 = vmatpush2.msra.mxu0 0.0
    %3159 = vmatprep.subr.mxu0 0.0
    %3160 = vmatpush2.msra.mxu0 0.0
    %3161 = vmatprep.subr.mxu0 0.0
    %3162 = vmatpush2.msra.mxu0 0.0
    %3163 = vmatprep.subr.mxu0 0.0
    %3164 = vmatpush2.msra.mxu0 0.0
    %3165 = vmatprep.subr.mxu0 0.0
    %3166 = vmatpush2.msra.mxu0 0.0
    %3167 = vmatprep.subr.mxu0 0.0
    %3168 = vmatpush2.msra.mxu0 0.0
    %3169 = vmatprep.subr.mxu0 0.0
    %3170 = vmatpush2.msra.mxu0 0.0
    %3171 = vmatprep.subr.mxu0 0.0
    %3172 = vmatpush2.msra.mxu0 0.0
    %3173 = vmatprep.mubr.f32.mxu0 0.0
    %3174 = vmatmul.mubr.f32.gmra.mxu0 %v3097
    %v3175 = vpop.f32.mrf.mxu0
    %v3176 = vadd.f32 0.0, %v3175
    %v3177 = vpop.f32.mrf.mxu0
    %v3178 = vadd.f32 0.0, %v3177
    %3179 = vdwg.mxu0
    %3180 = vmatprep.subr.mxu0 0.0
    %3181 = vmatpush1.msra.mxu0 0.0
    %3182 = vmatprep.subr.mxu0 0.0
    %3183 = vmatpush1.msra.mxu0 0.0
    %3184 = vmatprep.subr.mxu0 0.0
    %3185 = vmatpush1.msra.mxu0 0.0
    %3186 = vmatprep.subr.mxu0 0.0
    %3187 = vmatpush1.msra.mxu0 0.0
    %3188 = vmatprep.subr.mxu0 0.0
    %3189 = vmatpush1.msra.mxu0 0.0
    %3190 = vmatprep.subr.mxu0 0.0
    %3191 = vmatpush1.msra.mxu0 0.0
    %3192 = vmatprep.subr.mxu0 0.0
    %3193 = vmatpush1.msra.mxu0 0.0
    %3194 = vmatprep.subr.mxu0 0.0
    %3195 = vmatpush1.msra.mxu0 0.0
    %3196 = vmatprep.subr.mxu0 0.0
    %3197 = vmatpush1.msra.mxu0 0.0
    %3198 = vmatprep.subr.mxu0 0.0
    %3199 = vmatpush1.msra.mxu0 0.0
    %3200 = vmatprep.subr.mxu0 0.0
    %3201 = vmatpush1.msra.mxu0 0.0
    %3202 = vmatprep.subr.mxu0 0.0
    %3203 = vmatpush1.msra.mxu0 0.0
    %3204 = vmatprep.subr.mxu0 0.0
    %3205 = vmatpush1.msra.mxu0 0.0
    %3206 = vmatprep.subr.mxu0 0.0
    %3207 = vmatpush1.msra.mxu0 0.0
    %3208 = vmatprep.subr.mxu0 0.0
    %3209 = vmatpush1.msra.mxu0 0.0
    %3210 = vmatprep.subr.mxu0 %v3105
    %3211 = vmatpush1.msra.mxu0 %v3103
    %3212 = vmatprep.subr.mxu0 0.0
    %3213 = vmatpush2.msra.mxu0 0.0
    %3214 = vmatprep.subr.mxu0 0.0
    %3215 = vmatpush2.msra.mxu0 0.0
    %3216 = vmatprep.subr.mxu0 0.0
    %3217 = vmatpush2.msra.mxu0 0.0
    %3218 = vmatprep.subr.mxu0 0.0
    %3219 = vmatpush2.msra.mxu0 0.0
    %3220 = vmatprep.subr.mxu0 0.0
    %3221 = vmatpush2.msra.mxu0 0.0
    %3222 = vmatprep.subr.mxu0 0.0
    %3223 = vmatpush2.msra.mxu0 0.0
    %3224 = vmatprep.subr.mxu0 0.0
    %3225 = vmatpush2.msra.mxu0 0.0
    %3226 = vmatprep.subr.mxu0 0.0
    %3227 = vmatpush2.msra.mxu0 0.0
    %3228 = vmatprep.subr.mxu0 0.0
    %3229 = vmatpush2.msra.mxu0 0.0
    %3230 = vmatprep.subr.mxu0 0.0
    %3231 = vmatpush2.msra.mxu0 0.0
    %3232 = vmatprep.subr.mxu0 0.0
    %3233 = vmatpush2.msra.mxu0 0.0
    %3234 = vmatprep.subr.mxu0 0.0
    %3235 = vmatpush2.msra.mxu0 0.0
    %3236 = vmatprep.subr.mxu0 0.0
    %3237 = vmatpush2.msra.mxu0 0.0
    %3238 = vmatprep.subr.mxu0 0.0
    %3239 = vmatpush2.msra.mxu0 0.0
    %3240 = vmatprep.subr.mxu0 0.0
    %3241 = vmatpush2.msra.mxu0 0.0
    %3242 = vmatprep.subr.mxu0 0.0
    %3243 = vmatpush2.msra.mxu0 0.0
    %3244 = vmatprep.mubr.f32.mxu0 0.0
    %3245 = vmatmul.mubr.f32.gmra.mxu0 %v3097
    %v3246 = vpop.f32.mrf.mxu0
    %v3247 = vpop.f32.mrf.mxu0
    %v3248 = vadd.f32 0.0, %v3247
    %3249 = vdwg.mxu0
    %3250 = vmatprep.subr.mxu0 0.0
    %3251 = vmatpush1.msra.mxu0 0.0
    %3252 = vmatprep.subr.mxu0 0.0
    %3253 = vmatpush1.msra.mxu0 0.0
    %3254 = vmatprep.subr.mxu0 0.0
    %3255 = vmatpush1.msra.mxu0 0.0
    %3256 = vmatprep.subr.mxu0 0.0
    %3257 = vmatpush1.msra.mxu0 0.0
    %3258 = vmatprep.subr.mxu0 0.0
    %3259 = vmatpush1.msra.mxu0 0.0
    %3260 = vmatprep.subr.mxu0 0.0
    %3261 = vmatpush1.msra.mxu0 0.0
    %3262 = vmatprep.subr.mxu0 0.0
    %3263 = vmatpush1.msra.mxu0 0.0
    %3264 = vmatprep.subr.mxu0 0.0
    %3265 = vmatpush1.msra.mxu0 0.0
    %3266 = vmatprep.subr.mxu0 0.0
    %3267 = vmatpush1.msra.mxu0 0.0
    %3268 = vmatprep.subr.mxu0 0.0
    %3269 = vmatpush1.msra.mxu0 0.0
    %3270 = vmatprep.subr.mxu0 0.0
    %3271 = vmatpush1.msra.mxu0 0.0
    %3272 = vmatprep.subr.mxu0 0.0
    %3273 = vmatpush1.msra.mxu0 0.0
    %3274 = vmatprep.subr.mxu0 0.0
    %3275 = vmatpush1.msra.mxu0 0.0
    %3276 = vmatprep.subr.mxu0 0.0
    %3277 = vmatpush1.msra.mxu0 0.0
    %3278 = vmatprep.subr.mxu0 0.0
    %3279 = vmatpush1.msra.mxu0 0.0
    %3280 = vmatprep.subr.mxu0 0.0
    %3281 = vmatpush1.msra.mxu0 %v3107
    %3282 = vmatprep.subr.mxu0 0.0
    %3283 = vmatpush2.msra.mxu0 0.0
    %3284 = vmatprep.subr.mxu0 0.0
    %3285 = vmatpush2.msra.mxu0 0.0
    %3286 = vmatprep.subr.mxu0 0.0
    %3287 = vmatpush2.msra.mxu0 0.0
    %3288 = vmatprep.subr.mxu0 0.0
    %3289 = vmatpush2.msra.mxu0 0.0
    %3290 = vmatprep.subr.mxu0 0.0
    %3291 = vmatpush2.msra.mxu0 0.0
    %3292 = vmatprep.subr.mxu0 0.0
    %3293 = vmatpush2.msra.mxu0 0.0
    %3294 = vmatprep.subr.mxu0 0.0
    %3295 = vmatpush2.msra.mxu0 0.0
    %3296 = vmatprep.subr.mxu0 0.0
    %3297 = vmatpush2.msra.mxu0 0.0
    %3298 = vmatprep.subr.mxu0 0.0
    %3299 = vmatpush2.msra.mxu0 0.0
    %3300 = vmatprep.subr.mxu0 0.0
    %3301 = vmatpush2.msra.mxu0 0.0
    %3302 = vmatprep.subr.mxu0 0.0
    %3303 = vmatpush2.msra.mxu0 0.0
    %3304 = vmatprep.subr.mxu0 0.0
    %3305 = vmatpush2.msra.mxu0 0.0
    %3306 = vmatprep.subr.mxu0 0.0
    %3307 = vmatpush2.msra.mxu0 0.0
    %3308 = vmatprep.subr.mxu0 0.0
    %3309 = vmatpush2.msra.mxu0 0.0
    %3310 = vmatprep.subr.mxu0 0.0
    %3311 = vmatpush2.msra.mxu0 0.0
    %3312 = vmatprep.subr.mxu0 0.0
    %3313 = vmatpush2.msra.mxu0 0.0
    %3314 = vmatprep.mubr.f32.mxu0 0.0
    %3315 = vmatmul.mubr.f32.gmra.mxu0 %v3097
    %v3316 = vpop.f32.mrf.mxu0
    %v3317 = vadd.f32 0.0, %v3316
    %v3318 = vpop.f32.mrf.mxu0
    %3319 = vdwg.mxu0
    %v3320 = vadd.f32 %v3063, %v3176
    %v3321 = vadd.f32 %v3064, %v3178
    %v3322 = vadd.f32 %v3065, %v3248
    %v3323 = vadd.f32 %v3066, %v3317
    %v3324 = vld [vmem:[%s0] sm:$0x77]
    %v3325 = vld [vmem:[%s0 + $0x8] sm:$0x77]
    %v3326 = vld [vmem:[%s0 + $0x10] sm:$0x77]
    %s3327 = scalar_lea.vmem %s1, 104
    %v3328 = vld [vmem:[%s3327] sm:$0xff]
    %v3332 = vcombine.high %v3324, %v3324
    %v3333 = vcombine.high %v3325, %v3325
    %v3334 = vcombine.high %v3326, %v3326
    %3335 = vrot.lane.b32.xlu0 %v3324, 93
    %v3336 = vpop.permute.xlu0 %3335
    %3337 = vrot.lane.b32.xlu0 %v3332, 93
    %v3338 = vpop.permute.xlu0 %3337
    %3339 = vrot.lane.b32.xlu0 %v3325, 93
    %v3340 = vpop.permute.xlu0 %3339
    %3341 = vrot.lane.b32.xlu0 %v3333, 93
    %v3342 = vpop.permute.xlu0 %3341
    %3343 = vrot.lane.b32.xlu0 %v3326, 93
    %v3344 = vpop.permute.xlu0 %3343
    %3345 = vrot.lane.b32.xlu0 %v3334, 93
    %v3346 = vpop.permute.xlu0 %3345
    %vm3347 = vcmask 760832
    %v3348 = vsel %vm3347, %v3336, %v3338
    %v3349 = vsel %vm3347, %v3338, %v3340
    %v3350 = vsel %vm3347, %v3340, %v3342
    %v3351 = vsel %vm3347, %v3342, %v3344
    %v3352 = vsel %vm3347, %v3344, %v3346
    %v3354 = vsel %vm46, %v3328, 0
    %v3356 = vsel %vm50, %v3348, 0
    %v3358 = vsel %vm50, %v3349, 0
    %v3360 = vsel %vm50, %v3350, 0
    %v3362 = vsel %vm50, %v3351, 0
    %v3364 = vsel %vm50, %v3352, 0
    %3366 = vmatprep.subr.mxu0 0.0
    %3367 = vmatpush1.msra.mxu0 0.0
    %3368 = vmatprep.subr.mxu0 0.0
    %3369 = vmatpush1.msra.mxu0 0.0
    %3370 = vmatprep.subr.mxu0 0.0
    %3371 = vmatpush1.msra.mxu0 0.0
    %3372 = vmatprep.subr.mxu0 0.0
    %3373 = vmatpush1.msra.mxu0 0.0
    %3374 = vmatprep.subr.mxu0 0.0
    %3375 = vmatpush1.msra.mxu0 0.0
    %3376 = vmatprep.subr.mxu0 0.0
    %3377 = vmatpush1.msra.mxu0 0.0
    %3378 = vmatprep.subr.mxu0 0.0
    %3379 = vmatpush1.msra.mxu0 0.0
    %3380 = vmatprep.subr.mxu0 0.0
    %3381 = vmatpush1.msra.mxu0 0.0
    %3382 = vmatprep.subr.mxu0 0.0
    %3383 = vmatpush1.msra.mxu0 0.0
    %3384 = vmatprep.subr.mxu0 0.0
    %3385 = vmatpush1.msra.mxu0 0.0
    %3386 = vmatprep.subr.mxu0 0.0
    %3387 = vmatpush1.msra.mxu0 0.0
    %3388 = vmatprep.subr.mxu0 0.0
    %3389 = vmatpush1.msra.mxu0 0.0
    %3390 = vmatprep.subr.mxu0 0.0
    %3391 = vmatpush1.msra.mxu0 0.0
    %3392 = vmatprep.subr.mxu0 0.0
    %3393 = vmatpush1.msra.mxu0 0.0
    %3394 = vmatprep.subr.mxu0 0.0
    %3395 = vmatpush1.msra.mxu0 0.0
    %3396 = vmatprep.subr.mxu0 %v3358
    %3397 = vmatpush1.msra.mxu0 %v3356
    %3398 = vmatprep.subr.mxu0 0.0
    %3399 = vmatpush2.msra.mxu0 0.0
    %3400 = vmatprep.subr.mxu0 0.0
    %3401 = vmatpush2.msra.mxu0 0.0
    %3402 = vmatprep.subr.mxu0 0.0
    %3403 = vmatpush2.msra.mxu0 0.0
    %3404 = vmatprep.subr.mxu0 0.0
    %3405 = vmatpush2.msra.mxu0 0.0
    %3406 = vmatprep.subr.mxu0 0.0
    %3407 = vmatpush2.msra.mxu0 0.0
    %3408 = vmatprep.subr.mxu0 0.0
    %3409 = vmatpush2.msra.mxu0 0.0
    %3410 = vmatprep.subr.mxu0 0.0
    %3411 = vmatpush2.msra.mxu0 0.0
    %3412 = vmatprep.subr.mxu0 0.0
    %3413 = vmatpush2.msra.mxu0 0.0
    %3414 = vmatprep.subr.mxu0 0.0
    %3415 = vmatpush2.msra.mxu0 0.0
    %3416 = vmatprep.subr.mxu0 0.0
    %3417 = vmatpush2.msra.mxu0 0.0
    %3418 = vmatprep.subr.mxu0 0.0
    %3419 = vmatpush2.msra.mxu0 0.0
    %3420 = vmatprep.subr.mxu0 0.0
    %3421 = vmatpush2.msra.mxu0 0.0
    %3422 = vmatprep.subr.mxu0 0.0
    %3423 = vmatpush2.msra.mxu0 0.0
    %3424 = vmatprep.subr.mxu0 0.0
    %3425 = vmatpush2.msra.mxu0 0.0
    %3426 = vmatprep.subr.mxu0 0.0
    %3427 = vmatpush2.msra.mxu0 0.0
    %3428 = vmatprep.subr.mxu0 0.0
    %3429 = vmatpush2.msra.mxu0 0.0
    %3430 = vmatprep.mubr.f32.mxu0 0.0
    %3431 = vmatmul.mubr.f32.gmra.mxu0 %v3354
    %v3432 = vpop.f32.mrf.mxu0
    %v3433 = vadd.f32 0.0, %v3432
    %v3434 = vpop.f32.mrf.mxu0
    %v3435 = vadd.f32 0.0, %v3434
    %3436 = vdwg.mxu0
    %3437 = vmatprep.subr.mxu0 0.0
    %3438 = vmatpush1.msra.mxu0 0.0
    %3439 = vmatprep.subr.mxu0 0.0
    %3440 = vmatpush1.msra.mxu0 0.0
    %3441 = vmatprep.subr.mxu0 0.0
    %3442 = vmatpush1.msra.mxu0 0.0
    %3443 = vmatprep.subr.mxu0 0.0
    %3444 = vmatpush1.msra.mxu0 0.0
    %3445 = vmatprep.subr.mxu0 0.0
    %3446 = vmatpush1.msra.mxu0 0.0
    %3447 = vmatprep.subr.mxu0 0.0
    %3448 = vmatpush1.msra.mxu0 0.0
    %3449 = vmatprep.subr.mxu0 0.0
    %3450 = vmatpush1.msra.mxu0 0.0
    %3451 = vmatprep.subr.mxu0 0.0
    %3452 = vmatpush1.msra.mxu0 0.0
    %3453 = vmatprep.subr.mxu0 0.0
    %3454 = vmatpush1.msra.mxu0 0.0
    %3455 = vmatprep.subr.mxu0 0.0
    %3456 = vmatpush1.msra.mxu0 0.0
    %3457 = vmatprep.subr.mxu0 0.0
    %3458 = vmatpush1.msra.mxu0 0.0
    %3459 = vmatprep.subr.mxu0 0.0
    %3460 = vmatpush1.msra.mxu0 0.0
    %3461 = vmatprep.subr.mxu0 0.0
    %3462 = vmatpush1.msra.mxu0 0.0
    %3463 = vmatprep.subr.mxu0 0.0
    %3464 = vmatpush1.msra.mxu0 0.0
    %3465 = vmatprep.subr.mxu0 0.0
    %3466 = vmatpush1.msra.mxu0 0.0
    %3467 = vmatprep.subr.mxu0 %v3362
    %3468 = vmatpush1.msra.mxu0 %v3360
    %3469 = vmatprep.subr.mxu0 0.0
    %3470 = vmatpush2.msra.mxu0 0.0
    %3471 = vmatprep.subr.mxu0 0.0
    %3472 = vmatpush2.msra.mxu0 0.0
    %3473 = vmatprep.subr.mxu0 0.0
    %3474 = vmatpush2.msra.mxu0 0.0
    %3475 = vmatprep.subr.mxu0 0.0
    %3476 = vmatpush2.msra.mxu0 0.0
    %3477 = vmatprep.subr.mxu0 0.0
    %3478 = vmatpush2.msra.mxu0 0.0
    %3479 = vmatprep.subr.mxu0 0.0
    %3480 = vmatpush2.msra.mxu0 0.0
    %3481 = vmatprep.subr.mxu0 0.0
    %3482 = vmatpush2.msra.mxu0 0.0
    %3483 = vmatprep.subr.mxu0 0.0
    %3484 = vmatpush2.msra.mxu0 0.0
    %3485 = vmatprep.subr.mxu0 0.0
    %3486 = vmatpush2.msra.mxu0 0.0
    %3487 = vmatprep.subr.mxu0 0.0
    %3488 = vmatpush2.msra.mxu0 0.0
    %3489 = vmatprep.subr.mxu0 0.0
    %3490 = vmatpush2.msra.mxu0 0.0
    %3491 = vmatprep.subr.mxu0 0.0
    %3492 = vmatpush2.msra.mxu0 0.0
    %3493 = vmatprep.subr.mxu0 0.0
    %3494 = vmatpush2.msra.mxu0 0.0
    %3495 = vmatprep.subr.mxu0 0.0
    %3496 = vmatpush2.msra.mxu0 0.0
    %3497 = vmatprep.subr.mxu0 0.0
    %3498 = vmatpush2.msra.mxu0 0.0
    %3499 = vmatprep.subr.mxu0 0.0
    %3500 = vmatpush2.msra.mxu0 0.0
    %3501 = vmatprep.mubr.f32.mxu0 0.0
    %3502 = vmatmul.mubr.f32.gmra.mxu0 %v3354
    %v3503 = vpop.f32.mrf.mxu0
    %v3504 = vpop.f32.mrf.mxu0
    %v3505 = vadd.f32 0.0, %v3504
    %3506 = vdwg.mxu0
    %3507 = vmatprep.subr.mxu0 0.0
    %3508 = vmatpush1.msra.mxu0 0.0
    %3509 = vmatprep.subr.mxu0 0.0
    %3510 = vmatpush1.msra.mxu0 0.0
    %3511 = vmatprep.subr.mxu0 0.0
    %3512 = vmatpush1.msra.mxu0 0.0
    %3513 = vmatprep.subr.mxu0 0.0
    %3514 = vmatpush1.msra.mxu0 0.0
    %3515 = vmatprep.subr.mxu0 0.0
    %3516 = vmatpush1.msra.mxu0 0.0
    %3517 = vmatprep.subr.mxu0 0.0
    %3518 = vmatpush1.msra.mxu0 0.0
    %3519 = vmatprep.subr.mxu0 0.0
    %3520 = vmatpush1.msra.mxu0 0.0
    %3521 = vmatprep.subr.mxu0 0.0
    %3522 = vmatpush1.msra.mxu0 0.0
    %3523 = vmatprep.subr.mxu0 0.0
    %3524 = vmatpush1.msra.mxu0 0.0
    %3525 = vmatprep.subr.mxu0 0.0
    %3526 = vmatpush1.msra.mxu0 0.0
    %3527 = vmatprep.subr.mxu0 0.0
    %3528 = vmatpush1.msra.mxu0 0.0
    %3529 = vmatprep.subr.mxu0 0.0
    %3530 = vmatpush1.msra.mxu0 0.0
    %3531 = vmatprep.subr.mxu0 0.0
    %3532 = vmatpush1.msra.mxu0 0.0
    %3533 = vmatprep.subr.mxu0 0.0
    %3534 = vmatpush1.msra.mxu0 0.0
    %3535 = vmatprep.subr.mxu0 0.0
    %3536 = vmatpush1.msra.mxu0 0.0
    %3537 = vmatprep.subr.mxu0 0.0
    %3538 = vmatpush1.msra.mxu0 %v3364
    %3539 = vmatprep.subr.mxu0 0.0
    %3540 = vmatpush2.msra.mxu0 0.0
    %3541 = vmatprep.subr.mxu0 0.0
    %3542 = vmatpush2.msra.mxu0 0.0
    %3543 = vmatprep.subr.mxu0 0.0
    %3544 = vmatpush2.msra.mxu0 0.0
    %3545 = vmatprep.subr.mxu0 0.0
    %3546 = vmatpush2.msra.mxu0 0.0
    %3547 = vmatprep.subr.mxu0 0.0
    %3548 = vmatpush2.msra.mxu0 0.0
    %3549 = vmatprep.subr.mxu0 0.0
    %3550 = vmatpush2.msra.mxu0 0.0
    %3551 = vmatprep.subr.mxu0 0.0
    %3552 = vmatpush2.msra.mxu0 0.0
    %3553 = vmatprep.subr.mxu0 0.0
    %3554 = vmatpush2.msra.mxu0 0.0
    %3555 = vmatprep.subr.mxu0 0.0
    %3556 = vmatpush2.msra.mxu0 0.0
    %3557 = vmatprep.subr.mxu0 0.0
    %3558 = vmatpush2.msra.mxu0 0.0
    %3559 = vmatprep.subr.mxu0 0.0
    %3560 = vmatpush2.msra.mxu0 0.0
    %3561 = vmatprep.subr.mxu0 0.0
    %3562 = vmatpush2.msra.mxu0 0.0
    %3563 = vmatprep.subr.mxu0 0.0
    %3564 = vmatpush2.msra.mxu0 0.0
    %3565 = vmatprep.subr.mxu0 0.0
    %3566 = vmatpush2.msra.mxu0 0.0
    %3567 = vmatprep.subr.mxu0 0.0
    %3568 = vmatpush2.msra.mxu0 0.0
    %3569 = vmatprep.subr.mxu0 0.0
    %3570 = vmatpush2.msra.mxu0 0.0
    %3571 = vmatprep.mubr.f32.mxu0 0.0
    %3572 = vmatmul.mubr.f32.gmra.mxu0 %v3354
    %v3573 = vpop.f32.mrf.mxu0
    %v3574 = vadd.f32 0.0, %v3573
    %v3575 = vpop.f32.mrf.mxu0
    %3576 = vdwg.mxu0
    %v3577 = vadd.f32 %v3320, %v3433
    %v3578 = vadd.f32 %v3321, %v3435
    %v3579 = vadd.f32 %v3322, %v3505
    %v3580 = vadd.f32 %v3323, %v3574
    %v3581 = vld [vmem:[%s0] sm:$0x77]
    %v3582 = vld [vmem:[%s0 + $0x8] sm:$0x77]
    %v3583 = vld [vmem:[%s0 + $0x10] sm:$0x77]
    %s3584 = scalar_lea.vmem %s1, 112
    %v3585 = vld [vmem:[%s3584] sm:$0xff]
    %v3589 = vcombine.high %v3581, %v3581
    %v3590 = vcombine.high %v3582, %v3582
    %v3591 = vcombine.high %v3583, %v3583
    %3592 = vrot.lane.b32.xlu0 %v3581, 92
    %v3593 = vpop.permute.xlu0 %3592
    %3594 = vrot.lane.b32.xlu0 %v3589, 92
    %v3595 = vpop.permute.xlu0 %3594
    %3596 = vrot.lane.b32.xlu0 %v3582, 92
    %v3597 = vpop.permute.xlu0 %3596
    %3598 = vrot.lane.b32.xlu0 %v3590, 92
    %v3599 = vpop.permute.xlu0 %3598
    %3600 = vrot.lane.b32.xlu0 %v3583, 92
    %v3601 = vpop.permute.xlu0 %3600
    %3602 = vrot.lane.b32.xlu0 %v3591, 92
    %v3603 = vpop.permute.xlu0 %3602
    %vm3604 = vcmask 752640
    %v3605 = vsel %vm3604, %v3593, %v3595
    %v3606 = vsel %vm3604, %v3595, %v3597
    %v3607 = vsel %vm3604, %v3597, %v3599
    %v3608 = vsel %vm3604, %v3599, %v3601
    %v3609 = vsel %vm3604, %v3601, %v3603
    %v3611 = vsel %vm46, %v3585, 0
    %v3613 = vsel %vm50, %v3605, 0
    %v3615 = vsel %vm50, %v3606, 0
    %v3617 = vsel %vm50, %v3607, 0
    %v3619 = vsel %vm50, %v3608, 0
    %v3621 = vsel %vm50, %v3609, 0
    %3623 = vmatprep.subr.mxu0 0.0
    %3624 = vmatpush1.msra.mxu0 0.0
    %3625 = vmatprep.subr.mxu0 0.0
    %3626 = vmatpush1.msra.mxu0 0.0
    %3627 = vmatprep.subr.mxu0 0.0
    %3628 = vmatpush1.msra.mxu0 0.0
    %3629 = vmatprep.subr.mxu0 0.0
    %3630 = vmatpush1.msra.mxu0 0.0
    %3631 = vmatprep.subr.mxu0 0.0
    %3632 = vmatpush1.msra.mxu0 0.0
    %3633 = vmatprep.subr.mxu0 0.0
    %3634 = vmatpush1.msra.mxu0 0.0
    %3635 = vmatprep.subr.mxu0 0.0
    %3636 = vmatpush1.msra.mxu0 0.0
    %3637 = vmatprep.subr.mxu0 0.0
    %3638 = vmatpush1.msra.mxu0 0.0
    %3639 = vmatprep.subr.mxu0 0.0
    %3640 = vmatpush1.msra.mxu0 0.0
    %3641 = vmatprep.subr.mxu0 0.0
    %3642 = vmatpush1.msra.mxu0 0.0
    %3643 = vmatprep.subr.mxu0 0.0
    %3644 = vmatpush1.msra.mxu0 0.0
    %3645 = vmatprep.subr.mxu0 0.0
    %3646 = vmatpush1.msra.mxu0 0.0
    %3647 = vmatprep.subr.mxu0 0.0
    %3648 = vmatpush1.msra.mxu0 0.0
    %3649 = vmatprep.subr.mxu0 0.0
    %3650 = vmatpush1.msra.mxu0 0.0
    %3651 = vmatprep.subr.mxu0 0.0
    %3652 = vmatpush1.msra.mxu0 0.0
    %3653 = vmatprep.subr.mxu0 %v3615
    %3654 = vmatpush1.msra.mxu0 %v3613
    %3655 = vmatprep.subr.mxu0 0.0
    %3656 = vmatpush2.msra.mxu0 0.0
    %3657 = vmatprep.subr.mxu0 0.0
    %3658 = vmatpush2.msra.mxu0 0.0
    %3659 = vmatprep.subr.mxu0 0.0
    %3660 = vmatpush2.msra.mxu0 0.0
    %3661 = vmatprep.subr.mxu0 0.0
    %3662 = vmatpush2.msra.mxu0 0.0
    %3663 = vmatprep.subr.mxu0 0.0
    %3664 = vmatpush2.msra.mxu0 0.0
    %3665 = vmatprep.subr.mxu0 0.0
    %3666 = vmatpush2.msra.mxu0 0.0
    %3667 = vmatprep.subr.mxu0 0.0
    %3668 = vmatpush2.msra.mxu0 0.0
    %3669 = vmatprep.subr.mxu0 0.0
    %3670 = vmatpush2.msra.mxu0 0.0
    %3671 = vmatprep.subr.mxu0 0.0
    %3672 = vmatpush2.msra.mxu0 0.0
    %3673 = vmatprep.subr.mxu0 0.0
    %3674 = vmatpush2.msra.mxu0 0.0
    %3675 = vmatprep.subr.mxu0 0.0
    %3676 = vmatpush2.msra.mxu0 0.0
    %3677 = vmatprep.subr.mxu0 0.0
    %3678 = vmatpush2.msra.mxu0 0.0
    %3679 = vmatprep.subr.mxu0 0.0
    %3680 = vmatpush2.msra.mxu0 0.0
    %3681 = vmatprep.subr.mxu0 0.0
    %3682 = vmatpush2.msra.mxu0 0.0
    %3683 = vmatprep.subr.mxu0 0.0
    %3684 = vmatpush2.msra.mxu0 0.0
    %3685 = vmatprep.subr.mxu0 0.0
    %3686 = vmatpush2.msra.mxu0 0.0
    %3687 = vmatprep.mubr.f32.mxu0 0.0
    %3688 = vmatmul.mubr.f32.gmra.mxu0 %v3611
    %v3689 = vpop.f32.mrf.mxu0
    %v3690 = vadd.f32 0.0, %v3689
    %v3691 = vpop.f32.mrf.mxu0
    %v3692 = vadd.f32 0.0, %v3691
    %3693 = vdwg.mxu0
    %3694 = vmatprep.subr.mxu0 0.0
    %3695 = vmatpush1.msra.mxu0 0.0
    %3696 = vmatprep.subr.mxu0 0.0
    %3697 = vmatpush1.msra.mxu0 0.0
    %3698 = vmatprep.subr.mxu0 0.0
    %3699 = vmatpush1.msra.mxu0 0.0
    %3700 = vmatprep.subr.mxu0 0.0
    %3701 = vmatpush1.msra.mxu0 0.0
    %3702 = vmatprep.subr.mxu0 0.0
    %3703 = vmatpush1.msra.mxu0 0.0
    %3704 = vmatprep.subr.mxu0 0.0
    %3705 = vmatpush1.msra.mxu0 0.0
    %3706 = vmatprep.subr.mxu0 0.0
    %3707 = vmatpush1.msra.mxu0 0.0
    %3708 = vmatprep.subr.mxu0 0.0
    %3709 = vmatpush1.msra.mxu0 0.0
    %3710 = vmatprep.subr.mxu0 0.0
    %3711 = vmatpush1.msra.mxu0 0.0
    %3712 = vmatprep.subr.mxu0 0.0
    %3713 = vmatpush1.msra.mxu0 0.0
    %3714 = vmatprep.subr.mxu0 0.0
    %3715 = vmatpush1.msra.mxu0 0.0
    %3716 = vmatprep.subr.mxu0 0.0
    %3717 = vmatpush1.msra.mxu0 0.0
    %3718 = vmatprep.subr.mxu0 0.0
    %3719 = vmatpush1.msra.mxu0 0.0
    %3720 = vmatprep.subr.mxu0 0.0
    %3721 = vmatpush1.msra.mxu0 0.0
    %3722 = vmatprep.subr.mxu0 0.0
    %3723 = vmatpush1.msra.mxu0 0.0
    %3724 = vmatprep.subr.mxu0 %v3619
    %3725 = vmatpush1.msra.mxu0 %v3617
    %3726 = vmatprep.subr.mxu0 0.0
    %3727 = vmatpush2.msra.mxu0 0.0
    %3728 = vmatprep.subr.mxu0 0.0
    %3729 = vmatpush2.msra.mxu0 0.0
    %3730 = vmatprep.subr.mxu0 0.0
    %3731 = vmatpush2.msra.mxu0 0.0
    %3732 = vmatprep.subr.mxu0 0.0
    %3733 = vmatpush2.msra.mxu0 0.0
    %3734 = vmatprep.subr.mxu0 0.0
    %3735 = vmatpush2.msra.mxu0 0.0
    %3736 = vmatprep.subr.mxu0 0.0
    %3737 = vmatpush2.msra.mxu0 0.0
    %3738 = vmatprep.subr.mxu0 0.0
    %3739 = vmatpush2.msra.mxu0 0.0
    %3740 = vmatprep.subr.mxu0 0.0
    %3741 = vmatpush2.msra.mxu0 0.0
    %3742 = vmatprep.subr.mxu0 0.0
    %3743 = vmatpush2.msra.mxu0 0.0
    %3744 = vmatprep.subr.mxu0 0.0
    %3745 = vmatpush2.msra.mxu0 0.0
    %3746 = vmatprep.subr.mxu0 0.0
    %3747 = vmatpush2.msra.mxu0 0.0
    %3748 = vmatprep.subr.mxu0 0.0
    %3749 = vmatpush2.msra.mxu0 0.0
    %3750 = vmatprep.subr.mxu0 0.0
    %3751 = vmatpush2.msra.mxu0 0.0
    %3752 = vmatprep.subr.mxu0 0.0
    %3753 = vmatpush2.msra.mxu0 0.0
    %3754 = vmatprep.subr.mxu0 0.0
    %3755 = vmatpush2.msra.mxu0 0.0
    %3756 = vmatprep.subr.mxu0 0.0
    %3757 = vmatpush2.msra.mxu0 0.0
    %3758 = vmatprep.mubr.f32.mxu0 0.0
    %3759 = vmatmul.mubr.f32.gmra.mxu0 %v3611
    %v3760 = vpop.f32.mrf.mxu0
    %v3761 = vpop.f32.mrf.mxu0
    %v3762 = vadd.f32 0.0, %v3761
    %3763 = vdwg.mxu0
    %3764 = vmatprep.subr.mxu0 0.0
    %3765 = vmatpush1.msra.mxu0 0.0
    %3766 = vmatprep.subr.mxu0 0.0
    %3767 = vmatpush1.msra.mxu0 0.0
    %3768 = vmatprep.subr.mxu0 0.0
    %3769 = vmatpush1.msra.mxu0 0.0
    %3770 = vmatprep.subr.mxu0 0.0
    %3771 = vmatpush1.msra.mxu0 0.0
    %3772 = vmatprep.subr.mxu0 0.0
    %3773 = vmatpush1.msra.mxu0 0.0
    %3774 = vmatprep.subr.mxu0 0.0
    %3775 = vmatpush1.msra.mxu0 0.0
    %3776 = vmatprep.subr.mxu0 0.0
    %3777 = vmatpush1.msra.mxu0 0.0
    %3778 = vmatprep.subr.mxu0 0.0
    %3779 = vmatpush1.msra.mxu0 0.0
    %3780 = vmatprep.subr.mxu0 0.0
    %3781 = vmatpush1.msra.mxu0 0.0
    %3782 = vmatprep.subr.mxu0 0.0
    %3783 = vmatpush1.msra.mxu0 0.0
    %3784 = vmatprep.subr.mxu0 0.0
    %3785 = vmatpush1.msra.mxu0 0.0
    %3786 = vmatprep.subr.mxu0 0.0
    %3787 = vmatpush1.msra.mxu0 0.0
    %3788 = vmatprep.subr.mxu0 0.0
    %3789 = vmatpush1.msra.mxu0 0.0
    %3790 = vmatprep.subr.mxu0 0.0
    %3791 = vmatpush1.msra.mxu0 0.0
    %3792 = vmatprep.subr.mxu0 0.0
    %3793 = vmatpush1.msra.mxu0 0.0
    %3794 = vmatprep.subr.mxu0 0.0
    %3795 = vmatpush1.msra.mxu0 %v3621
    %3796 = vmatprep.subr.mxu0 0.0
    %3797 = vmatpush2.msra.mxu0 0.0
    %3798 = vmatprep.subr.mxu0 0.0
    %3799 = vmatpush2.msra.mxu0 0.0
    %3800 = vmatprep.subr.mxu0 0.0
    %3801 = vmatpush2.msra.mxu0 0.0
    %3802 = vmatprep.subr.mxu0 0.0
    %3803 = vmatpush2.msra.mxu0 0.0
    %3804 = vmatprep.subr.mxu0 0.0
    %3805 = vmatpush2.msra.mxu0 0.0
    %3806 = vmatprep.subr.mxu0 0.0
    %3807 = vmatpush2.msra.mxu0 0.0
    %3808 = vmatprep.subr.mxu0 0.0
    %3809 = vmatpush2.msra.mxu0 0.0
    %3810 = vmatprep.subr.mxu0 0.0
    %3811 = vmatpush2.msra.mxu0 0.0
    %3812 = vmatprep.subr.mxu0 0.0
    %3813 = vmatpush2.msra.mxu0 0.0
    %3814 = vmatprep.subr.mxu0 0.0
    %3815 = vmatpush2.msra.mxu0 0.0
    %3816 = vmatprep.subr.mxu0 0.0
    %3817 = vmatpush2.msra.mxu0 0.0
    %3818 = vmatprep.subr.mxu0 0.0
    %3819 = vmatpush2.msra.mxu0 0.0
    %3820 = vmatprep.subr.mxu0 0.0
    %3821 = vmatpush2.msra.mxu0 0.0
    %3822 = vmatprep.subr.mxu0 0.0
    %3823 = vmatpush2.msra.mxu0 0.0
    %3824 = vmatprep.subr.mxu0 0.0
    %3825 = vmatpush2.msra.mxu0 0.0
    %3826 = vmatprep.subr.mxu0 0.0
    %3827 = vmatpush2.msra.mxu0 0.0
    %3828 = vmatprep.mubr.f32.mxu0 0.0
    %3829 = vmatmul.mubr.f32.gmra.mxu0 %v3611
    %v3830 = vpop.f32.mrf.mxu0
    %v3831 = vadd.f32 0.0, %v3830
    %v3832 = vpop.f32.mrf.mxu0
    %3833 = vdwg.mxu0
    %v3834 = vadd.f32 %v3577, %v3690
    %v3835 = vadd.f32 %v3578, %v3692
    %v3836 = vadd.f32 %v3579, %v3762
    %v3837 = vadd.f32 %v3580, %v3831
    %v3838 = vld [vmem:[%s2] sm:$0xff]
    %3840 = vset.pattern.permute.xlu0 0
    %3841 = vperm.xlu0 %3840, %v3838
    %v3842 = vpop.permute.xlu0 %3841
    %v3844 = vadd.f32 %v3834, %v3842
    %v3845 = vadd.f32 %v3835, %v3842
    %v3846 = vmul.f32 %v3844, %v3844
    %v3847 = vmul.f32 %v3845, %v3845
    %v3848 = vadd.f32 %v3844, %v3846
    %v3849 = vadd.f32 %v3845, %v3847
    %3850 = vst [vmem:[#allocation2] sm:$0xff] %v3848
    %3851 = vst [vmem:[#allocation2 + $0x8] sm:$0xff] %v3849
    %v3852 = vadd.f32 %v3836, %v3842
    %v3853 = vadd.f32 %v3837, %v3842
    %v3854 = vmul.f32 %v3852, %v3852
    %v3855 = vmul.f32 %v3853, %v3853
    %v3856 = vadd.f32 %v3852, %v3854
    %v3857 = vadd.f32 %v3853, %v3855
    %s3858 = scalar_lea.vmem [#allocation2], 16
    %3859 = vst [vmem:[%s3858] sm:$0xff] %v3856
    %3860 = vst [vmem:[%s3858 + $0x8] sm:$0xff] %v3857
    // Predicated region
    $region14: #{tpu_custom_call.1} parent=1 // pred_check
      _
    $region15: #{tpu_custom_call.1} parent=1 // pred_check_branch
      %3862 = sbr.rel (0) target = $region17
    $region16: #{tpu_custom_call.1} parent=1 // pred_region
      %s3864 = ssub.s32 512, 512
      %3865 = vsyncadd [#allocation3], %s3864
      %s3866 = sshll.u32 [#allocation2], 4
      %s3867 = int_to_ptr.vmem [resolvable:$true] %s3866
      %3872 = dma.vmem_to_hbm [thread:$0]  %s3867, 512, %s3, [#allocation3], 256, 256, 16
    $region17: #{tpu_custom_call.1} parent=1 // pred_fallthru
      _
    // Predicated region
    $region18: #{tpu_custom_call.1} parent=1 // pred_check
      _
    $region19: #{tpu_custom_call.1} parent=1 // pred_check_branch
      %3874 = sbr.rel (0) target = $region21
    $region20: #{tpu_custom_call.1} parent=1 // pred_region
      %3875 = dma.done [#allocation3], 512
    $region21: #{tpu_custom_call.1} parent=1 // pred_fallthru
      _
    %3876 = vsyncpa [#allocation3], 1

</llo_original>
